<compile_context>
chip_gen: v6e
topology: v6e:2x2x1
jax: 0.10.0
libtpu: 0.0.40
codegen_flags: <defaults>
</compile_context>

<pallas_src>
import functools

import numpy as np
import jax
import jax.numpy as jnp
from jax import lax
from jax.experimental import pallas as pl
from jax.experimental.pallas import tpu as pltpu

_LEAKY_SLOPE = 0.1
_KH = 3
# (C_out, stride_h, pad_h) for the three NormedConv2d layers + the output conv.
_LAYER_GEOM = ((32, 1, 2), (256, 3, 2), (512, 3, 2), (1, 1, 1))


def _round_up(x, m):
    return ((x + m - 1) // m) * m


# ----------------------------- fused Pallas kernel ---------------------------

def _fused_disc_kernel(x_ref, b_ref, *refs, cout_pads, negative_slope):
    """refs = (g1, w1, g2, w2, g3, w3, g4, w4, out1, out2, out3, out4).

    g_l : (3, M_l, R_l)  bf16 0/1 gather matrices (in-kernel im2col, incl. zero pad)
    w_l : (3, Cin_pad, Cout_pad) bf16 per-tap weights
    b   : (1, sum(Cout_pad)) f32 packed biases
    """
    n_layers = len(cout_pads)
    gw_refs = refs[:2 * n_layers]
    out_refs = refs[2 * n_layers:]

    a = x_ref[...]                                   # (N*H0, C_emg) bf16, stays resident
    off = 0
    for i in range(n_layers):
        g_ref = gw_refs[2 * i]
        w_ref = gw_refs[2 * i + 1]
        cp = cout_pads[i]
        m = g_ref.shape[1]

        acc = jnp.zeros((m, cp), jnp.float32)
        for t in range(_KH):
            # in-kernel im2col: gather tap-t rows (0/1 matmul, exact), then conv matmul.
            xt = jnp.dot(g_ref[t], a, preferred_element_type=jnp.float32)
            acc = acc + jnp.dot(xt.astype(jnp.bfloat16), w_ref[t],
                                preferred_element_type=jnp.float32)

        acc = acc + b_ref[:, off:off + cp]           # f32 bias on the f32 accumulator
        if i < n_layers - 1:                         # output conv has no activation
            acc = jnp.where(acc >= 0, acc, negative_slope * acc)

        out_refs[i][...] = acc                       # lane-dense f32 store
        a = acc.astype(jnp.bfloat16)                 # feeds the next layer, VMEM-resident
        off += cp


# --------------------------- static gather matrices --------------------------

def _build_gather_mats(n_seq, h_in, h_out, stride, pad):
    """0/1 matrices G[t] (M=n_seq*h_out, R=n_seq*h_in) selecting tap-t input rows.

    Rows that fall in the conv zero-padding region are all-zero (== zero pad).
    """
    g = np.zeros((_KH, n_seq * h_out, n_seq * h_in), np.float32)
    for t in range(_KH):
        for n in range(n_seq):
            for ho in range(h_out):
                hi = ho * stride + t - pad
                if 0 <= hi < h_in:
                    g[t, n * h_out + ho, n * h_in + hi] = 1.0
    return jnp.asarray(g, jnp.bfloat16)


# ------------------------- parameters & preparation --------------------------

def _layer_specs(num_emg_channels):
    specs, cin = [], num_emg_channels
    for (cout, s, p) in _LAYER_GEOM:
        specs.append((cin, cout, s, p))
        cin = cout
    return specs


def make_params(key, num_emg_channels):
    # weight_norm at init reproduces the underlying conv weight, so draw directly.
    params = []
    for (cin, cout, s, p) in _layer_specs(num_emg_channels):
        key, kw, kb = jax.random.split(key, 3)
        scale = 1.0 / jnp.sqrt(3.0 * cin)
        w = scale * jax.random.normal(kw, (_KH, cin, cout), jnp.float32)
        b = scale * jax.random.normal(kb, (cout,), jnp.float32)
        params.append((w, b, s, p))
    return params


def prepare_params(params):
    """One-time prep (outside jit): pad channels to 128-lane multiples, cast
    weights to bf16, pack all biases into a single (1, sum(Cout_pad)) f32 row."""
    cout_pads = tuple(_round_up(g[0], 128) for g in _LAYER_GEOM)
    ws, bs = [], []
    cin_pad = params[0][0].shape[1]                  # layer-1 input channels (unpadded)
    for (w, b, _, _), cp in zip(params, cout_pads):
        kh, cin, cout = w.shape
        wp = jnp.zeros((kh, cin_pad, cp), jnp.float32).at[:, :cin, :cout].set(w)
        ws.append(wp.astype(jnp.bfloat16))
        bs.append(jnp.zeros((cp,), jnp.float32).at[:cout].set(b))
        cin_pad = cp
    b_all = jnp.concatenate(bs).reshape(1, -1)
    return tuple(ws), b_all


# ----------------------------------- forward ---------------------------------

@functools.partial(jax.jit, static_argnames=("period",))
def discriminator_smaller_p_forward(x, packed, period):
    """x: (B, C_emg, T) f32.  Returns the 4 feature maps in NCHW (like PyTorch)."""
    ws, b_all = packed
    b, c, t = x.shape
    pad = period - t % period                        # same padding rule as the module
    xr = jnp.pad(x, ((0, 0), (0, 0), (0, pad)), mode='reflect')
    h0 = (t + pad) // period
    wper = period
    n_seq = b * wper
    # NCHW -> (B, W, H, C) -> (B*W*H, C): channels lane-major for the MXU.
    a0 = jnp.transpose(xr.reshape(b, c, h0, wper), (0, 3, 2, 1)).reshape(n_seq * h0, c)
    a0 = a0.astype(jnp.bfloat16)

    cout_pads = tuple(_round_up(g[0], 128) for g in _LAYER_GEOM)

    # Static per-layer geometry + gather matrices (compile-time constants).
    gmats, h_outs = [], []
    h_in = h0
    for (_, s, p) in _LAYER_GEOM:
        h_out = (h_in + 2 * p - _KH) // s + 1
        gmats.append(_build_gather_mats(n_seq, h_in, h_out, s, p))
        h_outs.append(h_out)
        h_in = h_out

    kernel = functools.partial(_fused_disc_kernel, cout_pads=cout_pads,
                               negative_slope=_LEAKY_SLOPE)
    vmem = pl.BlockSpec(memory_space=pltpu.MemorySpace.VMEM)
    inputs = [a0, b_all]
    for g, w_ in zip(gmats, ws):
        inputs += [g, w_]
    out_shape = tuple(
        jax.ShapeDtypeStruct((n_seq * h_outs[i], cout_pads[i]), jnp.float32)
        for i in range(len(_LAYER_GEOM)))

    fouts = pl.pallas_call(
        kernel,
        out_shape=out_shape,
        in_specs=[vmem] * len(inputs),
        out_specs=tuple(vmem for _ in out_shape),
    )(*inputs)

    # Un-pad channels and restore NCHW only at the very end (deferred transposes).
    fmaps = []
    for f2d, h_out, (cout, _, _) in zip(fouts, h_outs, _LAYER_GEOM):
        f = f2d[:, :cout].reshape(b, wper, h_out, cout)
        fmaps.append(jnp.transpose(f, (0, 3, 2, 1)))
    return fmaps


# ------------------------------ pure-JAX reference ----------------------------

def ref_forward(x, params, period, bf16_inputs=False):
    b, c, t = x.shape
    pad = period - t % period
    x = jnp.pad(x, ((0, 0), (0, 0), (0, pad)), mode='reflect')
    x = x.reshape(b, c, (t + pad) // period, period)
    fmaps = []
    n_layers = len(params)
    for i, (wk, bk, s, p) in enumerate(params):
        w_oihw = jnp.transpose(wk, (2, 1, 0))[..., None]           # (O, I, 3, 1)
        lhs = x.astype(jnp.bfloat16) if bf16_inputs else x
        rhs = w_oihw.astype(jnp.bfloat16) if bf16_inputs else w_oihw
        y = lax.conv_general_dilated(
            lhs, rhs, window_strides=(s, 1), padding=((p, p), (0, 0)),
            dimension_numbers=('NCHW', 'OIHW', 'NCHW'),
            preferred_element_type=jnp.float32,
            precision=None if bf16_inputs else lax.Precision.HIGHEST)
        y = y + bk[None, :, None, None]
        if i < n_layers - 1:
            y = jnp.where(y >= 0, y, _LEAKY_SLOPE * y)
        x = y
        fmaps.append(y)
    return fmaps


# ------------------------------------ main ------------------------------------

if __name__ == "__main__":
    num_emg_channels = 4
    period = 4
    B, T = 2, 37

    key = jax.random.PRNGKey(0)
    key, kx, kp = jax.random.split(key, 3)
    x = jax.random.normal(kx, (B, num_emg_channels, T), jnp.float32)
    params = make_params(kp, num_emg_channels)
    packed = prepare_params(params)                  # one-time: pad + bf16 cast + pack

    fmaps = discriminator_smaller_p_forward(x, packed, period)
    fmaps = jax.block_until_ready(fmaps)

    refs_bf16 = ref_forward(x, params, period, bf16_inputs=True)   # precision-matched
    refs_f32 = ref_forward(x, params, period, bf16_inputs=False)   # full-f32 module

    assert len(fmaps) == 4
    for f, rb, rf in zip(fmaps, refs_bf16, refs_f32):
        assert f.shape == rb.shape, (f.shape, rb.shape)
        assert jnp.allclose(f, rb, rtol=1e-2, atol=1e-2), \
            float(jnp.max(jnp.abs(f - rb)))
        assert jnp.allclose(f, rf, rtol=1e-1, atol=1e-1), \
            float(jnp.max(jnp.abs(f - rf)))

    print("KERNEL_OK")
</pallas_src>

<mosaic_0001>
module attributes {stable_mosaic.version = 11 : i64} {
  func.func @_fused_disc_kernel(%arg0: memref<80x4xbf16, #tpu.memory_space<vmem>>, %arg1: memref<1x1024xf32, #tpu.memory_space<vmem>>, %arg2: memref<3x96x80xbf16, #tpu.memory_space<vmem>>, %arg3: memref<3x4x128xbf16, #tpu.memory_space<vmem>>, %arg4: memref<3x40x96xbf16, #tpu.memory_space<vmem>>, %arg5: memref<3x128x256xbf16, #tpu.memory_space<vmem>>, %arg6: memref<3x24x40xbf16, #tpu.memory_space<vmem>>, %arg7: memref<3x256x512xbf16, #tpu.memory_space<vmem>>, %arg8: memref<3x24x24xbf16, #tpu.memory_space<vmem>>, %arg9: memref<3x512x128xbf16, #tpu.memory_space<vmem>>, %arg10: memref<96x128xf32, #tpu.memory_space<vmem>>, %arg11: memref<40x256xf32, #tpu.memory_space<vmem>>, %arg12: memref<24x512xf32, #tpu.memory_space<vmem>>, %arg13: memref<24x128xf32, #tpu.memory_space<vmem>>) attributes {dimension_semantics = [], scalar_prefetch = 0 : i64, scratch_operands = 0 : i64, tpu.core_type = #tpu.core_type<tc>} {
    %c0 = arith.constant 0 : index
    %c0_0 = arith.constant 0 : index
    %0 = vector.load %arg0[%c0, %c0_0] : memref<80x4xbf16, #tpu.memory_space<vmem>>, vector<80x4xbf16>
    %cst = arith.constant 0.000000e+00 : f32
    %1 = vector.broadcast %cst : f32 to vector<96x128xf32>
    %c0_1 = arith.constant 0 : index
    %c0_2 = arith.constant 0 : index
    %c0_3 = arith.constant 0 : index
    %2 = vector.load %arg2[%c0_1, %c0_2, %c0_3] : memref<3x96x80xbf16, #tpu.memory_space<vmem>>, vector<1x96x80xbf16>
    %3 = vector.shape_cast %2 : vector<1x96x80xbf16> to vector<96x80xbf16>
    %cst_4 = arith.constant dense<0.000000e+00> : vector<96x4xf32>
    %4 = tpu.matmul %3, %0, %cst_4 {dimension_numbers = #tpu.dot_dimension_numbers<[1], [0], [0], [1], [0, 0, 1, 1], [], []>} : vector<96x80xbf16>, vector<80x4xbf16>, vector<96x4xf32> -> vector<96x4xf32>
    %5 = arith.truncf %4 : vector<96x4xf32> to vector<96x4xbf16>
    %c0_5 = arith.constant 0 : index
    %c0_6 = arith.constant 0 : index
    %c0_7 = arith.constant 0 : index
    %6 = vector.load %arg3[%c0_5, %c0_6, %c0_7] : memref<3x4x128xbf16, #tpu.memory_space<vmem>>, vector<1x4x128xbf16>
    %7 = vector.shape_cast %6 : vector<1x4x128xbf16> to vector<4x128xbf16>
    %cst_8 = arith.constant dense<0.000000e+00> : vector<96x128xf32>
    %8 = tpu.matmul %5, %7, %cst_8 {dimension_numbers = #tpu.dot_dimension_numbers<[1], [0], [0], [1], [0, 0, 1, 1], [], []>} : vector<96x4xbf16>, vector<4x128xbf16>, vector<96x128xf32> -> vector<96x128xf32>
    %9 = arith.addf %1, %8 : vector<96x128xf32>
    %c1 = arith.constant 1 : index
    %c0_9 = arith.constant 0 : index
    %c0_10 = arith.constant 0 : index
    %10 = vector.load %arg2[%c1, %c0_9, %c0_10] : memref<3x96x80xbf16, #tpu.memory_space<vmem>>, vector<1x96x80xbf16>
    %11 = vector.shape_cast %10 : vector<1x96x80xbf16> to vector<96x80xbf16>
    %cst_11 = arith.constant dense<0.000000e+00> : vector<96x4xf32>
    %12 = tpu.matmul %11, %0, %cst_11 {dimension_numbers = #tpu.dot_dimension_numbers<[1], [0], [0], [1], [0, 0, 1, 1], [], []>} : vector<96x80xbf16>, vector<80x4xbf16>, vector<96x4xf32> -> vector<96x4xf32>
    %13 = arith.truncf %12 : vector<96x4xf32> to vector<96x4xbf16>
    %c1_12 = arith.constant 1 : index
    %c0_13 = arith.constant 0 : index
    %c0_14 = arith.constant 0 : index
    %14 = vector.load %arg3[%c1_12, %c0_13, %c0_14] : memref<3x4x128xbf16, #tpu.memory_space<vmem>>, vector<1x4x128xbf16>
    %15 = vector.shape_cast %14 : vector<1x4x128xbf16> to vector<4x128xbf16>
    %cst_15 = arith.constant dense<0.000000e+00> : vector<96x128xf32>
    %16 = tpu.matmul %13, %15, %cst_15 {dimension_numbers = #tpu.dot_dimension_numbers<[1], [0], [0], [1], [0, 0, 1, 1], [], []>} : vector<96x4xbf16>, vector<4x128xbf16>, vector<96x128xf32> -> vector<96x128xf32>
    %17 = arith.addf %9, %16 : vector<96x128xf32>
    %c2 = arith.constant 2 : index
    %c0_16 = arith.constant 0 : index
    %c0_17 = arith.constant 0 : index
    %18 = vector.load %arg2[%c2, %c0_16, %c0_17] : memref<3x96x80xbf16, #tpu.memory_space<vmem>>, vector<1x96x80xbf16>
    %19 = vector.shape_cast %18 : vector<1x96x80xbf16> to vector<96x80xbf16>
    %cst_18 = arith.constant dense<0.000000e+00> : vector<96x4xf32>
    %20 = tpu.matmul %19, %0, %cst_18 {dimension_numbers = #tpu.dot_dimension_numbers<[1], [0], [0], [1], [0, 0, 1, 1], [], []>} : vector<96x80xbf16>, vector<80x4xbf16>, vector<96x4xf32> -> vector<96x4xf32>
    %21 = arith.truncf %20 : vector<96x4xf32> to vector<96x4xbf16>
    %c2_19 = arith.constant 2 : index
    %c0_20 = arith.constant 0 : index
    %c0_21 = arith.constant 0 : index
    %22 = vector.load %arg3[%c2_19, %c0_20, %c0_21] : memref<3x4x128xbf16, #tpu.memory_space<vmem>>, vector<1x4x128xbf16>
    %23 = vector.shape_cast %22 : vector<1x4x128xbf16> to vector<4x128xbf16>
    %cst_22 = arith.constant dense<0.000000e+00> : vector<96x128xf32>
    %24 = tpu.matmul %21, %23, %cst_22 {dimension_numbers = #tpu.dot_dimension_numbers<[1], [0], [0], [1], [0, 0, 1, 1], [], []>} : vector<96x4xbf16>, vector<4x128xbf16>, vector<96x128xf32> -> vector<96x128xf32>
    %25 = arith.addf %17, %24 : vector<96x128xf32>
    %c0_23 = arith.constant 0 : index
    %c0_24 = arith.constant 0 : index
    %26 = vector.load %arg1[%c0_23, %c0_24] : memref<1x1024xf32, #tpu.memory_space<vmem>>, vector<1x128xf32>
    %27 = vector.broadcast %26 : vector<1x128xf32> to vector<96x128xf32>
    %28 = arith.addf %25, %27 : vector<96x128xf32>
    %cst_25 = arith.constant 0.000000e+00 : f32
    %29 = vector.broadcast %cst_25 : f32 to vector<96x128xf32>
    %30 = arith.cmpf oge, %28, %29 : vector<96x128xf32>
    %cst_26 = arith.constant 1.000000e-01 : f32
    %31 = vector.broadcast %cst_26 : f32 to vector<96x128xf32>
    %32 = arith.mulf %31, %28 : vector<96x128xf32>
    %33 = arith.select %30, %28, %32 : vector<96x128xi1>, vector<96x128xf32>
    %c0_27 = arith.constant 0 : index
    %c0_28 = arith.constant 0 : index
    %34 = vector.load %arg10[%c0_27, %c0_28] : memref<96x128xf32, #tpu.memory_space<vmem>>, vector<96x128xf32>
    tpu.vector_store %arg10[%c0_27, %c0_28], %33 {strides = array<i32>} : memref<96x128xf32, #tpu.memory_space<vmem>>, vector<96x128xf32>,
    %35 = arith.truncf %33 : vector<96x128xf32> to vector<96x128xbf16>
    %cst_29 = arith.constant 0.000000e+00 : f32
    %36 = vector.broadcast %cst_29 : f32 to vector<40x256xf32>
    %c0_30 = arith.constant 0 : index
    %c0_31 = arith.constant 0 : index
    %c0_32 = arith.constant 0 : index
    %37 = vector.load %arg4[%c0_30, %c0_31, %c0_32] : memref<3x40x96xbf16, #tpu.memory_space<vmem>>, vector<1x40x96xbf16>
    %38 = vector.shape_cast %37 : vector<1x40x96xbf16> to vector<40x96xbf16>
    %cst_33 = arith.constant dense<0.000000e+00> : vector<40x128xf32>
    %39 = tpu.matmul %38, %35, %cst_33 {dimension_numbers = #tpu.dot_dimension_numbers<[1], [0], [0], [1], [0, 0, 1, 1], [], []>} : vector<40x96xbf16>, vector<96x128xbf16>, vector<40x128xf32> -> vector<40x128xf32>
    %40 = arith.truncf %39 : vector<40x128xf32> to vector<40x128xbf16>
    %c0_34 = arith.constant 0 : index
    %c0_35 = arith.constant 0 : index
    %c0_36 = arith.constant 0 : index
    %41 = vector.load %arg5[%c0_34, %c0_35, %c0_36] : memref<3x128x256xbf16, #tpu.memory_space<vmem>>, vector<1x128x256xbf16>
    %42 = vector.shape_cast %41 : vector<1x128x256xbf16> to vector<128x256xbf16>
    %cst_37 = arith.constant dense<0.000000e+00> : vector<40x256xf32>
    %43 = tpu.matmul %40, %42, %cst_37 {dimension_numbers = #tpu.dot_dimension_numbers<[1], [0], [0], [1], [0, 0, 1, 1], [], []>} : vector<40x128xbf16>, vector<128x256xbf16>, vector<40x256xf32> -> vector<40x256xf32>
    %44 = arith.addf %36, %43 : vector<40x256xf32>
    %c1_38 = arith.constant 1 : index
    %c0_39 = arith.constant 0 : index
    %c0_40 = arith.constant 0 : index
    %45 = vector.load %arg4[%c1_38, %c0_39, %c0_40] : memref<3x40x96xbf16, #tpu.memory_space<vmem>>, vector<1x40x96xbf16>
    %46 = vector.shape_cast %45 : vector<1x40x96xbf16> to vector<40x96xbf16>
    %cst_41 = arith.constant dense<0.000000e+00> : vector<40x128xf32>
    %47 = tpu.matmul %46, %35, %cst_41 {dimension_numbers = #tpu.dot_dimension_numbers<[1], [0], [0], [1], [0, 0, 1, 1], [], []>} : vector<40x96xbf16>, vector<96x128xbf16>, vector<40x128xf32> -> vector<40x128xf32>
    %48 = arith.truncf %47 : vector<40x128xf32> to vector<40x128xbf16>
    %c1_42 = arith.constant 1 : index
    %c0_43 = arith.constant 0 : index
    %c0_44 = arith.constant 0 : index
    %49 = vector.load %arg5[%c1_42, %c0_43, %c0_44] : memref<3x128x256xbf16, #tpu.memory_space<vmem>>, vector<1x128x256xbf16>
    %50 = vector.shape_cast %49 : vector<1x128x256xbf16> to vector<128x256xbf16>
    %cst_45 = arith.constant dense<0.000000e+00> : vector<40x256xf32>
    %51 = tpu.matmul %48, %50, %cst_45 {dimension_numbers = #tpu.dot_dimension_numbers<[1], [0], [0], [1], [0, 0, 1, 1], [], []>} : vector<40x128xbf16>, vector<128x256xbf16>, vector<40x256xf32> -> vector<40x256xf32>
    %52 = arith.addf %44, %51 : vector<40x256xf32>
    %c2_46 = arith.constant 2 : index
    %c0_47 = arith.constant 0 : index
    %c0_48 = arith.constant 0 : index
    %53 = vector.load %arg4[%c2_46, %c0_47, %c0_48] : memref<3x40x96xbf16, #tpu.memory_space<vmem>>, vector<1x40x96xbf16>
    %54 = vector.shape_cast %53 : vector<1x40x96xbf16> to vector<40x96xbf16>
    %cst_49 = arith.constant dense<0.000000e+00> : vector<40x128xf32>
    %55 = tpu.matmul %54, %35, %cst_49 {dimension_numbers = #tpu.dot_dimension_numbers<[1], [0], [0], [1], [0, 0, 1, 1], [], []>} : vector<40x96xbf16>, vector<96x128xbf16>, vector<40x128xf32> -> vector<40x128xf32>
    %56 = arith.truncf %55 : vector<40x128xf32> to vector<40x128xbf16>
    %c2_50 = arith.constant 2 : index
    %c0_51 = arith.constant 0 : index
    %c0_52 = arith.constant 0 : index
    %57 = vector.load %arg5[%c2_50, %c0_51, %c0_52] : memref<3x128x256xbf16, #tpu.memory_space<vmem>>, vector<1x128x256xbf16>
    %58 = vector.shape_cast %57 : vector<1x128x256xbf16> to vector<128x256xbf16>
    %cst_53 = arith.constant dense<0.000000e+00> : vector<40x256xf32>
    %59 = tpu.matmul %56, %58, %cst_53 {dimension_numbers = #tpu.dot_dimension_numbers<[1], [0], [0], [1], [0, 0, 1, 1], [], []>} : vector<40x128xbf16>, vector<128x256xbf16>, vector<40x256xf32> -> vector<40x256xf32>
    %60 = arith.addf %52, %59 : vector<40x256xf32>
    %c0_54 = arith.constant 0 : index
    %c128 = arith.constant 128 : index
    %61 = vector.load %arg1[%c0_54, %c128] : memref<1x1024xf32, #tpu.memory_space<vmem>>, vector<1x256xf32>
    %62 = vector.broadcast %61 : vector<1x256xf32> to vector<40x256xf32>
    %63 = arith.addf %60, %62 : vector<40x256xf32>
    %cst_55 = arith.constant 0.000000e+00 : f32
    %64 = vector.broadcast %cst_55 : f32 to vector<40x256xf32>
    %65 = arith.cmpf oge, %63, %64 : vector<40x256xf32>
    %cst_56 = arith.constant 1.000000e-01 : f32
    %66 = vector.broadcast %cst_56 : f32 to vector<40x256xf32>
    %67 = arith.mulf %66, %63 : vector<40x256xf32>
    %68 = arith.select %65, %63, %67 : vector<40x256xi1>, vector<40x256xf32>
    %c0_57 = arith.constant 0 : index
    %c0_58 = arith.constant 0 : index
    %69 = vector.load %arg11[%c0_57, %c0_58] : memref<40x256xf32, #tpu.memory_space<vmem>>, vector<40x256xf32>
    tpu.vector_store %arg11[%c0_57, %c0_58], %68 {strides = array<i32>} : memref<40x256xf32, #tpu.memory_space<vmem>>, vector<40x256xf32>,
    %70 = arith.truncf %68 : vector<40x256xf32> to vector<40x256xbf16>
    %cst_59 = arith.constant 0.000000e+00 : f32
    %71 = vector.broadcast %cst_59 : f32 to vector<24x512xf32>
    %c0_60 = arith.constant 0 : index
    %c0_61 = arith.constant 0 : index
    %c0_62 = arith.constant 0 : index
    %72 = vector.load %arg6[%c0_60, %c0_61, %c0_62] : memref<3x24x40xbf16, #tpu.memory_space<vmem>>, vector<1x24x40xbf16>
    %73 = vector.shape_cast %72 : vector<1x24x40xbf16> to vector<24x40xbf16>
    %cst_63 = arith.constant dense<0.000000e+00> : vector<24x256xf32>
    %74 = tpu.matmul %73, %70, %cst_63 {dimension_numbers = #tpu.dot_dimension_numbers<[1], [0], [0], [1], [0, 0, 1, 1], [], []>} : vector<24x40xbf16>, vector<40x256xbf16>, vector<24x256xf32> -> vector<24x256xf32>
    %75 = arith.truncf %74 : vector<24x256xf32> to vector<24x256xbf16>
    %c0_64 = arith.constant 0 : index
    %c0_65 = arith.constant 0 : index
    %c0_66 = arith.constant 0 : index
    %76 = vector.load %arg7[%c0_64, %c0_65, %c0_66] : memref<3x256x512xbf16, #tpu.memory_space<vmem>>, vector<1x256x512xbf16>
    %77 = vector.shape_cast %76 : vector<1x256x512xbf16> to vector<256x512xbf16>
    %cst_67 = arith.constant dense<0.000000e+00> : vector<24x512xf32>
    %78 = tpu.matmul %75, %77, %cst_67 {dimension_numbers = #tpu.dot_dimension_numbers<[1], [0], [0], [1], [0, 0, 1, 1], [], []>} : vector<24x256xbf16>, vector<256x512xbf16>, vector<24x512xf32> -> vector<24x512xf32>
    %79 = arith.addf %71, %78 : vector<24x512xf32>
    %c1_68 = arith.constant 1 : index
    %c0_69 = arith.constant 0 : index
    %c0_70 = arith.constant 0 : index
    %80 = vector.load %arg6[%c1_68, %c0_69, %c0_70] : memref<3x24x40xbf16, #tpu.memory_space<vmem>>, vector<1x24x40xbf16>
    %81 = vector.shape_cast %80 : vector<1x24x40xbf16> to vector<24x40xbf16>
    %cst_71 = arith.constant dense<0.000000e+00> : vector<24x256xf32>
    %82 = tpu.matmul %81, %70, %cst_71 {dimension_numbers = #tpu.dot_dimension_numbers<[1], [0], [0], [1], [0, 0, 1, 1], [], []>} : vector<24x40xbf16>, vector<40x256xbf16>, vector<24x256xf32> -> vector<24x256xf32>
    %83 = arith.truncf %82 : vector<24x256xf32> to vector<24x256xbf16>
    %c1_72 = arith.constant 1 : index
    %c0_73 = arith.constant 0 : index
    %c0_74 = arith.constant 0 : index
    %84 = vector.load %arg7[%c1_72, %c0_73, %c0_74] : memref<3x256x512xbf16, #tpu.memory_space<vmem>>, vector<1x256x512xbf16>
    %85 = vector.shape_cast %84 : vector<1x256x512xbf16> to vector<256x512xbf16>
    %cst_75 = arith.constant dense<0.000000e+00> : vector<24x512xf32>
    %86 = tpu.matmul %83, %85, %cst_75 {dimension_numbers = #tpu.dot_dimension_numbers<[1], [0], [0], [1], [0, 0, 1, 1], [], []>} : vector<24x256xbf16>, vector<256x512xbf16>, vector<24x512xf32> -> vector<24x512xf32>
    %87 = arith.addf %79, %86 : vector<24x512xf32>
    %c2_76 = arith.constant 2 : index
    %c0_77 = arith.constant 0 : index
    %c0_78 = arith.constant 0 : index
    %88 = vector.load %arg6[%c2_76, %c0_77, %c0_78] : memref<3x24x40xbf16, #tpu.memory_space<vmem>>, vector<1x24x40xbf16>
    %89 = vector.shape_cast %88 : vector<1x24x40xbf16> to vector<24x40xbf16>
    %cst_79 = arith.constant dense<0.000000e+00> : vector<24x256xf32>
    %90 = tpu.matmul %89, %70, %cst_79 {dimension_numbers = #tpu.dot_dimension_numbers<[1], [0], [0], [1], [0, 0, 1, 1], [], []>} : vector<24x40xbf16>, vector<40x256xbf16>, vector<24x256xf32> -> vector<24x256xf32>
    %91 = arith.truncf %90 : vector<24x256xf32> to vector<24x256xbf16>
    %c2_80 = arith.constant 2 : index
    %c0_81 = arith.constant 0 : index
    %c0_82 = arith.constant 0 : index
    %92 = vector.load %arg7[%c2_80, %c0_81, %c0_82] : memref<3x256x512xbf16, #tpu.memory_space<vmem>>, vector<1x256x512xbf16>
    %93 = vector.shape_cast %92 : vector<1x256x512xbf16> to vector<256x512xbf16>
    %cst_83 = arith.constant dense<0.000000e+00> : vector<24x512xf32>
    %94 = tpu.matmul %91, %93, %cst_83 {dimension_numbers = #tpu.dot_dimension_numbers<[1], [0], [0], [1], [0, 0, 1, 1], [], []>} : vector<24x256xbf16>, vector<256x512xbf16>, vector<24x512xf32> -> vector<24x512xf32>
    %95 = arith.addf %87, %94 : vector<24x512xf32>
    %c0_84 = arith.constant 0 : index
    %c384 = arith.constant 384 : index
    %96 = vector.load %arg1[%c0_84, %c384] : memref<1x1024xf32, #tpu.memory_space<vmem>>, vector<1x512xf32>
    %97 = vector.broadcast %96 : vector<1x512xf32> to vector<24x512xf32>
    %98 = arith.addf %95, %97 : vector<24x512xf32>
    %cst_85 = arith.constant 0.000000e+00 : f32
    %99 = vector.broadcast %cst_85 : f32 to vector<24x512xf32>
    %100 = arith.cmpf oge, %98, %99 : vector<24x512xf32>
    %cst_86 = arith.constant 1.000000e-01 : f32
    %101 = vector.broadcast %cst_86 : f32 to vector<24x512xf32>
    %102 = arith.mulf %101, %98 : vector<24x512xf32>
    %103 = arith.select %100, %98, %102 : vector<24x512xi1>, vector<24x512xf32>
    %c0_87 = arith.constant 0 : index
    %c0_88 = arith.constant 0 : index
    %104 = vector.load %arg12[%c0_87, %c0_88] : memref<24x512xf32, #tpu.memory_space<vmem>>, vector<24x512xf32>
    tpu.vector_store %arg12[%c0_87, %c0_88], %103 {strides = array<i32>} : memref<24x512xf32, #tpu.memory_space<vmem>>, vector<24x512xf32>,
    %105 = arith.truncf %103 : vector<24x512xf32> to vector<24x512xbf16>
    %cst_89 = arith.constant 0.000000e+00 : f32
    %106 = vector.broadcast %cst_89 : f32 to vector<24x128xf32>
    %c0_90 = arith.constant 0 : index
    %c0_91 = arith.constant 0 : index
    %c0_92 = arith.constant 0 : index
    %107 = vector.load %arg8[%c0_90, %c0_91, %c0_92] : memref<3x24x24xbf16, #tpu.memory_space<vmem>>, vector<1x24x24xbf16>
    %108 = vector.shape_cast %107 : vector<1x24x24xbf16> to vector<24x24xbf16>
    %cst_93 = arith.constant dense<0.000000e+00> : vector<24x512xf32>
    %109 = tpu.matmul %108, %105, %cst_93 {dimension_numbers = #tpu.dot_dimension_numbers<[1], [0], [0], [1], [0, 0, 1, 1], [], []>} : vector<24x24xbf16>, vector<24x512xbf16>, vector<24x512xf32> -> vector<24x512xf32>
    %110 = arith.truncf %109 : vector<24x512xf32> to vector<24x512xbf16>
    %c0_94 = arith.constant 0 : index
    %c0_95 = arith.constant 0 : index
    %c0_96 = arith.constant 0 : index
    %111 = vector.load %arg9[%c0_94, %c0_95, %c0_96] : memref<3x512x128xbf16, #tpu.memory_space<vmem>>, vector<1x512x128xbf16>
    %112 = vector.shape_cast %111 : vector<1x512x128xbf16> to vector<512x128xbf16>
    %cst_97 = arith.constant dense<0.000000e+00> : vector<24x128xf32>
    %113 = tpu.matmul %110, %112, %cst_97 {dimension_numbers = #tpu.dot_dimension_numbers<[1], [0], [0], [1], [0, 0, 1, 1], [], []>} : vector<24x512xbf16>, vector<512x128xbf16>, vector<24x128xf32> -> vector<24x128xf32>
    %114 = arith.addf %106, %113 : vector<24x128xf32>
    %c1_98 = arith.constant 1 : index
    %c0_99 = arith.constant 0 : index
    %c0_100 = arith.constant 0 : index
    %115 = vector.load %arg8[%c1_98, %c0_99, %c0_100] : memref<3x24x24xbf16, #tpu.memory_space<vmem>>, vector<1x24x24xbf16>
    %116 = vector.shape_cast %115 : vector<1x24x24xbf16> to vector<24x24xbf16>
    %cst_101 = arith.constant dense<0.000000e+00> : vector<24x512xf32>
    %117 = tpu.matmul %116, %105, %cst_101 {dimension_numbers = #tpu.dot_dimension_numbers<[1], [0], [0], [1], [0, 0, 1, 1], [], []>} : vector<24x24xbf16>, vector<24x512xbf16>, vector<24x512xf32> -> vector<24x512xf32>
    %118 = arith.truncf %117 : vector<24x512xf32> to vector<24x512xbf16>
    %c1_102 = arith.constant 1 : index
    %c0_103 = arith.constant 0 : index
    %c0_104 = arith.constant 0 : index
    %119 = vector.load %arg9[%c1_102, %c0_103, %c0_104] : memref<3x512x128xbf16, #tpu.memory_space<vmem>>, vector<1x512x128xbf16>
    %120 = vector.shape_cast %119 : vector<1x512x128xbf16> to vector<512x128xbf16>
    %cst_105 = arith.constant dense<0.000000e+00> : vector<24x128xf32>
    %121 = tpu.matmul %118, %120, %cst_105 {dimension_numbers = #tpu.dot_dimension_numbers<[1], [0], [0], [1], [0, 0, 1, 1], [], []>} : vector<24x512xbf16>, vector<512x128xbf16>, vector<24x128xf32> -> vector<24x128xf32>
    %122 = arith.addf %114, %121 : vector<24x128xf32>
    %c2_106 = arith.constant 2 : index
    %c0_107 = arith.constant 0 : index
    %c0_108 = arith.constant 0 : index
    %123 = vector.load %arg8[%c2_106, %c0_107, %c0_108] : memref<3x24x24xbf16, #tpu.memory_space<vmem>>, vector<1x24x24xbf16>
    %124 = vector.shape_cast %123 : vector<1x24x24xbf16> to vector<24x24xbf16>
    %cst_109 = arith.constant dense<0.000000e+00> : vector<24x512xf32>
    %125 = tpu.matmul %124, %105, %cst_109 {dimension_numbers = #tpu.dot_dimension_numbers<[1], [0], [0], [1], [0, 0, 1, 1], [], []>} : vector<24x24xbf16>, vector<24x512xbf16>, vector<24x512xf32> -> vector<24x512xf32>
    %126 = arith.truncf %125 : vector<24x512xf32> to vector<24x512xbf16>
    %c2_110 = arith.constant 2 : index
    %c0_111 = arith.constant 0 : index
    %c0_112 = arith.constant 0 : index
    %127 = vector.load %arg9[%c2_110, %c0_111, %c0_112] : memref<3x512x128xbf16, #tpu.memory_space<vmem>>, vector<1x512x128xbf16>
    %128 = vector.shape_cast %127 : vector<1x512x128xbf16> to vector<512x128xbf16>
    %cst_113 = arith.constant dense<0.000000e+00> : vector<24x128xf32>
    %129 = tpu.matmul %126, %128, %cst_113 {dimension_numbers = #tpu.dot_dimension_numbers<[1], [0], [0], [1], [0, 0, 1, 1], [], []>} : vector<24x512xbf16>, vector<512x128xbf16>, vector<24x128xf32> -> vector<24x128xf32>
    %130 = arith.addf %122, %129 : vector<24x128xf32>
    %c0_114 = arith.constant 0 : index
    %c896 = arith.constant 896 : index
    %131 = vector.load %arg1[%c0_114, %c896] : memref<1x1024xf32, #tpu.memory_space<vmem>>, vector<1x128xf32>
    %132 = vector.broadcast %131 : vector<1x128xf32> to vector<24x128xf32>
    %133 = arith.addf %130, %132 : vector<24x128xf32>
    %c0_115 = arith.constant 0 : index
    %c0_116 = arith.constant 0 : index
    %134 = vector.load %arg13[%c0_115, %c0_116] : memref<24x128xf32, #tpu.memory_space<vmem>>, vector<24x128xf32>
    tpu.vector_store %arg13[%c0_115, %c0_116], %133 {strides = array<i32>} : memref<24x128xf32, #tpu.memory_space<vmem>>, vector<24x128xf32>,
    return
  }
}

</mosaic_0001>

<llo_original>
// kernel: discriminator_smaller_p_forward.1
$region0: #{discriminator_smaller_p_forward.1}
  #allocation0 [shape = 'u32[]', space=smem, size = 0x4, offset = 0x4, fixed_abs, tag = 'smem constant byte address 0x4 - core index']
  #allocation1 [shape = 'u32[144,128]{1,0:T(1,128)}', space=vmem, size = 0x12000, scoped, tag = 'internal scratch']
  %s0 = inlined_call_operand.vmem [shape: bf16[80,4], index: 0, kind: input, shape index: {}]
  %s1 = inlined_call_operand.vmem [shape: f32[1,1024], index: 1, kind: input, shape index: {}]
  %s2 = inlined_call_operand.vmem [shape: bf16[3,96,80], index: 2, kind: input, shape index: {}]
  %s3 = inlined_call_operand.vmem [shape: bf16[3,4,128], index: 3, kind: input, shape index: {}]
  %s4 = inlined_call_operand.vmem [shape: bf16[3,40,96], index: 4, kind: input, shape index: {}]
  %s5 = inlined_call_operand.hbm [shape: bf16[3,128,256], index: 5, kind: input, shape index: {}]
  %s6 = inlined_call_operand.hbm [shape: bf16[3,24,40], index: 6, kind: input, shape index: {}]
  %s7 = inlined_call_operand.hbm [shape: bf16[3,256,512], index: 7, kind: input, shape index: {}]
  %s8 = inlined_call_operand.vmem [shape: bf16[3,24,24], index: 8, kind: input, shape index: {}]
  %s9 = inlined_call_operand.hbm [shape: bf16[3,512,128], index: 9, kind: input, shape index: {}]
  %s10 = inlined_call_operand.vmem [shape: f32[96,128], index: 10, kind: output, shape index: {0}]
  %s11 = inlined_call_operand.vmem [shape: f32[40,256], index: 11, kind: output, shape index: {1}]
  %s12 = inlined_call_operand.vmem [shape: f32[24,512], index: 12, kind: output, shape index: {2}]
  %s13 = inlined_call_operand.vmem [shape: f32[24,128], index: 13, kind: output, shape index: {3}]
  %14 = xla_tuple %s10, %s11, %s12, %s13
  %s15 = sld [smem:[#allocation0]]
  $region90: #{discriminator_smaller_p_forward.1} parent=0
    _
  %s17 = ssub.s32 1, %s15
  %s18 = scalar_select 0, %s17, %s15
  $region1: #{discriminator_smaller_p_forward.1} parent=0
    #allocation2 [shape = 'u8[196608]{0}', space=vmem, size = 0x30000, scoped, tag = 'input window, operand 5, single buffered']
    #allocation3 [shape = 's32[1]{0}', space=sflag, size = 0x4, scoped, tag = 'scoped memory for discriminator_smaller_p_forward.1']
    #allocation4 [shape = 'u8[18432]{0}', space=vmem, size = 0x4800, scoped, tag = 'input window, operand 6, single buffered']
    #allocation5 [shape = 's32[1]{0}', space=sflag, size = 0x4, scoped, tag = 'scoped memory for discriminator_smaller_p_forward.1']
    #allocation6 [shape = 'u8[786432]{0}', space=vmem, size = 0xc0000, scoped, tag = 'input window, operand 7, single buffered']
    #allocation7 [shape = 'u8[393216]{0}', space=vmem, size = 0x60000, scoped, tag = 'input window, operand 9, single buffered']
    #allocation8 [shape = 's32[1]{0}', space=sflag, size = 0x4, scoped, tag = 'scoped memory for discriminator_smaller_p_forward.1']
    %19 = vsyncpa [#allocation3], 0
    %20 = vsyncpa [#allocation5], 0
    %21 = vsyncpa [#allocation8], 0
    // Predicated region
    $region2: #{discriminator_smaller_p_forward.1} parent=1 // pred_check
      _
    $region3: #{discriminator_smaller_p_forward.1} parent=1 // pred_check_branch
      %23 = sbr.rel (0) target = $region5
    $region4: #{discriminator_smaller_p_forward.1} parent=1 // pred_region
      _
    $region5: #{discriminator_smaller_p_forward.1} parent=1 // pred_fallthru
      _
    // Predicated region
    $region6: #{discriminator_smaller_p_forward.1} parent=1 // pred_check
      _
    $region7: #{discriminator_smaller_p_forward.1} parent=1 // pred_check_branch
      %25 = sbr.rel (0) target = $region9
    $region8: #{discriminator_smaller_p_forward.1} parent=1 // pred_region
      _
    $region9: #{discriminator_smaller_p_forward.1} parent=1 // pred_fallthru
      _
    // Predicated region
    $region10: #{discriminator_smaller_p_forward.1} parent=1 // pred_check
      _
    $region11: #{discriminator_smaller_p_forward.1} parent=1 // pred_check_branch
      %27 = sbr.rel (0) target = $region13
    $region12: #{discriminator_smaller_p_forward.1} parent=1 // pred_region
      _
    $region13: #{discriminator_smaller_p_forward.1} parent=1 // pred_fallthru
      _
    // Predicated region
    $region14: #{discriminator_smaller_p_forward.1} parent=1 // pred_check
      _
    $region15: #{discriminator_smaller_p_forward.1} parent=1 // pred_check_branch
      %29 = sbr.rel (0) target = $region17
    $region16: #{discriminator_smaller_p_forward.1} parent=1 // pred_region
      _
    $region17: #{discriminator_smaller_p_forward.1} parent=1 // pred_fallthru
      _
    // Predicated region
    $region18: #{discriminator_smaller_p_forward.1} parent=1 // pred_check
      _
    $region19: #{discriminator_smaller_p_forward.1} parent=1 // pred_check_branch
      %31 = sbr.rel (0) target = $region21
    $region20: #{discriminator_smaller_p_forward.1} parent=1 // pred_region
      _
    $region21: #{discriminator_smaller_p_forward.1} parent=1 // pred_fallthru
      _
    // Predicated region
    $region22: #{discriminator_smaller_p_forward.1} parent=1 // pred_check
      _
    $region23: #{discriminator_smaller_p_forward.1} parent=1 // pred_check_branch
      %33 = sbr.rel (0) target = $region25
    $region24: #{discriminator_smaller_p_forward.1} parent=1 // pred_region
      %s35 = ssub.s32 6144, 6144
      %36 = vsyncadd [#allocation3], %s35
      %s37 = sshll.u32 [#allocation2], 4
      %s38 = int_to_ptr.vmem [resolvable:$true] %s37
      %43 = dma.hbm_to_vmem [thread:$0]  %s5, 6144, %s38, [#allocation3], 128, 128, 8
    $region25: #{discriminator_smaller_p_forward.1} parent=1 // pred_fallthru
      _
    // Predicated region
    $region26: #{discriminator_smaller_p_forward.1} parent=1 // pred_check
      _
    $region27: #{discriminator_smaller_p_forward.1} parent=1 // pred_check_branch
      %45 = sbr.rel (0) target = $region29
    $region28: #{discriminator_smaller_p_forward.1} parent=1 // pred_region
      %s47 = ssub.s32 576, 576
      %48 = vsyncadd [#allocation5], %s47
      %s49 = sshll.u32 [#allocation4], 4
      %s50 = int_to_ptr.vmem [resolvable:$true] %s49
      %55 = dma.hbm_to_vmem [thread:$0]  %s6, 576, %s50, [#allocation5], 64, 64, 4
    $region29: #{discriminator_smaller_p_forward.1} parent=1 // pred_fallthru
      _
    // Predicated region
    $region30: #{discriminator_smaller_p_forward.1} parent=1 // pred_check
      _
    $region31: #{discriminator_smaller_p_forward.1} parent=1 // pred_check_branch
      %57 = sbr.rel (0) target = $region33
    $region32: #{discriminator_smaller_p_forward.1} parent=1 // pred_region
      %s59 = ssub.s32 24576, 24576
      %60 = vsyncadd [#allocation5], %s59
      %s61 = sshll.u32 [#allocation6], 4
      %s62 = int_to_ptr.vmem [resolvable:$true] %s61
      %67 = dma.hbm_to_vmem [thread:$0]  %s7, 24576, %s62, [#allocation5], 256, 256, 16
    $region33: #{discriminator_smaller_p_forward.1} parent=1 // pred_fallthru
      _
    // Predicated region
    $region34: #{discriminator_smaller_p_forward.1} parent=1 // pred_check
      _
    $region35: #{discriminator_smaller_p_forward.1} parent=1 // pred_check_branch
      %69 = sbr.rel (0) target = $region37
    $region36: #{discriminator_smaller_p_forward.1} parent=1 // pred_region
      _
    $region37: #{discriminator_smaller_p_forward.1} parent=1 // pred_fallthru
      _
    // Predicated region
    $region38: #{discriminator_smaller_p_forward.1} parent=1 // pred_check
      _
    $region39: #{discriminator_smaller_p_forward.1} parent=1 // pred_check_branch
      %71 = sbr.rel (0) target = $region41
    $region40: #{discriminator_smaller_p_forward.1} parent=1 // pred_region
      %s73 = ssub.s32 12288, 12288
      %74 = vsyncadd [#allocation8], %s73
      %s75 = sshll.u32 [#allocation7], 4
      %s76 = int_to_ptr.vmem [resolvable:$true] %s75
      %81 = dma.hbm_to_vmem [thread:$0]  %s9, 12288, %s76, [#allocation8], 64, 64, 4
    $region41: #{discriminator_smaller_p_forward.1} parent=1 // pred_fallthru
      _
    // Predicated region
    $region42: #{discriminator_smaller_p_forward.1} parent=1 // pred_check
      _
    $region43: #{discriminator_smaller_p_forward.1} parent=1 // pred_check_branch
      %83 = sbr.rel (0) target = $region45
    $region44: #{discriminator_smaller_p_forward.1} parent=1 // pred_region
      %84 = dma.done [#allocation3], 6144
    $region45: #{discriminator_smaller_p_forward.1} parent=1 // pred_fallthru
      _
    // Predicated region
    $region46: #{discriminator_smaller_p_forward.1} parent=1 // pred_check
      _
    $region47: #{discriminator_smaller_p_forward.1} parent=1 // pred_check_branch
      %86 = sbr.rel (0) target = $region49
    $region48: #{discriminator_smaller_p_forward.1} parent=1 // pred_region
      %87 = dma.done [#allocation5], 576
    $region49: #{discriminator_smaller_p_forward.1} parent=1 // pred_fallthru
      _
    // Predicated region
    $region50: #{discriminator_smaller_p_forward.1} parent=1 // pred_check
      _
    $region51: #{discriminator_smaller_p_forward.1} parent=1 // pred_check_branch
      %89 = sbr.rel (0) target = $region53
    $region52: #{discriminator_smaller_p_forward.1} parent=1 // pred_region
      %90 = dma.done [#allocation5], 24576
    $region53: #{discriminator_smaller_p_forward.1} parent=1 // pred_fallthru
      _
    // Predicated region
    $region54: #{discriminator_smaller_p_forward.1} parent=1 // pred_check
      _
    $region55: #{discriminator_smaller_p_forward.1} parent=1 // pred_check_branch
      %92 = sbr.rel (0) target = $region57
    $region56: #{discriminator_smaller_p_forward.1} parent=1 // pred_region
      %93 = dma.done [#allocation8], 12288
    $region57: #{discriminator_smaller_p_forward.1} parent=1 // pred_fallthru
      _
    %v95 = vld [vmem:[%s0] sm:$0xf]
    %v96 = vld [vmem:[%s0 + $0x4] sm:$0xf]
    %v97 = vld [vmem:[%s0 + $0x8] sm:$0xf]
    %v98 = vld [vmem:[%s0 + $0xc] sm:$0xf]
    %v99 = vld [vmem:[%s0 + $0x10] sm:$0xf]
    %v100 = vld [vmem:[%s0 + $0x14] sm:$0xf]
    %v101 = vld [vmem:[%s0 + $0x18] sm:$0xf]
    %v102 = vld [vmem:[%s0 + $0x1c] sm:$0xf]
    %v103 = vld [vmem:[%s0 + $0x20] sm:$0xf]
    %v104 = vld [vmem:[%s0 + $0x24] sm:$0xf]
    %v105 = vld [vmem:[%s2] sm:$0xf]
    %v106 = vld [vmem:[%s2 + $0x4] sm:$0xf]
    %v107 = vld [vmem:[%s2 + $0x8] sm:$0xf]
    %v108 = vld [vmem:[%s2 + $0xc] sm:$0xf]
    %v109 = vld [vmem:[%s2 + $0x10] sm:$0xf]
    %v110 = vld [vmem:[%s2 + $0x14] sm:$0xf]
    %v111 = vld [vmem:[%s2 + $0x18] sm:$0xf]
    %v112 = vld [vmem:[%s2 + $0x1c] sm:$0xf]
    %v113 = vld [vmem:[%s2 + $0x20] sm:$0xf]
    %v114 = vld [vmem:[%s2 + $0x24] sm:$0xf]
    %v115 = vld [vmem:[%s2 + $0x28] sm:$0xf]
    %v116 = vld [vmem:[%s2 + $0x2c] sm:$0xf]
    %v129 = vunpack.c.l.b16 %v105
    %v130 = vunpack.c.l.b16 %v106
    %v131 = vunpack.c.l.b16 %v107
    %v132 = vunpack.c.l.b16 %v108
    %v133 = vunpack.c.l.b16 %v109
    %v134 = vunpack.c.l.b16 %v110
    %v135 = vunpack.c.l.b16 %v111
    %v136 = vunpack.c.l.b16 %v112
    %v137 = vunpack.c.l.b16 %v113
    %v138 = vunpack.c.l.b16 %v114
    %v139 = vunpack.c.l.b16 %v115
    %v140 = vunpack.c.l.b16 %v116
    %v141 = vpack.c.b16 %v130, %v129
    %v142 = vpack.c.b16 %v132, %v131
    %v143 = vpack.c.b16 %v134, %v133
    %v144 = vpack.c.b16 %v136, %v135
    %v145 = vpack.c.b16 %v138, %v137
    %v146 = vpack.c.b16 %v140, %v139
    %v157 = vunpack.c.l.b16 %v95
    %v158 = vunpack.c.l.b16 %v96
    %v159 = vunpack.c.l.b16 %v97
    %v160 = vunpack.c.l.b16 %v98
    %v161 = vunpack.c.l.b16 %v99
    %v162 = vunpack.c.l.b16 %v100
    %v163 = vunpack.c.l.b16 %v101
    %v164 = vunpack.c.l.b16 %v102
    %v165 = vunpack.c.l.b16 %v103
    %v166 = vunpack.c.l.b16 %v104
    %v167 = vpack.c.b16 %v158, %v157
    %v168 = vpack.c.b16 %v160, %v159
    %v169 = vpack.c.b16 %v162, %v161
    %v170 = vpack.c.b16 %v164, %v163
    %v171 = vpack.c.b16 %v166, %v165
    %vm177 = vcmask 654336
    %v179 = vsel %vm177, %v141, 0
    %v182 = vsel %vm177, %v142, 0
    %v185 = vsel %vm177, %v143, 0
    %v188 = vsel %vm177, %v144, 0
    %v191 = vsel %vm177, %v145, 0
    %v194 = vsel %vm177, %v146, 0
    %196 = vmatprep.subr.bf16.mxu0 0
    %197 = vmatpush1.bf16.msra.mxu0 0
    %198 = vmatprep.subr.bf16.mxu0 0
    %199 = vmatpush1.bf16.msra.mxu0 0
    %200 = vmatprep.subr.bf16.mxu0 0
    %201 = vmatpush1.bf16.msra.mxu0 0
    %202 = vmatprep.subr.bf16.mxu0 0
    %203 = vmatpush1.bf16.msra.mxu0 %v171
    %204 = vmatprep.subr.bf16.mxu0 0
    %205 = vmatpush1.bf16.msra.mxu0 %v170
    %206 = vmatprep.subr.bf16.mxu0 0
    %207 = vmatpush1.bf16.msra.mxu0 %v169
    %208 = vmatprep.subr.bf16.mxu0 0
    %209 = vmatpush1.bf16.msra.mxu0 %v168
    %210 = vmatprep.subr.bf16.mxu0 0
    %211 = vmatpush1.bf16.msra.mxu0 %v167
    %212 = vmatprep.subr.bf16.mxu0 0
    %213 = vmatpush2.bf16.msra.mxu0 0
    %214 = vmatprep.subr.bf16.mxu0 0
    %215 = vmatpush2.bf16.msra.mxu0 0
    %216 = vmatprep.subr.bf16.mxu0 0
    %217 = vmatpush2.bf16.msra.mxu0 0
    %218 = vmatprep.subr.bf16.mxu0 0
    %219 = vmatpush2.bf16.msra.mxu0 0
    %220 = vmatprep.subr.bf16.mxu0 0
    %221 = vmatpush2.bf16.msra.mxu0 0
    %222 = vmatprep.subr.bf16.mxu0 0
    %223 = vmatpush2.bf16.msra.mxu0 0
    %224 = vmatprep.subr.bf16.mxu0 0
    %225 = vmatpush2.bf16.msra.mxu0 0
    %226 = vmatprep.subr.bf16.mxu0 0
    %227 = vmatpush2.bf16.msra.mxu0 0
    %228 = vmatprep.mubr.bf16.mxu0 0
    %229 = vmatmul.mubr.bf16.gmra.mxu0 %v179
    %v230 = vpop.f32.mrf.mxu0
    %v231 = vadd.f32 0.0, %v230
    %v232 = vpop.f32.mrf.mxu0
    %v233 = vpop.f32.mrf.mxu0
    %v234 = vadd.f32 0.0, %v233
    %v235 = vpop.f32.mrf.mxu0
    %236 = vmatprep.mubr.bf16.mxu0 0
    %237 = vmatmul.mubr.bf16.gmra.mxu0 %v182
    %v238 = vpop.f32.mrf.mxu0
    %v239 = vadd.f32 0.0, %v238
    %v240 = vpop.f32.mrf.mxu0
    %v241 = vpop.f32.mrf.mxu0
    %v242 = vadd.f32 0.0, %v241
    %v243 = vpop.f32.mrf.mxu0
    %244 = vmatprep.mubr.bf16.mxu0 0
    %245 = vmatmul.mubr.bf16.gmra.mxu0 %v185
    %v246 = vpop.f32.mrf.mxu0
    %v247 = vadd.f32 0.0, %v246
    %v248 = vpop.f32.mrf.mxu0
    %v249 = vpop.f32.mrf.mxu0
    %v250 = vadd.f32 0.0, %v249
    %v251 = vpop.f32.mrf.mxu0
    %252 = vmatprep.mubr.bf16.mxu0 0
    %253 = vmatmul.mubr.bf16.gmra.mxu0 %v188
    %v254 = vpop.f32.mrf.mxu0
    %v255 = vadd.f32 0.0, %v254
    %v256 = vpop.f32.mrf.mxu0
    %v257 = vpop.f32.mrf.mxu0
    %v258 = vadd.f32 0.0, %v257
    %v259 = vpop.f32.mrf.mxu0
    %260 = vmatprep.mubr.bf16.mxu0 0
    %261 = vmatmul.mubr.bf16.gmra.mxu0 %v191
    %v262 = vpop.f32.mrf.mxu0
    %v263 = vadd.f32 0.0, %v262
    %v264 = vpop.f32.mrf.mxu0
    %v265 = vpop.f32.mrf.mxu0
    %v266 = vadd.f32 0.0, %v265
    %v267 = vpop.f32.mrf.mxu0
    %268 = vmatprep.mubr.bf16.mxu0 0
    %269 = vmatmul.mubr.bf16.gmra.mxu0 %v194
    %v270 = vpop.f32.mrf.mxu0
    %v271 = vadd.f32 0.0, %v270
    %v272 = vpop.f32.mrf.mxu0
    %v273 = vpop.f32.mrf.mxu0
    %v274 = vadd.f32 0.0, %v273
    %v275 = vpop.f32.mrf.mxu0
    %276 = vdwg.mxu0
    %v277 = vpack.c.bf16 %v234, %v231
    %v278 = vpack.c.bf16 %v242, %v239
    %v279 = vpack.c.bf16 %v250, %v247
    %v280 = vpack.c.bf16 %v258, %v255
    %v281 = vpack.c.bf16 %v266, %v263
    %v282 = vpack.c.bf16 %v274, %v271
    %v283 = vld [vmem:[%s3] sm:$0x3]
    %s284 = scalar_lea.vmem %s2, 48
    %v285 = vld [vmem:[%s284] sm:$0xf]
    %v286 = vld [vmem:[%s284 + $0x4] sm:$0xf]
    %v287 = vld [vmem:[%s284 + $0x8] sm:$0xf]
    %v288 = vld [vmem:[%s284 + $0xc] sm:$0xf]
    %v289 = vld [vmem:[%s284 + $0x10] sm:$0xf]
    %v290 = vld [vmem:[%s284 + $0x14] sm:$0xf]
    %v291 = vld [vmem:[%s284 + $0x18] sm:$0xf]
    %v292 = vld [vmem:[%s284 + $0x1c] sm:$0xf]
    %v293 = vld [vmem:[%s284 + $0x20] sm:$0xf]
    %v294 = vld [vmem:[%s284 + $0x24] sm:$0xf]
    %v295 = vld [vmem:[%s284 + $0x28] sm:$0xf]
    %v296 = vld [vmem:[%s284 + $0x2c] sm:$0xf]
    %v309 = vunpack.c.l.b16 %v285
    %v310 = vunpack.c.l.b16 %v286
    %v311 = vunpack.c.l.b16 %v287
    %v312 = vunpack.c.l.b16 %v288
    %v313 = vunpack.c.l.b16 %v289
    %v314 = vunpack.c.l.b16 %v290
    %v315 = vunpack.c.l.b16 %v291
    %v316 = vunpack.c.l.b16 %v292
    %v317 = vunpack.c.l.b16 %v293
    %v318 = vunpack.c.l.b16 %v294
    %v319 = vunpack.c.l.b16 %v295
    %v320 = vunpack.c.l.b16 %v296
    %v321 = vpack.c.b16 %v310, %v309
    %v322 = vpack.c.b16 %v312, %v311
    %v323 = vpack.c.b16 %v314, %v313
    %v324 = vpack.c.b16 %v316, %v315
    %v325 = vpack.c.b16 %v318, %v317
    %v326 = vpack.c.b16 %v320, %v319
    %v328 = vsel %vm177, %v321, 0
    %v331 = vsel %vm177, %v322, 0
    %v334 = vsel %vm177, %v323, 0
    %v337 = vsel %vm177, %v324, 0
    %v340 = vsel %vm177, %v325, 0
    %v343 = vsel %vm177, %v326, 0
    %345 = vmatprep.subr.bf16.mxu0 0
    %346 = vmatpush1.bf16.msra.mxu0 0
    %347 = vmatprep.subr.bf16.mxu0 0
    %348 = vmatpush1.bf16.msra.mxu0 0
    %349 = vmatprep.subr.bf16.mxu0 0
    %350 = vmatpush1.bf16.msra.mxu0 0
    %351 = vmatprep.subr.bf16.mxu0 0
    %352 = vmatpush1.bf16.msra.mxu0 %v171
    %353 = vmatprep.subr.bf16.mxu0 0
    %354 = vmatpush1.bf16.msra.mxu0 %v170
    %355 = vmatprep.subr.bf16.mxu0 0
    %356 = vmatpush1.bf16.msra.mxu0 %v169
    %357 = vmatprep.subr.bf16.mxu0 0
    %358 = vmatpush1.bf16.msra.mxu0 %v168
    %359 = vmatprep.subr.bf16.mxu0 0
    %360 = vmatpush1.bf16.msra.mxu0 %v167
    %361 = vmatprep.subr.bf16.mxu0 0
    %362 = vmatpush2.bf16.msra.mxu0 0
    %363 = vmatprep.subr.bf16.mxu0 0
    %364 = vmatpush2.bf16.msra.mxu0 0
    %365 = vmatprep.subr.bf16.mxu0 0
    %366 = vmatpush2.bf16.msra.mxu0 0
    %367 = vmatprep.subr.bf16.mxu0 0
    %368 = vmatpush2.bf16.msra.mxu0 0
    %369 = vmatprep.subr.bf16.mxu0 0
    %370 = vmatpush2.bf16.msra.mxu0 0
    %371 = vmatprep.subr.bf16.mxu0 0
    %372 = vmatpush2.bf16.msra.mxu0 0
    %373 = vmatprep.subr.bf16.mxu0 0
    %374 = vmatpush2.bf16.msra.mxu0 0
    %375 = vmatprep.subr.bf16.mxu0 0
    %376 = vmatpush2.bf16.msra.mxu0 0
    %377 = vmatprep.mubr.bf16.mxu0 0
    %378 = vmatmul.mubr.bf16.gmra.mxu0 %v328
    %v379 = vpop.f32.mrf.mxu0
    %v380 = vadd.f32 0.0, %v379
    %v381 = vpop.f32.mrf.mxu0
    %v382 = vpop.f32.mrf.mxu0
    %v383 = vadd.f32 0.0, %v382
    %v384 = vpop.f32.mrf.mxu0
    %385 = vmatprep.mubr.bf16.mxu0 0
    %386 = vmatmul.mubr.bf16.gmra.mxu0 %v331
    %v387 = vpop.f32.mrf.mxu0
    %v388 = vadd.f32 0.0, %v387
    %v389 = vpop.f32.mrf.mxu0
    %v390 = vpop.f32.mrf.mxu0
    %v391 = vadd.f32 0.0, %v390
    %v392 = vpop.f32.mrf.mxu0
    %393 = vmatprep.mubr.bf16.mxu0 0
    %394 = vmatmul.mubr.bf16.gmra.mxu0 %v334
    %v395 = vpop.f32.mrf.mxu0
    %v396 = vadd.f32 0.0, %v395
    %v397 = vpop.f32.mrf.mxu0
    %v398 = vpop.f32.mrf.mxu0
    %v399 = vadd.f32 0.0, %v398
    %v400 = vpop.f32.mrf.mxu0
    %401 = vmatprep.mubr.bf16.mxu0 0
    %402 = vmatmul.mubr.bf16.gmra.mxu0 %v337
    %v403 = vpop.f32.mrf.mxu0
    %v404 = vadd.f32 0.0, %v403
    %v405 = vpop.f32.mrf.mxu0
    %v406 = vpop.f32.mrf.mxu0
    %v407 = vadd.f32 0.0, %v406
    %v408 = vpop.f32.mrf.mxu0
    %409 = vmatprep.mubr.bf16.mxu0 0
    %410 = vmatmul.mubr.bf16.gmra.mxu0 %v340
    %v411 = vpop.f32.mrf.mxu0
    %v412 = vadd.f32 0.0, %v411
    %v413 = vpop.f32.mrf.mxu0
    %v414 = vpop.f32.mrf.mxu0
    %v415 = vadd.f32 0.0, %v414
    %v416 = vpop.f32.mrf.mxu0
    %417 = vmatprep.mubr.bf16.mxu0 0
    %418 = vmatmul.mubr.bf16.gmra.mxu0 %v343
    %v419 = vpop.f32.mrf.mxu0
    %v420 = vadd.f32 0.0, %v419
    %v421 = vpop.f32.mrf.mxu0
    %v422 = vpop.f32.mrf.mxu0
    %v423 = vadd.f32 0.0, %v422
    %v424 = vpop.f32.mrf.mxu0
    %425 = vdwg.mxu0
    %v426 = vpack.c.bf16 %v383, %v380
    %v427 = vpack.c.bf16 %v391, %v388
    %v428 = vpack.c.bf16 %v399, %v396
    %v429 = vpack.c.bf16 %v407, %v404
    %v430 = vpack.c.bf16 %v415, %v412
    %v431 = vpack.c.bf16 %v423, %v420
    %s432 = scalar_lea.vmem %s3, 2
    %v433 = vld [vmem:[%s432] sm:$0x3]
    %vm434 = vcmask 31744
    %v436 = vsel %vm434, %v426, 0
    %v439 = vsel %vm434, %v427, 0
    %v442 = vsel %vm434, %v428, 0
    %v445 = vsel %vm434, %v429, 0
    %v448 = vsel %vm434, %v430, 0
    %v451 = vsel %vm434, %v431, 0
    %vm453 = vcmask 1041408
    %v455 = vsel %vm453, %v433, 0
    %457 = vmatprep.subr.bf16.mxu0 0
    %458 = vmatpush1.bf16.msra.mxu0 0
    %459 = vmatprep.subr.bf16.mxu0 0
    %460 = vmatpush1.bf16.msra.mxu0 0
    %461 = vmatprep.subr.bf16.mxu0 0
    %462 = vmatpush1.bf16.msra.mxu0 0
    %463 = vmatprep.subr.bf16.mxu0 0
    %464 = vmatpush1.bf16.msra.mxu0 0
    %465 = vmatprep.subr.bf16.mxu0 0
    %466 = vmatpush1.bf16.msra.mxu0 0
    %467 = vmatprep.subr.bf16.mxu0 0
    %468 = vmatpush1.bf16.msra.mxu0 0
    %469 = vmatprep.subr.bf16.mxu0 0
    %470 = vmatpush1.bf16.msra.mxu0 0
    %471 = vmatprep.subr.bf16.mxu0 0
    %472 = vmatpush1.bf16.msra.mxu0 %v455
    %473 = vmatprep.subr.bf16.mxu0 0
    %474 = vmatpush2.bf16.msra.mxu0 0
    %475 = vmatprep.subr.bf16.mxu0 0
    %476 = vmatpush2.bf16.msra.mxu0 0
    %477 = vmatprep.subr.bf16.mxu0 0
    %478 = vmatpush2.bf16.msra.mxu0 0
    %479 = vmatprep.subr.bf16.mxu0 0
    %480 = vmatpush2.bf16.msra.mxu0 0
    %481 = vmatprep.subr.bf16.mxu0 0
    %482 = vmatpush2.bf16.msra.mxu0 0
    %483 = vmatprep.subr.bf16.mxu0 0
    %484 = vmatpush2.bf16.msra.mxu0 0
    %485 = vmatprep.subr.bf16.mxu0 0
    %486 = vmatpush2.bf16.msra.mxu0 0
    %487 = vmatprep.subr.bf16.mxu0 0
    %488 = vmatpush2.bf16.msra.mxu0 0
    %489 = vmatprep.mubr.bf16.mxu0 0
    %490 = vmatmul.mubr.bf16.gmra.mxu0 %v436
    %v491 = vpop.f32.mrf.mxu0
    %v492 = vadd.f32 0.0, %v491
    %v493 = vpop.f32.mrf.mxu0
    %v494 = vpop.f32.mrf.mxu0
    %v495 = vadd.f32 0.0, %v494
    %v496 = vpop.f32.mrf.mxu0
    %497 = vmatprep.mubr.bf16.mxu0 0
    %498 = vmatmul.mubr.bf16.gmra.mxu0 %v439
    %v499 = vpop.f32.mrf.mxu0
    %v500 = vadd.f32 0.0, %v499
    %v501 = vpop.f32.mrf.mxu0
    %v502 = vpop.f32.mrf.mxu0
    %v503 = vadd.f32 0.0, %v502
    %v504 = vpop.f32.mrf.mxu0
    %505 = vmatprep.mubr.bf16.mxu0 0
    %506 = vmatmul.mubr.bf16.gmra.mxu0 %v442
    %v507 = vpop.f32.mrf.mxu0
    %v508 = vadd.f32 0.0, %v507
    %v509 = vpop.f32.mrf.mxu0
    %v510 = vpop.f32.mrf.mxu0
    %v511 = vadd.f32 0.0, %v510
    %v512 = vpop.f32.mrf.mxu0
    %513 = vmatprep.mubr.bf16.mxu0 0
    %514 = vmatmul.mubr.bf16.gmra.mxu0 %v445
    %v515 = vpop.f32.mrf.mxu0
    %v516 = vadd.f32 0.0, %v515
    %v517 = vpop.f32.mrf.mxu0
    %v518 = vpop.f32.mrf.mxu0
    %v519 = vadd.f32 0.0, %v518
    %v520 = vpop.f32.mrf.mxu0
    %521 = vmatprep.mubr.bf16.mxu0 0
    %522 = vmatmul.mubr.bf16.gmra.mxu0 %v448
    %v523 = vpop.f32.mrf.mxu0
    %v524 = vadd.f32 0.0, %v523
    %v525 = vpop.f32.mrf.mxu0
    %v526 = vpop.f32.mrf.mxu0
    %v527 = vadd.f32 0.0, %v526
    %v528 = vpop.f32.mrf.mxu0
    %529 = vmatprep.mubr.bf16.mxu0 0
    %530 = vmatmul.mubr.bf16.gmra.mxu0 %v451
    %v531 = vpop.f32.mrf.mxu0
    %v532 = vadd.f32 0.0, %v531
    %v533 = vpop.f32.mrf.mxu0
    %v534 = vpop.f32.mrf.mxu0
    %v535 = vadd.f32 0.0, %v534
    %v536 = vpop.f32.mrf.mxu0
    %537 = vdwg.mxu0
    %v539 = vsel %vm434, %v277, 0
    %v542 = vsel %vm434, %v278, 0
    %v545 = vsel %vm434, %v279, 0
    %v548 = vsel %vm434, %v280, 0
    %v551 = vsel %vm434, %v281, 0
    %v554 = vsel %vm434, %v282, 0
    %v557 = vsel %vm453, %v283, 0
    %559 = vmatprep.subr.bf16.mxu0 0
    %560 = vmatpush1.bf16.msra.mxu0 0
    %561 = vmatprep.subr.bf16.mxu0 0
    %562 = vmatpush1.bf16.msra.mxu0 0
    %563 = vmatprep.subr.bf16.mxu0 0
    %564 = vmatpush1.bf16.msra.mxu0 0
    %565 = vmatprep.subr.bf16.mxu0 0
    %566 = vmatpush1.bf16.msra.mxu0 0
    %567 = vmatprep.subr.bf16.mxu0 0
    %568 = vmatpush1.bf16.msra.mxu0 0
    %569 = vmatprep.subr.bf16.mxu0 0
    %570 = vmatpush1.bf16.msra.mxu0 0
    %571 = vmatprep.subr.bf16.mxu0 0
    %572 = vmatpush1.bf16.msra.mxu0 0
    %573 = vmatprep.subr.bf16.mxu0 0
    %574 = vmatpush1.bf16.msra.mxu0 %v557
    %575 = vmatprep.subr.bf16.mxu0 0
    %576 = vmatpush2.bf16.msra.mxu0 0
    %577 = vmatprep.subr.bf16.mxu0 0
    %578 = vmatpush2.bf16.msra.mxu0 0
    %579 = vmatprep.subr.bf16.mxu0 0
    %580 = vmatpush2.bf16.msra.mxu0 0
    %581 = vmatprep.subr.bf16.mxu0 0
    %582 = vmatpush2.bf16.msra.mxu0 0
    %583 = vmatprep.subr.bf16.mxu0 0
    %584 = vmatpush2.bf16.msra.mxu0 0
    %585 = vmatprep.subr.bf16.mxu0 0
    %586 = vmatpush2.bf16.msra.mxu0 0
    %587 = vmatprep.subr.bf16.mxu0 0
    %588 = vmatpush2.bf16.msra.mxu0 0
    %589 = vmatprep.subr.bf16.mxu0 0
    %590 = vmatpush2.bf16.msra.mxu0 0
    %591 = vmatprep.mubr.bf16.mxu0 0
    %592 = vmatmul.mubr.bf16.gmra.mxu0 %v539
    %v593 = vpop.f32.mrf.mxu0
    %v594 = vadd.f32 %v492, %v593
    %v595 = vpop.f32.mrf.mxu0
    %v596 = vpop.f32.mrf.mxu0
    %v597 = vadd.f32 %v495, %v596
    %v598 = vpop.f32.mrf.mxu0
    %599 = vmatprep.mubr.bf16.mxu0 0
    %600 = vmatmul.mubr.bf16.gmra.mxu0 %v542
    %v601 = vpop.f32.mrf.mxu0
    %v602 = vadd.f32 %v500, %v601
    %v603 = vpop.f32.mrf.mxu0
    %v604 = vpop.f32.mrf.mxu0
    %v605 = vadd.f32 %v503, %v604
    %v606 = vpop.f32.mrf.mxu0
    %607 = vmatprep.mubr.bf16.mxu0 0
    %608 = vmatmul.mubr.bf16.gmra.mxu0 %v545
    %v609 = vpop.f32.mrf.mxu0
    %v610 = vadd.f32 %v508, %v609
    %v611 = vpop.f32.mrf.mxu0
    %v612 = vpop.f32.mrf.mxu0
    %v613 = vadd.f32 %v511, %v612
    %v614 = vpop.f32.mrf.mxu0
    %615 = vmatprep.mubr.bf16.mxu0 0
    %616 = vmatmul.mubr.bf16.gmra.mxu0 %v548
    %v617 = vpop.f32.mrf.mxu0
    %v618 = vadd.f32 %v516, %v617
    %v619 = vpop.f32.mrf.mxu0
    %v620 = vpop.f32.mrf.mxu0
    %v621 = vadd.f32 %v519, %v620
    %v622 = vpop.f32.mrf.mxu0
    %623 = vmatprep.mubr.bf16.mxu0 0
    %624 = vmatmul.mubr.bf16.gmra.mxu0 %v551
    %v625 = vpop.f32.mrf.mxu0
    %v626 = vadd.f32 %v524, %v625
    %v627 = vpop.f32.mrf.mxu0
    %v628 = vpop.f32.mrf.mxu0
    %v629 = vadd.f32 %v527, %v628
    %v630 = vpop.f32.mrf.mxu0
    %631 = vmatprep.mubr.bf16.mxu0 0
    %632 = vmatmul.mubr.bf16.gmra.mxu0 %v554
    %v633 = vpop.f32.mrf.mxu0
    %v634 = vadd.f32 %v532, %v633
    %v635 = vpop.f32.mrf.mxu0
    %v636 = vpop.f32.mrf.mxu0
    %v637 = vadd.f32 %v535, %v636
    %v638 = vpop.f32.mrf.mxu0
    %639 = vdwg.mxu0
    %s640 = scalar_lea.vmem %s2, 96
    %v641 = vld [vmem:[%s640] sm:$0xf]
    %v642 = vld [vmem:[%s640 + $0x4] sm:$0xf]
    %v643 = vld [vmem:[%s640 + $0x8] sm:$0xf]
    %v644 = vld [vmem:[%s640 + $0xc] sm:$0xf]
    %v645 = vld [vmem:[%s640 + $0x10] sm:$0xf]
    %v646 = vld [vmem:[%s640 + $0x14] sm:$0xf]
    %v647 = vld [vmem:[%s640 + $0x18] sm:$0xf]
    %v648 = vld [vmem:[%s640 + $0x1c] sm:$0xf]
    %v649 = vld [vmem:[%s640 + $0x20] sm:$0xf]
    %v650 = vld [vmem:[%s640 + $0x24] sm:$0xf]
    %v651 = vld [vmem:[%s640 + $0x28] sm:$0xf]
    %v652 = vld [vmem:[%s640 + $0x2c] sm:$0xf]
    %v665 = vunpack.c.l.b16 %v641
    %v666 = vunpack.c.l.b16 %v642
    %v667 = vunpack.c.l.b16 %v643
    %v668 = vunpack.c.l.b16 %v644
    %v669 = vunpack.c.l.b16 %v645
    %v670 = vunpack.c.l.b16 %v646
    %v671 = vunpack.c.l.b16 %v647
    %v672 = vunpack.c.l.b16 %v648
    %v673 = vunpack.c.l.b16 %v649
    %v674 = vunpack.c.l.b16 %v650
    %v675 = vunpack.c.l.b16 %v651
    %v676 = vunpack.c.l.b16 %v652
    %v677 = vpack.c.b16 %v666, %v665
    %v678 = vpack.c.b16 %v668, %v667
    %v679 = vpack.c.b16 %v670, %v669
    %v680 = vpack.c.b16 %v672, %v671
    %v681 = vpack.c.b16 %v674, %v673
    %v682 = vpack.c.b16 %v676, %v675
    %v684 = vsel %vm177, %v677, 0
    %v687 = vsel %vm177, %v678, 0
    %v690 = vsel %vm177, %v679, 0
    %v693 = vsel %vm177, %v680, 0
    %v696 = vsel %vm177, %v681, 0
    %v699 = vsel %vm177, %v682, 0
    %701 = vmatprep.subr.bf16.mxu0 0
    %702 = vmatpush1.bf16.msra.mxu0 0
    %703 = vmatprep.subr.bf16.mxu0 0
    %704 = vmatpush1.bf16.msra.mxu0 0
    %705 = vmatprep.subr.bf16.mxu0 0
    %706 = vmatpush1.bf16.msra.mxu0 0
    %707 = vmatprep.subr.bf16.mxu0 0
    %708 = vmatpush1.bf16.msra.mxu0 %v171
    %709 = vmatprep.subr.bf16.mxu0 0
    %710 = vmatpush1.bf16.msra.mxu0 %v170
    %711 = vmatprep.subr.bf16.mxu0 0
    %712 = vmatpush1.bf16.msra.mxu0 %v169
    %713 = vmatprep.subr.bf16.mxu0 0
    %714 = vmatpush1.bf16.msra.mxu0 %v168
    %715 = vmatprep.subr.bf16.mxu0 0
    %716 = vmatpush1.bf16.msra.mxu0 %v167
    %717 = vmatprep.subr.bf16.mxu0 0
    %718 = vmatpush2.bf16.msra.mxu0 0
    %719 = vmatprep.subr.bf16.mxu0 0
    %720 = vmatpush2.bf16.msra.mxu0 0
    %721 = vmatprep.subr.bf16.mxu0 0
    %722 = vmatpush2.bf16.msra.mxu0 0
    %723 = vmatprep.subr.bf16.mxu0 0
    %724 = vmatpush2.bf16.msra.mxu0 0
    %725 = vmatprep.subr.bf16.mxu0 0
    %726 = vmatpush2.bf16.msra.mxu0 0
    %727 = vmatprep.subr.bf16.mxu0 0
    %728 = vmatpush2.bf16.msra.mxu0 0
    %729 = vmatprep.subr.bf16.mxu0 0
    %730 = vmatpush2.bf16.msra.mxu0 0
    %731 = vmatprep.subr.bf16.mxu0 0
    %732 = vmatpush2.bf16.msra.mxu0 0
    %733 = vmatprep.mubr.bf16.mxu0 0
    %734 = vmatmul.mubr.bf16.gmra.mxu0 %v684
    %v735 = vpop.f32.mrf.mxu0
    %v736 = vadd.f32 0.0, %v735
    %v737 = vpop.f32.mrf.mxu0
    %v738 = vpop.f32.mrf.mxu0
    %v739 = vadd.f32 0.0, %v738
    %v740 = vpop.f32.mrf.mxu0
    %741 = vmatprep.mubr.bf16.mxu0 0
    %742 = vmatmul.mubr.bf16.gmra.mxu0 %v687
    %v743 = vpop.f32.mrf.mxu0
    %v744 = vadd.f32 0.0, %v743
    %v745 = vpop.f32.mrf.mxu0
    %v746 = vpop.f32.mrf.mxu0
    %v747 = vadd.f32 0.0, %v746
    %v748 = vpop.f32.mrf.mxu0
    %749 = vmatprep.mubr.bf16.mxu0 0
    %750 = vmatmul.mubr.bf16.gmra.mxu0 %v690
    %v751 = vpop.f32.mrf.mxu0
    %v752 = vadd.f32 0.0, %v751
    %v753 = vpop.f32.mrf.mxu0
    %v754 = vpop.f32.mrf.mxu0
    %v755 = vadd.f32 0.0, %v754
    %v756 = vpop.f32.mrf.mxu0
    %757 = vmatprep.mubr.bf16.mxu0 0
    %758 = vmatmul.mubr.bf16.gmra.mxu0 %v693
    %v759 = vpop.f32.mrf.mxu0
    %v760 = vadd.f32 0.0, %v759
    %v761 = vpop.f32.mrf.mxu0
    %v762 = vpop.f32.mrf.mxu0
    %v763 = vadd.f32 0.0, %v762
    %v764 = vpop.f32.mrf.mxu0
    %765 = vmatprep.mubr.bf16.mxu0 0
    %766 = vmatmul.mubr.bf16.gmra.mxu0 %v696
    %v767 = vpop.f32.mrf.mxu0
    %v768 = vadd.f32 0.0, %v767
    %v769 = vpop.f32.mrf.mxu0
    %v770 = vpop.f32.mrf.mxu0
    %v771 = vadd.f32 0.0, %v770
    %v772 = vpop.f32.mrf.mxu0
    %773 = vmatprep.mubr.bf16.mxu0 0
    %774 = vmatmul.mubr.bf16.gmra.mxu0 %v699
    %v775 = vpop.f32.mrf.mxu0
    %v776 = vadd.f32 0.0, %v775
    %v777 = vpop.f32.mrf.mxu0
    %v778 = vpop.f32.mrf.mxu0
    %v779 = vadd.f32 0.0, %v778
    %v780 = vpop.f32.mrf.mxu0
    %781 = vdwg.mxu0
    %v782 = vpack.c.bf16 %v739, %v736
    %v783 = vpack.c.bf16 %v747, %v744
    %v784 = vpack.c.bf16 %v755, %v752
    %v785 = vpack.c.bf16 %v763, %v760
    %v786 = vpack.c.bf16 %v771, %v768
    %v787 = vpack.c.bf16 %v779, %v776
    %s788 = scalar_lea.vmem %s3, 4
    %v789 = vld [vmem:[%s788] sm:$0x3]
    %v791 = vsel %vm434, %v782, 0
    %v794 = vsel %vm434, %v783, 0
    %v797 = vsel %vm434, %v784, 0
    %v800 = vsel %vm434, %v785, 0
    %v803 = vsel %vm434, %v786, 0
    %v806 = vsel %vm434, %v787, 0
    %v809 = vsel %vm453, %v789, 0
    %811 = vmatprep.subr.bf16.mxu0 0
    %812 = vmatpush1.bf16.msra.mxu0 0
    %813 = vmatprep.subr.bf16.mxu0 0
    %814 = vmatpush1.bf16.msra.mxu0 0
    %815 = vmatprep.subr.bf16.mxu0 0
    %816 = vmatpush1.bf16.msra.mxu0 0
    %817 = vmatprep.subr.bf16.mxu0 0
    %818 = vmatpush1.bf16.msra.mxu0 0
    %819 = vmatprep.subr.bf16.mxu0 0
    %820 = vmatpush1.bf16.msra.mxu0 0
    %821 = vmatprep.subr.bf16.mxu0 0
    %822 = vmatpush1.bf16.msra.mxu0 0
    %823 = vmatprep.subr.bf16.mxu0 0
    %824 = vmatpush1.bf16.msra.mxu0 0
    %825 = vmatprep.subr.bf16.mxu0 0
    %826 = vmatpush1.bf16.msra.mxu0 %v809
    %827 = vmatprep.subr.bf16.mxu0 0
    %828 = vmatpush2.bf16.msra.mxu0 0
    %829 = vmatprep.subr.bf16.mxu0 0
    %830 = vmatpush2.bf16.msra.mxu0 0
    %831 = vmatprep.subr.bf16.mxu0 0
    %832 = vmatpush2.bf16.msra.mxu0 0
    %833 = vmatprep.subr.bf16.mxu0 0
    %834 = vmatpush2.bf16.msra.mxu0 0
    %835 = vmatprep.subr.bf16.mxu0 0
    %836 = vmatpush2.bf16.msra.mxu0 0
    %837 = vmatprep.subr.bf16.mxu0 0
    %838 = vmatpush2.bf16.msra.mxu0 0
    %839 = vmatprep.subr.bf16.mxu0 0
    %840 = vmatpush2.bf16.msra.mxu0 0
    %841 = vmatprep.subr.bf16.mxu0 0
    %842 = vmatpush2.bf16.msra.mxu0 0
    %843 = vmatprep.mubr.bf16.mxu0 0
    %844 = vmatmul.mubr.bf16.gmra.mxu0 %v791
    %v845 = vpop.f32.mrf.mxu0
    %v846 = vadd.f32 0.0, %v845
    %v847 = vpop.f32.mrf.mxu0
    %v848 = vpop.f32.mrf.mxu0
    %v849 = vadd.f32 0.0, %v848
    %v850 = vpop.f32.mrf.mxu0
    %851 = vmatprep.mubr.bf16.mxu0 0
    %852 = vmatmul.mubr.bf16.gmra.mxu0 %v794
    %v853 = vpop.f32.mrf.mxu0
    %v854 = vadd.f32 0.0, %v853
    %v855 = vpop.f32.mrf.mxu0
    %v856 = vpop.f32.mrf.mxu0
    %v857 = vadd.f32 0.0, %v856
    %v858 = vpop.f32.mrf.mxu0
    %859 = vmatprep.mubr.bf16.mxu0 0
    %860 = vmatmul.mubr.bf16.gmra.mxu0 %v797
    %v861 = vpop.f32.mrf.mxu0
    %v862 = vadd.f32 0.0, %v861
    %v863 = vpop.f32.mrf.mxu0
    %v864 = vpop.f32.mrf.mxu0
    %v865 = vadd.f32 0.0, %v864
    %v866 = vpop.f32.mrf.mxu0
    %867 = vmatprep.mubr.bf16.mxu0 0
    %868 = vmatmul.mubr.bf16.gmra.mxu0 %v800
    %v869 = vpop.f32.mrf.mxu0
    %v870 = vadd.f32 0.0, %v869
    %v871 = vpop.f32.mrf.mxu0
    %v872 = vpop.f32.mrf.mxu0
    %v873 = vadd.f32 0.0, %v872
    %v874 = vpop.f32.mrf.mxu0
    %875 = vmatprep.mubr.bf16.mxu0 0
    %876 = vmatmul.mubr.bf16.gmra.mxu0 %v803
    %v877 = vpop.f32.mrf.mxu0
    %v878 = vadd.f32 0.0, %v877
    %v879 = vpop.f32.mrf.mxu0
    %v880 = vpop.f32.mrf.mxu0
    %v881 = vadd.f32 0.0, %v880
    %v882 = vpop.f32.mrf.mxu0
    %883 = vmatprep.mubr.bf16.mxu0 0
    %884 = vmatmul.mubr.bf16.gmra.mxu0 %v806
    %v885 = vpop.f32.mrf.mxu0
    %v886 = vadd.f32 0.0, %v885
    %v887 = vpop.f32.mrf.mxu0
    %v888 = vpop.f32.mrf.mxu0
    %v889 = vadd.f32 0.0, %v888
    %v890 = vpop.f32.mrf.mxu0
    %891 = vdwg.mxu0
    %v892 = vadd.f32 %v594, %v846
    %v893 = vadd.f32 %v597, %v849
    %v894 = vadd.f32 %v602, %v854
    %v895 = vadd.f32 %v605, %v857
    %v896 = vadd.f32 %v610, %v862
    %v897 = vadd.f32 %v613, %v865
    %v898 = vadd.f32 %v618, %v870
    %v899 = vadd.f32 %v621, %v873
    %v900 = vadd.f32 %v626, %v878
    %v901 = vadd.f32 %v629, %v881
    %v902 = vadd.f32 %v634, %v886
    %v903 = vadd.f32 %v637, %v889
    %v904 = vld [vmem:[%s1] sm:$0x1]
    %v906 = vlaneseq
    %v907 = vshrl.u32 %v906, 7
    %v908 = vsub.s32 0, %v907
    %v909 = vrot.slane %v904, %v908
    %v911 = vadd.f32 %v892, %v909
    %v912 = vadd.f32 %v893, %v909
    %v913 = vadd.f32 %v894, %v909
    %v914 = vadd.f32 %v895, %v909
    %v915 = vadd.f32 %v896, %v909
    %v916 = vadd.f32 %v897, %v909
    %v917 = vadd.f32 %v898, %v909
    %v918 = vadd.f32 %v899, %v909
    %v919 = vadd.f32 %v900, %v909
    %v920 = vadd.f32 %v901, %v909
    %v921 = vadd.f32 %v902, %v909
    %v922 = vadd.f32 %v903, %v909
    %vm923 = vcmp.ge.f32.partialorder %v911, 0.0
    %vm924 = vcmp.ge.f32.partialorder %v912, 0.0
    %vm925 = vcmp.ge.f32.partialorder %v913, 0.0
    %vm926 = vcmp.ge.f32.partialorder %v914, 0.0
    %vm927 = vcmp.ge.f32.partialorder %v915, 0.0
    %vm928 = vcmp.ge.f32.partialorder %v916, 0.0
    %vm929 = vcmp.ge.f32.partialorder %v917, 0.0
    %vm930 = vcmp.ge.f32.partialorder %v918, 0.0
    %vm931 = vcmp.ge.f32.partialorder %v919, 0.0
    %vm932 = vcmp.ge.f32.partialorder %v920, 0.0
    %vm933 = vcmp.ge.f32.partialorder %v921, 0.0
    %vm934 = vcmp.ge.f32.partialorder %v922, 0.0
    %v935 = vmul.f32 %v911, 0.1
    %v936 = vmul.f32 %v912, 0.1
    %v937 = vmul.f32 %v913, 0.1
    %v938 = vmul.f32 %v914, 0.1
    %v939 = vmul.f32 %v915, 0.1
    %v940 = vmul.f32 %v916, 0.1
    %v941 = vmul.f32 %v917, 0.1
    %v942 = vmul.f32 %v918, 0.1
    %v943 = vmul.f32 %v919, 0.1
    %v944 = vmul.f32 %v920, 0.1
    %v945 = vmul.f32 %v921, 0.1
    %v946 = vmul.f32 %v922, 0.1
    %v947 = vsel %vm923, %v911, %v935
    %v948 = vsel %vm924, %v912, %v936
    %v949 = vsel %vm925, %v913, %v937
    %v950 = vsel %vm926, %v914, %v938
    %v951 = vsel %vm927, %v915, %v939
    %v952 = vsel %vm928, %v916, %v940
    %v953 = vsel %vm929, %v917, %v941
    %v954 = vsel %vm930, %v918, %v942
    %v955 = vsel %vm931, %v919, %v943
    %v956 = vsel %vm932, %v920, %v944
    %v957 = vsel %vm933, %v921, %v945
    %v958 = vsel %vm934, %v922, %v946
    %959 = vst [vmem:[%s10] sm:$0xff] %v947
    %960 = vst [vmem:[%s10 + $0x8] sm:$0xff] %v948
    %961 = vst [vmem:[%s10 + $0x10] sm:$0xff] %v949
    %962 = vst [vmem:[%s10 + $0x18] sm:$0xff] %v950
    %963 = vst [vmem:[%s10 + $0x20] sm:$0xff] %v951
    %964 = vst [vmem:[%s10 + $0x28] sm:$0xff] %v952
    %965 = vst [vmem:[%s10 + $0x30] sm:$0xff] %v953
    %966 = vst [vmem:[%s10 + $0x38] sm:$0xff] %v954
    %967 = vst [vmem:[%s10 + $0x40] sm:$0xff] %v955
    %968 = vst [vmem:[%s10 + $0x48] sm:$0xff] %v956
    %969 = vst [vmem:[%s10 + $0x50] sm:$0xff] %v957
    %970 = vst [vmem:[%s10 + $0x58] sm:$0xff] %v958
    %v971 = vpack.c.bf16 %v948, %v947
    %v972 = vpack.c.bf16 %v950, %v949
    %v973 = vpack.c.bf16 %v952, %v951
    %v974 = vpack.c.bf16 %v954, %v953
    %v975 = vpack.c.bf16 %v956, %v955
    %v976 = vpack.c.bf16 %v958, %v957
    %v977 = vld [vmem:[%s4] sm:$0xf]
    %v978 = vld [vmem:[%s4 + $0x4] sm:$0xf]
    %v979 = vld [vmem:[%s4 + $0x8] sm:$0xf]
    %v980 = vld [vmem:[%s4 + $0xc] sm:$0xf]
    %v981 = vld [vmem:[%s4 + $0x10] sm:$0xf]
    %v987 = vunpack.c.l.b16 %v977
    %v988 = vunpack.c.l.b16 %v978
    %v989 = vunpack.c.l.b16 %v979
    %v990 = vunpack.c.l.b16 %v980
    %v991 = vunpack.c.l.b16 %v981
    %v992 = vpack.c.b16 %v988, %v987
    %v993 = vpack.c.b16 %v990, %v989
    %v994 = vpack.c.b16 %v991, %v991
    %vm995 = vcmask 785408
    %v997 = vsel %vm995, %v992, 0
    %v1000 = vsel %vm995, %v993, 0
    %v1003 = vsel %vm995, %v994, 0
    %1005 = vmatprep.subr.bf16.mxu0 0
    %1006 = vmatpush1.bf16.msra.mxu0 0
    %1007 = vmatprep.subr.bf16.mxu0 0
    %1008 = vmatpush1.bf16.msra.mxu0 0
    %1009 = vmatprep.subr.bf16.mxu0 0
    %1010 = vmatpush1.bf16.msra.mxu0 %v976
    %1011 = vmatprep.subr.bf16.mxu0 0
    %1012 = vmatpush1.bf16.msra.mxu0 %v975
    %1013 = vmatprep.subr.bf16.mxu0 0
    %1014 = vmatpush1.bf16.msra.mxu0 %v974
    %1015 = vmatprep.subr.bf16.mxu0 0
    %1016 = vmatpush1.bf16.msra.mxu0 %v973
    %1017 = vmatprep.subr.bf16.mxu0 0
    %1018 = vmatpush1.bf16.msra.mxu0 %v972
    %1019 = vmatprep.subr.bf16.mxu0 0
    %1020 = vmatpush1.bf16.msra.mxu0 %v971
    %1021 = vmatprep.subr.bf16.mxu0 0
    %1022 = vmatpush2.bf16.msra.mxu0 0
    %1023 = vmatprep.subr.bf16.mxu0 0
    %1024 = vmatpush2.bf16.msra.mxu0 0
    %1025 = vmatprep.subr.bf16.mxu0 0
    %1026 = vmatpush2.bf16.msra.mxu0 0
    %1027 = vmatprep.subr.bf16.mxu0 0
    %1028 = vmatpush2.bf16.msra.mxu0 0
    %1029 = vmatprep.subr.bf16.mxu0 0
    %1030 = vmatpush2.bf16.msra.mxu0 0
    %1031 = vmatprep.subr.bf16.mxu0 0
    %1032 = vmatpush2.bf16.msra.mxu0 0
    %1033 = vmatprep.subr.bf16.mxu0 0
    %1034 = vmatpush2.bf16.msra.mxu0 0
    %1035 = vmatprep.subr.bf16.mxu0 0
    %1036 = vmatpush2.bf16.msra.mxu0 0
    %1037 = vmatprep.mubr.bf16.mxu0 0
    %1038 = vmatmul.mubr.bf16.gmra.mxu0 %v997
    %v1039 = vpop.f32.mrf.mxu0
    %v1040 = vadd.f32 0.0, %v1039
    %v1041 = vpop.f32.mrf.mxu0
    %v1042 = vpop.f32.mrf.mxu0
    %v1043 = vadd.f32 0.0, %v1042
    %v1044 = vpop.f32.mrf.mxu0
    %1045 = vmatprep.mubr.bf16.mxu0 0
    %1046 = vmatmul.mubr.bf16.gmra.mxu0 %v1000
    %v1047 = vpop.f32.mrf.mxu0
    %v1048 = vadd.f32 0.0, %v1047
    %v1049 = vpop.f32.mrf.mxu0
    %v1050 = vpop.f32.mrf.mxu0
    %v1051 = vadd.f32 0.0, %v1050
    %v1052 = vpop.f32.mrf.mxu0
    %1053 = vmatprep.mubr.bf16.mxu0 0
    %1054 = vmatmul.mubr.bf16.gmra.mxu0 %v1003
    %v1055 = vpop.f32.mrf.mxu0
    %v1056 = vadd.f32 0.0, %v1055
    %v1057 = vpop.f32.mrf.mxu0
    %v1058 = vpop.f32.mrf.mxu0
    %v1059 = vpop.f32.mrf.mxu0
    %1060 = vdwg.mxu0
    %v1061 = vpack.c.bf16 %v1043, %v1040
    %v1062 = vpack.c.bf16 %v1051, %v1048
    %v1063 = vpack.c.bf16 %v1056, %v1056
    %v1064 = vld [vmem:[#allocation2] sm:$0xff]
    %v1065 = vld [vmem:[#allocation2 + $0x8] sm:$0xff]
    %v1066 = vld [vmem:[#allocation2 + $0x10] sm:$0xff]
    %v1067 = vld [vmem:[#allocation2 + $0x18] sm:$0xff]
    %v1068 = vld [vmem:[#allocation2 + $0x20] sm:$0xff]
    %v1069 = vld [vmem:[#allocation2 + $0x28] sm:$0xff]
    %v1070 = vld [vmem:[#allocation2 + $0x30] sm:$0xff]
    %v1071 = vld [vmem:[#allocation2 + $0x38] sm:$0xff]
    %v1072 = vld [vmem:[#allocation2 + $0x40] sm:$0xff]
    %v1073 = vld [vmem:[#allocation2 + $0x48] sm:$0xff]
    %v1074 = vld [vmem:[#allocation2 + $0x50] sm:$0xff]
    %v1075 = vld [vmem:[#allocation2 + $0x58] sm:$0xff]
    %v1076 = vld [vmem:[#allocation2 + $0x60] sm:$0xff]
    %v1077 = vld [vmem:[#allocation2 + $0x68] sm:$0xff]
    %v1078 = vld [vmem:[#allocation2 + $0x70] sm:$0xff]
    %v1079 = vld [vmem:[#allocation2 + $0x78] sm:$0xff]
    %s1080 = scalar_lea.vmem %s4, 20
    %v1081 = vld [vmem:[%s1080] sm:$0xf]
    %v1082 = vld [vmem:[%s1080 + $0x4] sm:$0xf]
    %v1083 = vld [vmem:[%s1080 + $0x8] sm:$0xf]
    %v1084 = vld [vmem:[%s1080 + $0xc] sm:$0xf]
    %v1085 = vld [vmem:[%s1080 + $0x10] sm:$0xf]
    %v1091 = vunpack.c.l.b16 %v1081
    %v1092 = vunpack.c.l.b16 %v1082
    %v1093 = vunpack.c.l.b16 %v1083
    %v1094 = vunpack.c.l.b16 %v1084
    %v1095 = vunpack.c.l.b16 %v1085
    %v1096 = vpack.c.b16 %v1092, %v1091
    %v1097 = vpack.c.b16 %v1094, %v1093
    %v1098 = vpack.c.b16 %v1095, %v1095
    %v1100 = vsel %vm995, %v1096, 0
    %v1103 = vsel %vm995, %v1097, 0
    %v1106 = vsel %vm995, %v1098, 0
    %1108 = vmatprep.subr.bf16.mxu0 0
    %1109 = vmatpush1.bf16.msra.mxu0 0
    %1110 = vmatprep.subr.bf16.mxu0 0
    %1111 = vmatpush1.bf16.msra.mxu0 0
    %1112 = vmatprep.subr.bf16.mxu0 0
    %1113 = vmatpush1.bf16.msra.mxu0 %v976
    %1114 = vmatprep.subr.bf16.mxu0 0
    %1115 = vmatpush1.bf16.msra.mxu0 %v975
    %1116 = vmatprep.subr.bf16.mxu0 0
    %1117 = vmatpush1.bf16.msra.mxu0 %v974
    %1118 = vmatprep.subr.bf16.mxu0 0
    %1119 = vmatpush1.bf16.msra.mxu0 %v973
    %1120 = vmatprep.subr.bf16.mxu0 0
    %1121 = vmatpush1.bf16.msra.mxu0 %v972
    %1122 = vmatprep.subr.bf16.mxu0 0
    %1123 = vmatpush1.bf16.msra.mxu0 %v971
    %1124 = vmatprep.subr.bf16.mxu0 0
    %1125 = vmatpush2.bf16.msra.mxu0 0
    %1126 = vmatprep.subr.bf16.mxu0 0
    %1127 = vmatpush2.bf16.msra.mxu0 0
    %1128 = vmatprep.subr.bf16.mxu0 0
    %1129 = vmatpush2.bf16.msra.mxu0 0
    %1130 = vmatprep.subr.bf16.mxu0 0
    %1131 = vmatpush2.bf16.msra.mxu0 0
    %1132 = vmatprep.subr.bf16.mxu0 0
    %1133 = vmatpush2.bf16.msra.mxu0 0
    %1134 = vmatprep.subr.bf16.mxu0 0
    %1135 = vmatpush2.bf16.msra.mxu0 0
    %1136 = vmatprep.subr.bf16.mxu0 0
    %1137 = vmatpush2.bf16.msra.mxu0 0
    %1138 = vmatprep.subr.bf16.mxu0 0
    %1139 = vmatpush2.bf16.msra.mxu0 0
    %1140 = vmatprep.mubr.bf16.mxu0 0
    %1141 = vmatmul.mubr.bf16.gmra.mxu0 %v1100
    %v1142 = vpop.f32.mrf.mxu0
    %v1143 = vadd.f32 0.0, %v1142
    %v1144 = vpop.f32.mrf.mxu0
    %v1145 = vpop.f32.mrf.mxu0
    %v1146 = vadd.f32 0.0, %v1145
    %v1147 = vpop.f32.mrf.mxu0
    %1148 = vmatprep.mubr.bf16.mxu0 0
    %1149 = vmatmul.mubr.bf16.gmra.mxu0 %v1103
    %v1150 = vpop.f32.mrf.mxu0
    %v1151 = vadd.f32 0.0, %v1150
    %v1152 = vpop.f32.mrf.mxu0
    %v1153 = vpop.f32.mrf.mxu0
    %v1154 = vadd.f32 0.0, %v1153
    %v1155 = vpop.f32.mrf.mxu0
    %1156 = vmatprep.mubr.bf16.mxu0 0
    %1157 = vmatmul.mubr.bf16.gmra.mxu0 %v1106
    %v1158 = vpop.f32.mrf.mxu0
    %v1159 = vadd.f32 0.0, %v1158
    %v1160 = vpop.f32.mrf.mxu0
    %v1161 = vpop.f32.mrf.mxu0
    %v1162 = vpop.f32.mrf.mxu0
    %1163 = vdwg.mxu0
    %v1164 = vpack.c.bf16 %v1146, %v1143
    %v1165 = vpack.c.bf16 %v1154, %v1151
    %v1166 = vpack.c.bf16 %v1159, %v1159
    %s1167 = scalar_lea.vmem [#allocation2], 128
    %v1168 = vld [vmem:[%s1167] sm:$0xff]
    %v1169 = vld [vmem:[%s1167 + $0x8] sm:$0xff]
    %v1170 = vld [vmem:[%s1167 + $0x10] sm:$0xff]
    %v1171 = vld [vmem:[%s1167 + $0x18] sm:$0xff]
    %v1172 = vld [vmem:[%s1167 + $0x20] sm:$0xff]
    %v1173 = vld [vmem:[%s1167 + $0x28] sm:$0xff]
    %v1174 = vld [vmem:[%s1167 + $0x30] sm:$0xff]
    %v1175 = vld [vmem:[%s1167 + $0x38] sm:$0xff]
    %v1176 = vld [vmem:[%s1167 + $0x40] sm:$0xff]
    %v1177 = vld [vmem:[%s1167 + $0x48] sm:$0xff]
    %v1178 = vld [vmem:[%s1167 + $0x50] sm:$0xff]
    %v1179 = vld [vmem:[%s1167 + $0x58] sm:$0xff]
    %v1180 = vld [vmem:[%s1167 + $0x60] sm:$0xff]
    %v1181 = vld [vmem:[%s1167 + $0x68] sm:$0xff]
    %v1182 = vld [vmem:[%s1167 + $0x70] sm:$0xff]
    %v1183 = vld [vmem:[%s1167 + $0x78] sm:$0xff]
    %v1200 = vunpack.c.l.b16 %v1168
    %v1201 = vunpack.c.h.b16 %v1168
    %v1202 = vunpack.c.l.b16 %v1169
    %v1203 = vunpack.c.h.b16 %v1169
    %v1204 = vunpack.c.l.b16 %v1170
    %v1205 = vunpack.c.h.b16 %v1170
    %v1206 = vunpack.c.l.b16 %v1171
    %v1207 = vunpack.c.h.b16 %v1171
    %v1208 = vunpack.c.l.b16 %v1172
    %v1209 = vunpack.c.h.b16 %v1172
    %v1210 = vunpack.c.l.b16 %v1173
    %v1211 = vunpack.c.h.b16 %v1173
    %v1212 = vunpack.c.l.b16 %v1174
    %v1213 = vunpack.c.h.b16 %v1174
    %v1214 = vunpack.c.l.b16 %v1175
    %v1215 = vunpack.c.h.b16 %v1175
    %v1216 = vunpack.c.l.b16 %v1176
    %v1217 = vunpack.c.h.b16 %v1176
    %v1218 = vunpack.c.l.b16 %v1177
    %v1219 = vunpack.c.h.b16 %v1177
    %v1220 = vunpack.c.l.b16 %v1178
    %v1221 = vunpack.c.h.b16 %v1178
    %v1222 = vunpack.c.l.b16 %v1179
    %v1223 = vunpack.c.h.b16 %v1179
    %v1224 = vunpack.c.l.b16 %v1180
    %v1225 = vunpack.c.h.b16 %v1180
    %v1226 = vunpack.c.l.b16 %v1181
    %v1227 = vunpack.c.h.b16 %v1181
    %v1228 = vunpack.c.l.b16 %v1182
    %v1229 = vunpack.c.h.b16 %v1182
    %v1230 = vunpack.c.l.b16 %v1183
    %v1231 = vunpack.c.h.b16 %v1183
    %v1232 = vpack.c.b16 %v1202, %v1200
    %v1233 = vpack.c.b16 %v1203, %v1201
    %v1234 = vpack.c.b16 %v1206, %v1204
    %v1235 = vpack.c.b16 %v1207, %v1205
    %v1236 = vpack.c.b16 %v1210, %v1208
    %v1237 = vpack.c.b16 %v1211, %v1209
    %v1238 = vpack.c.b16 %v1214, %v1212
    %v1239 = vpack.c.b16 %v1215, %v1213
    %v1240 = vpack.c.b16 %v1218, %v1216
    %v1241 = vpack.c.b16 %v1219, %v1217
    %v1242 = vpack.c.b16 %v1222, %v1220
    %v1243 = vpack.c.b16 %v1223, %v1221
    %v1244 = vpack.c.b16 %v1226, %v1224
    %v1245 = vpack.c.b16 %v1227, %v1225
    %v1246 = vpack.c.b16 %v1230, %v1228
    %v1247 = vpack.c.b16 %v1231, %v1229
    %1264 = vmatprep.subr.bf16.mxu0 %v1247
    %1265 = vmatpush1.bf16.msra.mxu0 %v1246
    %1266 = vmatprep.subr.bf16.mxu0 %v1245
    %1267 = vmatpush1.bf16.msra.mxu0 %v1244
    %1268 = vmatprep.subr.bf16.mxu0 %v1243
    %1269 = vmatpush1.bf16.msra.mxu0 %v1242
    %1270 = vmatprep.subr.bf16.mxu0 %v1241
    %1271 = vmatpush1.bf16.msra.mxu0 %v1240
    %1272 = vmatprep.subr.bf16.mxu0 %v1239
    %1273 = vmatpush1.bf16.msra.mxu0 %v1238
    %1274 = vmatprep.subr.bf16.mxu0 %v1237
    %1275 = vmatpush1.bf16.msra.mxu0 %v1236
    %1276 = vmatprep.subr.bf16.mxu0 %v1235
    %1277 = vmatpush1.bf16.msra.mxu0 %v1234
    %1278 = vmatprep.subr.bf16.mxu0 %v1233
    %1279 = vmatpush1.bf16.msra.mxu0 %v1232
    %1280 = vmatprep.subr.bf16.mxu0 0
    %1281 = vmatpush2.bf16.msra.mxu0 0
    %1282 = vmatprep.subr.bf16.mxu0 0
    %1283 = vmatpush2.bf16.msra.mxu0 0
    %1284 = vmatprep.subr.bf16.mxu0 0
    %1285 = vmatpush2.bf16.msra.mxu0 0
    %1286 = vmatprep.subr.bf16.mxu0 0
    %1287 = vmatpush2.bf16.msra.mxu0 0
    %1288 = vmatprep.subr.bf16.mxu0 0
    %1289 = vmatpush2.bf16.msra.mxu0 0
    %1290 = vmatprep.subr.bf16.mxu0 0
    %1291 = vmatpush2.bf16.msra.mxu0 0
    %1292 = vmatprep.subr.bf16.mxu0 0
    %1293 = vmatpush2.bf16.msra.mxu0 0
    %1294 = vmatprep.subr.bf16.mxu0 0
    %1295 = vmatpush2.bf16.msra.mxu0 0
    %1296 = vmatprep.mubr.bf16.mxu0 0
    %1297 = vmatmul.mubr.bf16.gmra.mxu0 %v1164
    %v1298 = vpop.f32.mrf.mxu0
    %v1299 = vadd.f32 0.0, %v1298
    %v1300 = vpop.f32.mrf.mxu0
    %v1301 = vadd.f32 0.0, %v1300
    %v1302 = vpop.f32.mrf.mxu0
    %v1303 = vadd.f32 0.0, %v1302
    %v1304 = vpop.f32.mrf.mxu0
    %v1305 = vadd.f32 0.0, %v1304
    %1306 = vmatprep.mubr.bf16.mxu0 0
    %1307 = vmatmul.mubr.bf16.gmra.mxu0 %v1165
    %v1308 = vpop.f32.mrf.mxu0
    %v1309 = vadd.f32 0.0, %v1308
    %v1310 = vpop.f32.mrf.mxu0
    %v1311 = vadd.f32 0.0, %v1310
    %v1312 = vpop.f32.mrf.mxu0
    %v1313 = vadd.f32 0.0, %v1312
    %v1314 = vpop.f32.mrf.mxu0
    %v1315 = vadd.f32 0.0, %v1314
    %1316 = vmatprep.mubr.bf16.mxu0 0
    %1317 = vmatmul.mubr.bf16.gmra.mxu0 %v1166
    %v1318 = vpop.f32.mrf.mxu0
    %v1319 = vadd.f32 0.0, %v1318
    %v1320 = vpop.f32.mrf.mxu0
    %v1321 = vadd.f32 0.0, %v1320
    %v1322 = vpop.f32.mrf.mxu0
    %v1323 = vpop.f32.mrf.mxu0
    %1324 = vdwg.mxu0
    %v1341 = vunpack.c.l.b16 %v1064
    %v1342 = vunpack.c.h.b16 %v1064
    %v1343 = vunpack.c.l.b16 %v1065
    %v1344 = vunpack.c.h.b16 %v1065
    %v1345 = vunpack.c.l.b16 %v1066
    %v1346 = vunpack.c.h.b16 %v1066
    %v1347 = vunpack.c.l.b16 %v1067
    %v1348 = vunpack.c.h.b16 %v1067
    %v1349 = vunpack.c.l.b16 %v1068
    %v1350 = vunpack.c.h.b16 %v1068
    %v1351 = vunpack.c.l.b16 %v1069
    %v1352 = vunpack.c.h.b16 %v1069
    %v1353 = vunpack.c.l.b16 %v1070
    %v1354 = vunpack.c.h.b16 %v1070
    %v1355 = vunpack.c.l.b16 %v1071
    %v1356 = vunpack.c.h.b16 %v1071
    %v1357 = vunpack.c.l.b16 %v1072
    %v1358 = vunpack.c.h.b16 %v1072
    %v1359 = vunpack.c.l.b16 %v1073
    %v1360 = vunpack.c.h.b16 %v1073
    %v1361 = vunpack.c.l.b16 %v1074
    %v1362 = vunpack.c.h.b16 %v1074
    %v1363 = vunpack.c.l.b16 %v1075
    %v1364 = vunpack.c.h.b16 %v1075
    %v1365 = vunpack.c.l.b16 %v1076
    %v1366 = vunpack.c.h.b16 %v1076
    %v1367 = vunpack.c.l.b16 %v1077
    %v1368 = vunpack.c.h.b16 %v1077
    %v1369 = vunpack.c.l.b16 %v1078
    %v1370 = vunpack.c.h.b16 %v1078
    %v1371 = vunpack.c.l.b16 %v1079
    %v1372 = vunpack.c.h.b16 %v1079
    %v1373 = vpack.c.b16 %v1343, %v1341
    %v1374 = vpack.c.b16 %v1344, %v1342
    %v1375 = vpack.c.b16 %v1347, %v1345
    %v1376 = vpack.c.b16 %v1348, %v1346
    %v1377 = vpack.c.b16 %v1351, %v1349
    %v1378 = vpack.c.b16 %v1352, %v1350
    %v1379 = vpack.c.b16 %v1355, %v1353
    %v1380 = vpack.c.b16 %v1356, %v1354
    %v1381 = vpack.c.b16 %v1359, %v1357
    %v1382 = vpack.c.b16 %v1360, %v1358
    %v1383 = vpack.c.b16 %v1363, %v1361
    %v1384 = vpack.c.b16 %v1364, %v1362
    %v1385 = vpack.c.b16 %v1367, %v1365
    %v1386 = vpack.c.b16 %v1368, %v1366
    %v1387 = vpack.c.b16 %v1371, %v1369
    %v1388 = vpack.c.b16 %v1372, %v1370
    %1405 = vmatprep.subr.bf16.mxu0 %v1388
    %1406 = vmatpush1.bf16.msra.mxu0 %v1387
    %1407 = vmatprep.subr.bf16.mxu0 %v1386
    %1408 = vmatpush1.bf16.msra.mxu0 %v1385
    %1409 = vmatprep.subr.bf16.mxu0 %v1384
    %1410 = vmatpush1.bf16.msra.mxu0 %v1383
    %1411 = vmatprep.subr.bf16.mxu0 %v1382
    %1412 = vmatpush1.bf16.msra.mxu0 %v1381
    %1413 = vmatprep.subr.bf16.mxu0 %v1380
    %1414 = vmatpush1.bf16.msra.mxu0 %v1379
    %1415 = vmatprep.subr.bf16.mxu0 %v1378
    %1416 = vmatpush1.bf16.msra.mxu0 %v1377
    %1417 = vmatprep.subr.bf16.mxu0 %v1376
    %1418 = vmatpush1.bf16.msra.mxu0 %v1375
    %1419 = vmatprep.subr.bf16.mxu0 %v1374
    %1420 = vmatpush1.bf16.msra.mxu0 %v1373
    %1421 = vmatprep.subr.bf16.mxu0 0
    %1422 = vmatpush2.bf16.msra.mxu0 0
    %1423 = vmatprep.subr.bf16.mxu0 0
    %1424 = vmatpush2.bf16.msra.mxu0 0
    %1425 = vmatprep.subr.bf16.mxu0 0
    %1426 = vmatpush2.bf16.msra.mxu0 0
    %1427 = vmatprep.subr.bf16.mxu0 0
    %1428 = vmatpush2.bf16.msra.mxu0 0
    %1429 = vmatprep.subr.bf16.mxu0 0
    %1430 = vmatpush2.bf16.msra.mxu0 0
    %1431 = vmatprep.subr.bf16.mxu0 0
    %1432 = vmatpush2.bf16.msra.mxu0 0
    %1433 = vmatprep.subr.bf16.mxu0 0
    %1434 = vmatpush2.bf16.msra.mxu0 0
    %1435 = vmatprep.subr.bf16.mxu0 0
    %1436 = vmatpush2.bf16.msra.mxu0 0
    %1437 = vmatprep.mubr.bf16.mxu0 0
    %1438 = vmatmul.mubr.bf16.gmra.mxu0 %v1061
    %v1439 = vpop.f32.mrf.mxu0
    %v1440 = vadd.f32 %v1299, %v1439
    %v1441 = vpop.f32.mrf.mxu0
    %v1442 = vadd.f32 %v1301, %v1441
    %v1443 = vpop.f32.mrf.mxu0
    %v1444 = vadd.f32 %v1303, %v1443
    %v1445 = vpop.f32.mrf.mxu0
    %v1446 = vadd.f32 %v1305, %v1445
    %1447 = vmatprep.mubr.bf16.mxu0 0
    %1448 = vmatmul.mubr.bf16.gmra.mxu0 %v1062
    %v1449 = vpop.f32.mrf.mxu0
    %v1450 = vadd.f32 %v1309, %v1449
    %v1451 = vpop.f32.mrf.mxu0
    %v1452 = vadd.f32 %v1311, %v1451
    %v1453 = vpop.f32.mrf.mxu0
    %v1454 = vadd.f32 %v1313, %v1453
    %v1455 = vpop.f32.mrf.mxu0
    %v1456 = vadd.f32 %v1315, %v1455
    %1457 = vmatprep.mubr.bf16.mxu0 0
    %1458 = vmatmul.mubr.bf16.gmra.mxu0 %v1063
    %v1459 = vpop.f32.mrf.mxu0
    %v1460 = vadd.f32 %v1319, %v1459
    %v1461 = vpop.f32.mrf.mxu0
    %v1462 = vadd.f32 %v1321, %v1461
    %v1463 = vpop.f32.mrf.mxu0
    %v1464 = vpop.f32.mrf.mxu0
    %1465 = vdwg.mxu0
    %s1466 = scalar_lea.vmem %s4, 40
    %v1467 = vld [vmem:[%s1466] sm:$0xf]
    %v1468 = vld [vmem:[%s1466 + $0x4] sm:$0xf]
    %v1469 = vld [vmem:[%s1466 + $0x8] sm:$0xf]
    %v1470 = vld [vmem:[%s1466 + $0xc] sm:$0xf]
    %v1471 = vld [vmem:[%s1466 + $0x10] sm:$0xf]
    %v1477 = vunpack.c.l.b16 %v1467
    %v1478 = vunpack.c.l.b16 %v1468
    %v1479 = vunpack.c.l.b16 %v1469
    %v1480 = vunpack.c.l.b16 %v1470
    %v1481 = vunpack.c.l.b16 %v1471
    %v1482 = vpack.c.b16 %v1478, %v1477
    %v1483 = vpack.c.b16 %v1480, %v1479
    %v1484 = vpack.c.b16 %v1481, %v1481
    %v1486 = vsel %vm995, %v1482, 0
    %v1489 = vsel %vm995, %v1483, 0
    %v1492 = vsel %vm995, %v1484, 0
    %1494 = vmatprep.subr.bf16.mxu0 0
    %1495 = vmatpush1.bf16.msra.mxu0 0
    %1496 = vmatprep.subr.bf16.mxu0 0
    %1497 = vmatpush1.bf16.msra.mxu0 0
    %1498 = vmatprep.subr.bf16.mxu0 0
    %1499 = vmatpush1.bf16.msra.mxu0 %v976
    %1500 = vmatprep.subr.bf16.mxu0 0
    %1501 = vmatpush1.bf16.msra.mxu0 %v975
    %1502 = vmatprep.subr.bf16.mxu0 0
    %1503 = vmatpush1.bf16.msra.mxu0 %v974
    %1504 = vmatprep.subr.bf16.mxu0 0
    %1505 = vmatpush1.bf16.msra.mxu0 %v973
    %1506 = vmatprep.subr.bf16.mxu0 0
    %1507 = vmatpush1.bf16.msra.mxu0 %v972
    %1508 = vmatprep.subr.bf16.mxu0 0
    %1509 = vmatpush1.bf16.msra.mxu0 %v971
    %1510 = vmatprep.subr.bf16.mxu0 0
    %1511 = vmatpush2.bf16.msra.mxu0 0
    %1512 = vmatprep.subr.bf16.mxu0 0
    %1513 = vmatpush2.bf16.msra.mxu0 0
    %1514 = vmatprep.subr.bf16.mxu0 0
    %1515 = vmatpush2.bf16.msra.mxu0 0
    %1516 = vmatprep.subr.bf16.mxu0 0
    %1517 = vmatpush2.bf16.msra.mxu0 0
    %1518 = vmatprep.subr.bf16.mxu0 0
    %1519 = vmatpush2.bf16.msra.mxu0 0
    %1520 = vmatprep.subr.bf16.mxu0 0
    %1521 = vmatpush2.bf16.msra.mxu0 0
    %1522 = vmatprep.subr.bf16.mxu0 0
    %1523 = vmatpush2.bf16.msra.mxu0 0
    %1524 = vmatprep.subr.bf16.mxu0 0
    %1525 = vmatpush2.bf16.msra.mxu0 0
    %1526 = vmatprep.mubr.bf16.mxu0 0
    %1527 = vmatmul.mubr.bf16.gmra.mxu0 %v1486
    %v1528 = vpop.f32.mrf.mxu0
    %v1529 = vadd.f32 0.0, %v1528
    %v1530 = vpop.f32.mrf.mxu0
    %v1531 = vpop.f32.mrf.mxu0
    %v1532 = vadd.f32 0.0, %v1531
    %v1533 = vpop.f32.mrf.mxu0
    %1534 = vmatprep.mubr.bf16.mxu0 0
    %1535 = vmatmul.mubr.bf16.gmra.mxu0 %v1489
    %v1536 = vpop.f32.mrf.mxu0
    %v1537 = vadd.f32 0.0, %v1536
    %v1538 = vpop.f32.mrf.mxu0
    %v1539 = vpop.f32.mrf.mxu0
    %v1540 = vadd.f32 0.0, %v1539
    %v1541 = vpop.f32.mrf.mxu0
    %1542 = vmatprep.mubr.bf16.mxu0 0
    %1543 = vmatmul.mubr.bf16.gmra.mxu0 %v1492
    %v1544 = vpop.f32.mrf.mxu0
    %v1545 = vadd.f32 0.0, %v1544
    %v1546 = vpop.f32.mrf.mxu0
    %v1547 = vpop.f32.mrf.mxu0
    %v1548 = vpop.f32.mrf.mxu0
    %1549 = vdwg.mxu0
    %v1550 = vpack.c.bf16 %v1532, %v1529
    %v1551 = vpack.c.bf16 %v1540, %v1537
    %v1552 = vpack.c.bf16 %v1545, %v1545
    %s1553 = scalar_lea.vmem [#allocation2], 256
    %v1554 = vld [vmem:[%s1553] sm:$0xff]
    %v1555 = vld [vmem:[%s1553 + $0x8] sm:$0xff]
    %v1556 = vld [vmem:[%s1553 + $0x10] sm:$0xff]
    %v1557 = vld [vmem:[%s1553 + $0x18] sm:$0xff]
    %v1558 = vld [vmem:[%s1553 + $0x20] sm:$0xff]
    %v1559 = vld [vmem:[%s1553 + $0x28] sm:$0xff]
    %v1560 = vld [vmem:[%s1553 + $0x30] sm:$0xff]
    %v1561 = vld [vmem:[%s1553 + $0x38] sm:$0xff]
    %v1562 = vld [vmem:[%s1553 + $0x40] sm:$0xff]
    %v1563 = vld [vmem:[%s1553 + $0x48] sm:$0xff]
    %v1564 = vld [vmem:[%s1553 + $0x50] sm:$0xff]
    %v1565 = vld [vmem:[%s1553 + $0x58] sm:$0xff]
    %v1566 = vld [vmem:[%s1553 + $0x60] sm:$0xff]
    %v1567 = vld [vmem:[%s1553 + $0x68] sm:$0xff]
    %v1568 = vld [vmem:[%s1553 + $0x70] sm:$0xff]
    %v1569 = vld [vmem:[%s1553 + $0x78] sm:$0xff]
    %v1586 = vunpack.c.l.b16 %v1554
    %v1587 = vunpack.c.h.b16 %v1554
    %v1588 = vunpack.c.l.b16 %v1555
    %v1589 = vunpack.c.h.b16 %v1555
    %v1590 = vunpack.c.l.b16 %v1556
    %v1591 = vunpack.c.h.b16 %v1556
    %v1592 = vunpack.c.l.b16 %v1557
    %v1593 = vunpack.c.h.b16 %v1557
    %v1594 = vunpack.c.l.b16 %v1558
    %v1595 = vunpack.c.h.b16 %v1558
    %v1596 = vunpack.c.l.b16 %v1559
    %v1597 = vunpack.c.h.b16 %v1559
    %v1598 = vunpack.c.l.b16 %v1560
    %v1599 = vunpack.c.h.b16 %v1560
    %v1600 = vunpack.c.l.b16 %v1561
    %v1601 = vunpack.c.h.b16 %v1561
    %v1602 = vunpack.c.l.b16 %v1562
    %v1603 = vunpack.c.h.b16 %v1562
    %v1604 = vunpack.c.l.b16 %v1563
    %v1605 = vunpack.c.h.b16 %v1563
    %v1606 = vunpack.c.l.b16 %v1564
    %v1607 = vunpack.c.h.b16 %v1564
    %v1608 = vunpack.c.l.b16 %v1565
    %v1609 = vunpack.c.h.b16 %v1565
    %v1610 = vunpack.c.l.b16 %v1566
    %v1611 = vunpack.c.h.b16 %v1566
    %v1612 = vunpack.c.l.b16 %v1567
    %v1613 = vunpack.c.h.b16 %v1567
    %v1614 = vunpack.c.l.b16 %v1568
    %v1615 = vunpack.c.h.b16 %v1568
    %v1616 = vunpack.c.l.b16 %v1569
    %v1617 = vunpack.c.h.b16 %v1569
    %v1618 = vpack.c.b16 %v1588, %v1586
    %v1619 = vpack.c.b16 %v1589, %v1587
    %v1620 = vpack.c.b16 %v1592, %v1590
    %v1621 = vpack.c.b16 %v1593, %v1591
    %v1622 = vpack.c.b16 %v1596, %v1594
    %v1623 = vpack.c.b16 %v1597, %v1595
    %v1624 = vpack.c.b16 %v1600, %v1598
    %v1625 = vpack.c.b16 %v1601, %v1599
    %v1626 = vpack.c.b16 %v1604, %v1602
    %v1627 = vpack.c.b16 %v1605, %v1603
    %v1628 = vpack.c.b16 %v1608, %v1606
    %v1629 = vpack.c.b16 %v1609, %v1607
    %v1630 = vpack.c.b16 %v1612, %v1610
    %v1631 = vpack.c.b16 %v1613, %v1611
    %v1632 = vpack.c.b16 %v1616, %v1614
    %v1633 = vpack.c.b16 %v1617, %v1615
    %1650 = vmatprep.subr.bf16.mxu0 %v1633
    %1651 = vmatpush1.bf16.msra.mxu0 %v1632
    %1652 = vmatprep.subr.bf16.mxu0 %v1631
    %1653 = vmatpush1.bf16.msra.mxu0 %v1630
    %1654 = vmatprep.subr.bf16.mxu0 %v1629
    %1655 = vmatpush1.bf16.msra.mxu0 %v1628
    %1656 = vmatprep.subr.bf16.mxu0 %v1627
    %1657 = vmatpush1.bf16.msra.mxu0 %v1626
    %1658 = vmatprep.subr.bf16.mxu0 %v1625
    %1659 = vmatpush1.bf16.msra.mxu0 %v1624
    %1660 = vmatprep.subr.bf16.mxu0 %v1623
    %1661 = vmatpush1.bf16.msra.mxu0 %v1622
    %1662 = vmatprep.subr.bf16.mxu0 %v1621
    %1663 = vmatpush1.bf16.msra.mxu0 %v1620
    %1664 = vmatprep.subr.bf16.mxu0 %v1619
    %1665 = vmatpush1.bf16.msra.mxu0 %v1618
    %1666 = vmatprep.subr.bf16.mxu0 0
    %1667 = vmatpush2.bf16.msra.mxu0 0
    %1668 = vmatprep.subr.bf16.mxu0 0
    %1669 = vmatpush2.bf16.msra.mxu0 0
    %1670 = vmatprep.subr.bf16.mxu0 0
    %1671 = vmatpush2.bf16.msra.mxu0 0
    %1672 = vmatprep.subr.bf16.mxu0 0
    %1673 = vmatpush2.bf16.msra.mxu0 0
    %1674 = vmatprep.subr.bf16.mxu0 0
    %1675 = vmatpush2.bf16.msra.mxu0 0
    %1676 = vmatprep.subr.bf16.mxu0 0
    %1677 = vmatpush2.bf16.msra.mxu0 0
    %1678 = vmatprep.subr.bf16.mxu0 0
    %1679 = vmatpush2.bf16.msra.mxu0 0
    %1680 = vmatprep.subr.bf16.mxu0 0
    %1681 = vmatpush2.bf16.msra.mxu0 0
    %1682 = vmatprep.mubr.bf16.mxu0 0
    %1683 = vmatmul.mubr.bf16.gmra.mxu0 %v1550
    %v1684 = vpop.f32.mrf.mxu0
    %v1685 = vadd.f32 0.0, %v1684
    %v1686 = vpop.f32.mrf.mxu0
    %v1687 = vadd.f32 0.0, %v1686
    %v1688 = vpop.f32.mrf.mxu0
    %v1689 = vadd.f32 0.0, %v1688
    %v1690 = vpop.f32.mrf.mxu0
    %v1691 = vadd.f32 0.0, %v1690
    %1692 = vmatprep.mubr.bf16.mxu0 0
    %1693 = vmatmul.mubr.bf16.gmra.mxu0 %v1551
    %v1694 = vpop.f32.mrf.mxu0
    %v1695 = vadd.f32 0.0, %v1694
    %v1696 = vpop.f32.mrf.mxu0
    %v1697 = vadd.f32 0.0, %v1696
    %v1698 = vpop.f32.mrf.mxu0
    %v1699 = vadd.f32 0.0, %v1698
    %v1700 = vpop.f32.mrf.mxu0
    %v1701 = vadd.f32 0.0, %v1700
    %1702 = vmatprep.mubr.bf16.mxu0 0
    %1703 = vmatmul.mubr.bf16.gmra.mxu0 %v1552
    %v1704 = vpop.f32.mrf.mxu0
    %v1705 = vadd.f32 0.0, %v1704
    %v1706 = vpop.f32.mrf.mxu0
    %v1707 = vadd.f32 0.0, %v1706
    %v1708 = vpop.f32.mrf.mxu0
    %v1709 = vpop.f32.mrf.mxu0
    %1710 = vdwg.mxu0
    %v1711 = vadd.f32 %v1440, %v1685
    %v1712 = vadd.f32 %v1442, %v1687
    %v1713 = vadd.f32 %v1444, %v1689
    %v1714 = vadd.f32 %v1446, %v1691
    %v1715 = vadd.f32 %v1450, %v1695
    %v1716 = vadd.f32 %v1452, %v1697
    %v1717 = vadd.f32 %v1454, %v1699
    %v1718 = vadd.f32 %v1456, %v1701
    %v1719 = vadd.f32 %v1460, %v1705
    %v1720 = vadd.f32 %v1462, %v1707
    %v1721 = vld [vmem:[%s1 + $0x1] sm:$0x3]
    %v1723 = vlaneseq
    %v1724 = vshrl.u32 %v1723, 7
    %v1725 = vsub.s32 0, %v1724
    %v1726 = vrot.slane %v1721, %v1725
    %v1727 = vlaneseq
    %v1728 = vshrl.u32 %v1727, 7
    %v1729 = vsub.s32 1, %v1728
    %v1730 = vrot.slane %v1721, %v1729
    %v1733 = vadd.f32 %v1711, %v1726
    %v1734 = vadd.f32 %v1712, %v1730
    %v1735 = vadd.f32 %v1713, %v1726
    %v1736 = vadd.f32 %v1714, %v1730
    %v1737 = vadd.f32 %v1715, %v1726
    %v1738 = vadd.f32 %v1716, %v1730
    %v1739 = vadd.f32 %v1717, %v1726
    %v1740 = vadd.f32 %v1718, %v1730
    %v1741 = vadd.f32 %v1719, %v1726
    %v1742 = vadd.f32 %v1720, %v1730
    %vm1743 = vcmp.ge.f32.partialorder %v1733, 0.0
    %vm1744 = vcmp.ge.f32.partialorder %v1734, 0.0
    %vm1745 = vcmp.ge.f32.partialorder %v1735, 0.0
    %vm1746 = vcmp.ge.f32.partialorder %v1736, 0.0
    %vm1747 = vcmp.ge.f32.partialorder %v1737, 0.0
    %vm1748 = vcmp.ge.f32.partialorder %v1738, 0.0
    %vm1749 = vcmp.ge.f32.partialorder %v1739, 0.0
    %vm1750 = vcmp.ge.f32.partialorder %v1740, 0.0
    %vm1751 = vcmp.ge.f32.partialorder %v1741, 0.0
    %vm1752 = vcmp.ge.f32.partialorder %v1742, 0.0
    %v1753 = vmul.f32 %v1733, 0.1
    %v1754 = vmul.f32 %v1734, 0.1
    %v1755 = vmul.f32 %v1735, 0.1
    %v1756 = vmul.f32 %v1736, 0.1
    %v1757 = vmul.f32 %v1737, 0.1
    %v1758 = vmul.f32 %v1738, 0.1
    %v1759 = vmul.f32 %v1739, 0.1
    %v1760 = vmul.f32 %v1740, 0.1
    %v1761 = vmul.f32 %v1741, 0.1
    %v1762 = vmul.f32 %v1742, 0.1
    %v1763 = vsel %vm1743, %v1733, %v1753
    %v1764 = vsel %vm1744, %v1734, %v1754
    %v1765 = vsel %vm1745, %v1735, %v1755
    %v1766 = vsel %vm1746, %v1736, %v1756
    %v1767 = vsel %vm1747, %v1737, %v1757
    %v1768 = vsel %vm1748, %v1738, %v1758
    %v1769 = vsel %vm1749, %v1739, %v1759
    %v1770 = vsel %vm1750, %v1740, %v1760
    %v1771 = vsel %vm1751, %v1741, %v1761
    %v1772 = vsel %vm1752, %v1742, %v1762
    %1773 = vst [vmem:[%s11] sm:$0xff] %v1763
    %1774 = vst [vmem:[%s11 + $0x8] sm:$0xff] %v1764
    %1775 = vst [vmem:[%s11 + $0x10] sm:$0xff] %v1765
    %1776 = vst [vmem:[%s11 + $0x18] sm:$0xff] %v1766
    %1777 = vst [vmem:[%s11 + $0x20] sm:$0xff] %v1767
    %1778 = vst [vmem:[%s11 + $0x28] sm:$0xff] %v1768
    %1779 = vst [vmem:[%s11 + $0x30] sm:$0xff] %v1769
    %1780 = vst [vmem:[%s11 + $0x38] sm:$0xff] %v1770
    %1781 = vst [vmem:[%s11 + $0x40] sm:$0xff] %v1771
    %1782 = vst [vmem:[%s11 + $0x48] sm:$0xff] %v1772
    %v1783 = vpack.c.bf16 %v1765, %v1763
    %v1784 = vpack.c.bf16 %v1766, %v1764
    %v1785 = vpack.c.bf16 %v1769, %v1767
    %v1786 = vpack.c.bf16 %v1770, %v1768
    %v1787 = vpack.c.bf16 %v1771, %v1771
    %v1788 = vpack.c.bf16 %v1772, %v1772
    %v1789 = vld [vmem:[#allocation4] sm:$0xf]
    %v1790 = vld [vmem:[#allocation4 + $0x4] sm:$0xf]
    %v1791 = vld [vmem:[#allocation4 + $0x8] sm:$0xf]
    %v1795 = vunpack.c.l.b16 %v1789
    %v1796 = vunpack.c.l.b16 %v1790
    %v1797 = vunpack.c.l.b16 %v1791
    %v1798 = vpack.c.b16 %v1796, %v1795
    %v1799 = vpack.c.b16 %v1797, %v1797
    %vm1800 = vcmask 326656
    %v1802 = vsel %vm1800, %v1798, 0
    %v1805 = vsel %vm1800, %v1799, 0
    %vm1807 = vcmask 1043456
    %v1809 = vsel %vm1807, %v1787, 0
    %v1812 = vsel %vm1807, %v1788, 0
    %1814 = vmatprep.subr.bf16.mxu0 0
    %1815 = vmatpush1.bf16.msra.mxu0 0
    %1816 = vmatprep.subr.bf16.mxu0 0
    %1817 = vmatpush1.bf16.msra.mxu0 0
    %1818 = vmatprep.subr.bf16.mxu0 0
    %1819 = vmatpush1.bf16.msra.mxu0 0
    %1820 = vmatprep.subr.bf16.mxu0 0
    %1821 = vmatpush1.bf16.msra.mxu0 0
    %1822 = vmatprep.subr.bf16.mxu0 0
    %1823 = vmatpush1.bf16.msra.mxu0 0
    %1824 = vmatprep.subr.bf16.mxu0 %v1812
    %1825 = vmatpush1.bf16.msra.mxu0 %v1809
    %1826 = vmatprep.subr.bf16.mxu0 %v1786
    %1827 = vmatpush1.bf16.msra.mxu0 %v1785
    %1828 = vmatprep.subr.bf16.mxu0 %v1784
    %1829 = vmatpush1.bf16.msra.mxu0 %v1783
    %1830 = vmatprep.subr.bf16.mxu0 0
    %1831 = vmatpush2.bf16.msra.mxu0 0
    %1832 = vmatprep.subr.bf16.mxu0 0
    %1833 = vmatpush2.bf16.msra.mxu0 0
    %1834 = vmatprep.subr.bf16.mxu0 0
    %1835 = vmatpush2.bf16.msra.mxu0 0
    %1836 = vmatprep.subr.bf16.mxu0 0
    %1837 = vmatpush2.bf16.msra.mxu0 0
    %1838 = vmatprep.subr.bf16.mxu0 0
    %1839 = vmatpush2.bf16.msra.mxu0 0
    %1840 = vmatprep.subr.bf16.mxu0 0
    %1841 = vmatpush2.bf16.msra.mxu0 0
    %1842 = vmatprep.subr.bf16.mxu0 0
    %1843 = vmatpush2.bf16.msra.mxu0 0
    %1844 = vmatprep.subr.bf16.mxu0 0
    %1845 = vmatpush2.bf16.msra.mxu0 0
    %1846 = vmatprep.mubr.bf16.mxu0 0
    %1847 = vmatmul.mubr.bf16.gmra.mxu0 %v1802
    %v1848 = vpop.f32.mrf.mxu0
    %v1849 = vadd.f32 0.0, %v1848
    %v1850 = vpop.f32.mrf.mxu0
    %v1851 = vadd.f32 0.0, %v1850
    %v1852 = vpop.f32.mrf.mxu0
    %v1853 = vadd.f32 0.0, %v1852
    %v1854 = vpop.f32.mrf.mxu0
    %v1855 = vadd.f32 0.0, %v1854
    %1856 = vmatprep.mubr.bf16.mxu0 0
    %1857 = vmatmul.mubr.bf16.gmra.mxu0 %v1805
    %v1858 = vpop.f32.mrf.mxu0
    %v1859 = vadd.f32 0.0, %v1858
    %v1860 = vpop.f32.mrf.mxu0
    %v1861 = vadd.f32 0.0, %v1860
    %v1862 = vpop.f32.mrf.mxu0
    %v1863 = vpop.f32.mrf.mxu0
    %1864 = vdwg.mxu0
    %v1865 = vpack.c.bf16 %v1853, %v1849
    %v1866 = vpack.c.bf16 %v1855, %v1851
    %v1867 = vpack.c.bf16 %v1859, %v1859
    %v1868 = vpack.c.bf16 %v1861, %v1861
    %v1869 = vld [vmem:[#allocation6] sm:$0xff]
    %v1870 = vld [vmem:[#allocation6 + $0x8] sm:$0xff]
    %v1871 = vld [vmem:[#allocation6 + $0x10] sm:$0xff]
    %v1872 = vld [vmem:[#allocation6 + $0x18] sm:$0xff]
    %v1873 = vld [vmem:[#allocation6 + $0x20] sm:$0xff]
    %v1874 = vld [vmem:[#allocation6 + $0x28] sm:$0xff]
    %v1875 = vld [vmem:[#allocation6 + $0x30] sm:$0xff]
    %v1876 = vld [vmem:[#allocation6 + $0x38] sm:$0xff]
    %v1877 = vld [vmem:[#allocation6 + $0x40] sm:$0xff]
    %v1878 = vld [vmem:[#allocation6 + $0x48] sm:$0xff]
    %v1879 = vld [vmem:[#allocation6 + $0x50] sm:$0xff]
    %v1880 = vld [vmem:[#allocation6 + $0x58] sm:$0xff]
    %v1881 = vld [vmem:[#allocation6 + $0x60] sm:$0xff]
    %v1882 = vld [vmem:[#allocation6 + $0x68] sm:$0xff]
    %v1883 = vld [vmem:[#allocation6 + $0x70] sm:$0xff]
    %v1884 = vld [vmem:[#allocation6 + $0x78] sm:$0xff]
    %v1885 = vld [vmem:[#allocation6 + $0x80] sm:$0xff]
    %v1886 = vld [vmem:[#allocation6 + $0x88] sm:$0xff]
    %v1887 = vld [vmem:[#allocation6 + $0x90] sm:$0xff]
    %v1888 = vld [vmem:[#allocation6 + $0x98] sm:$0xff]
    %v1889 = vld [vmem:[#allocation6 + $0xa0] sm:$0xff]
    %v1890 = vld [vmem:[#allocation6 + $0xa8] sm:$0xff]
    %v1891 = vld [vmem:[#allocation6 + $0xb0] sm:$0xff]
    %v1892 = vld [vmem:[#allocation6 + $0xb8] sm:$0xff]
    %v1893 = vld [vmem:[#allocation6 + $0xc0] sm:$0xff]
    %v1894 = vld [vmem:[#allocation6 + $0xc8] sm:$0xff]
    %v1895 = vld [vmem:[#allocation6 + $0xd0] sm:$0xff]
    %v1896 = vld [vmem:[#allocation6 + $0xd8] sm:$0xff]
    %v1897 = vld [vmem:[#allocation6 + $0xe0] sm:$0xff]
    %v1898 = vld [vmem:[#allocation6 + $0xe8] sm:$0xff]
    %v1899 = vld [vmem:[#allocation6 + $0xf0] sm:$0xff]
    %v1900 = vld [vmem:[#allocation6 + $0xf8] sm:$0xff]
    %v1901 = vld [vmem:[#allocation6 + $0x100] sm:$0xff]
    %v1902 = vld [vmem:[#allocation6 + $0x108] sm:$0xff]
    %v1903 = vld [vmem:[#allocation6 + $0x110] sm:$0xff]
    %v1904 = vld [vmem:[#allocation6 + $0x118] sm:$0xff]
    %v1905 = vld [vmem:[#allocation6 + $0x120] sm:$0xff]
    %v1906 = vld [vmem:[#allocation6 + $0x128] sm:$0xff]
    %v1907 = vld [vmem:[#allocation6 + $0x130] sm:$0xff]
    %v1908 = vld [vmem:[#allocation6 + $0x138] sm:$0xff]
    %v1909 = vld [vmem:[#allocation6 + $0x140] sm:$0xff]
    %v1910 = vld [vmem:[#allocation6 + $0x148] sm:$0xff]
    %v1911 = vld [vmem:[#allocation6 + $0x150] sm:$0xff]
    %v1912 = vld [vmem:[#allocation6 + $0x158] sm:$0xff]
    %v1913 = vld [vmem:[#allocation6 + $0x160] sm:$0xff]
    %v1914 = vld [vmem:[#allocation6 + $0x168] sm:$0xff]
    %v1915 = vld [vmem:[#allocation6 + $0x170] sm:$0xff]
    %v1916 = vld [vmem:[#allocation6 + $0x178] sm:$0xff]
    %v1917 = vld [vmem:[#allocation6 + $0x180] sm:$0xff]
    %v1918 = vld [vmem:[#allocation6 + $0x188] sm:$0xff]
    %v1919 = vld [vmem:[#allocation6 + $0x190] sm:$0xff]
    %v1920 = vld [vmem:[#allocation6 + $0x198] sm:$0xff]
    %v1921 = vld [vmem:[#allocation6 + $0x1a0] sm:$0xff]
    %v1922 = vld [vmem:[#allocation6 + $0x1a8] sm:$0xff]
    %v1923 = vld [vmem:[#allocation6 + $0x1b0] sm:$0xff]
    %v1924 = vld [vmem:[#allocation6 + $0x1b8] sm:$0xff]
    %v1925 = vld [vmem:[#allocation6 + $0x1c0] sm:$0xff]
    %v1926 = vld [vmem:[#allocation6 + $0x1c8] sm:$0xff]
    %v1927 = vld [vmem:[#allocation6 + $0x1d0] sm:$0xff]
    %v1928 = vld [vmem:[#allocation6 + $0x1d8] sm:$0xff]
    %v1929 = vld [vmem:[#allocation6 + $0x1e0] sm:$0xff]
    %v1930 = vld [vmem:[#allocation6 + $0x1e8] sm:$0xff]
    %v1931 = vld [vmem:[#allocation6 + $0x1f0] sm:$0xff]
    %v1932 = vld [vmem:[#allocation6 + $0x1f8] sm:$0xff]
    %s1933 = scalar_lea.vmem [#allocation4], 12
    %v1934 = vld [vmem:[%s1933] sm:$0xf]
    %v1935 = vld [vmem:[%s1933 + $0x4] sm:$0xf]
    %v1936 = vld [vmem:[%s1933 + $0x8] sm:$0xf]
    %v1940 = vunpack.c.l.b16 %v1934
    %v1941 = vunpack.c.l.b16 %v1935
    %v1942 = vunpack.c.l.b16 %v1936
    %v1943 = vpack.c.b16 %v1941, %v1940
    %v1944 = vpack.c.b16 %v1942, %v1942
    %v1946 = vsel %vm1800, %v1943, 0
    %v1949 = vsel %vm1800, %v1944, 0
    %1951 = vmatprep.subr.bf16.mxu0 0
    %1952 = vmatpush1.bf16.msra.mxu0 0
    %1953 = vmatprep.subr.bf16.mxu0 0
    %1954 = vmatpush1.bf16.msra.mxu0 0
    %1955 = vmatprep.subr.bf16.mxu0 0
    %1956 = vmatpush1.bf16.msra.mxu0 0
    %1957 = vmatprep.subr.bf16.mxu0 0
    %1958 = vmatpush1.bf16.msra.mxu0 0
    %1959 = vmatprep.subr.bf16.mxu0 0
    %1960 = vmatpush1.bf16.msra.mxu0 0
    %1961 = vmatprep.subr.bf16.mxu0 %v1812
    %1962 = vmatpush1.bf16.msra.mxu0 %v1809
    %1963 = vmatprep.subr.bf16.mxu0 %v1786
    %1964 = vmatpush1.bf16.msra.mxu0 %v1785
    %1965 = vmatprep.subr.bf16.mxu0 %v1784
    %1966 = vmatpush1.bf16.msra.mxu0 %v1783
    %1967 = vmatprep.subr.bf16.mxu0 0
    %1968 = vmatpush2.bf16.msra.mxu0 0
    %1969 = vmatprep.subr.bf16.mxu0 0
    %1970 = vmatpush2.bf16.msra.mxu0 0
    %1971 = vmatprep.subr.bf16.mxu0 0
    %1972 = vmatpush2.bf16.msra.mxu0 0
    %1973 = vmatprep.subr.bf16.mxu0 0
    %1974 = vmatpush2.bf16.msra.mxu0 0
    %1975 = vmatprep.subr.bf16.mxu0 0
    %1976 = vmatpush2.bf16.msra.mxu0 0
    %1977 = vmatprep.subr.bf16.mxu0 0
    %1978 = vmatpush2.bf16.msra.mxu0 0
    %1979 = vmatprep.subr.bf16.mxu0 0
    %1980 = vmatpush2.bf16.msra.mxu0 0
    %1981 = vmatprep.subr.bf16.mxu0 0
    %1982 = vmatpush2.bf16.msra.mxu0 0
    %1983 = vmatprep.mubr.bf16.mxu0 0
    %1984 = vmatmul.mubr.bf16.gmra.mxu0 %v1946
    %v1985 = vpop.f32.mrf.mxu0
    %v1986 = vadd.f32 0.0, %v1985
    %v1987 = vpop.f32.mrf.mxu0
    %v1988 = vadd.f32 0.0, %v1987
    %v1989 = vpop.f32.mrf.mxu0
    %v1990 = vadd.f32 0.0, %v1989
    %v1991 = vpop.f32.mrf.mxu0
    %v1992 = vadd.f32 0.0, %v1991
    %1993 = vmatprep.mubr.bf16.mxu0 0
    %1994 = vmatmul.mubr.bf16.gmra.mxu0 %v1949
    %v1995 = vpop.f32.mrf.mxu0
    %v1996 = vadd.f32 0.0, %v1995
    %v1997 = vpop.f32.mrf.mxu0
    %v1998 = vadd.f32 0.0, %v1997
    %v1999 = vpop.f32.mrf.mxu0
    %v2000 = vpop.f32.mrf.mxu0
    %2001 = vdwg.mxu0
    %v2002 = vpack.c.bf16 %v1990, %v1986
    %v2003 = vpack.c.bf16 %v1992, %v1988
    %v2004 = vpack.c.bf16 %v1996, %v1996
    %v2005 = vpack.c.bf16 %v1998, %v1998
    %s2006 = scalar_lea.vmem [#allocation6], 512
    %v2007 = vld [vmem:[%s2006] sm:$0xff]
    %v2008 = vld [vmem:[%s2006 + $0x8] sm:$0xff]
    %v2009 = vld [vmem:[%s2006 + $0x10] sm:$0xff]
    %v2010 = vld [vmem:[%s2006 + $0x18] sm:$0xff]
    %v2011 = vld [vmem:[%s2006 + $0x20] sm:$0xff]
    %v2012 = vld [vmem:[%s2006 + $0x28] sm:$0xff]
    %v2013 = vld [vmem:[%s2006 + $0x30] sm:$0xff]
    %v2014 = vld [vmem:[%s2006 + $0x38] sm:$0xff]
    %v2015 = vld [vmem:[%s2006 + $0x40] sm:$0xff]
    %v2016 = vld [vmem:[%s2006 + $0x48] sm:$0xff]
    %v2017 = vld [vmem:[%s2006 + $0x50] sm:$0xff]
    %v2018 = vld [vmem:[%s2006 + $0x58] sm:$0xff]
    %v2019 = vld [vmem:[%s2006 + $0x60] sm:$0xff]
    %v2020 = vld [vmem:[%s2006 + $0x68] sm:$0xff]
    %v2021 = vld [vmem:[%s2006 + $0x70] sm:$0xff]
    %v2022 = vld [vmem:[%s2006 + $0x78] sm:$0xff]
    %v2023 = vld [vmem:[%s2006 + $0x80] sm:$0xff]
    %v2024 = vld [vmem:[%s2006 + $0x88] sm:$0xff]
    %v2025 = vld [vmem:[%s2006 + $0x90] sm:$0xff]
    %v2026 = vld [vmem:[%s2006 + $0x98] sm:$0xff]
    %v2027 = vld [vmem:[%s2006 + $0xa0] sm:$0xff]
    %v2028 = vld [vmem:[%s2006 + $0xa8] sm:$0xff]
    %v2029 = vld [vmem:[%s2006 + $0xb0] sm:$0xff]
    %v2030 = vld [vmem:[%s2006 + $0xb8] sm:$0xff]
    %v2031 = vld [vmem:[%s2006 + $0xc0] sm:$0xff]
    %v2032 = vld [vmem:[%s2006 + $0xc8] sm:$0xff]
    %v2033 = vld [vmem:[%s2006 + $0xd0] sm:$0xff]
    %v2034 = vld [vmem:[%s2006 + $0xd8] sm:$0xff]
    %v2035 = vld [vmem:[%s2006 + $0xe0] sm:$0xff]
    %v2036 = vld [vmem:[%s2006 + $0xe8] sm:$0xff]
    %v2037 = vld [vmem:[%s2006 + $0xf0] sm:$0xff]
    %v2038 = vld [vmem:[%s2006 + $0xf8] sm:$0xff]
    %v2039 = vld [vmem:[%s2006 + $0x100] sm:$0xff]
    %v2040 = vld [vmem:[%s2006 + $0x108] sm:$0xff]
    %v2041 = vld [vmem:[%s2006 + $0x110] sm:$0xff]
    %v2042 = vld [vmem:[%s2006 + $0x118] sm:$0xff]
    %v2043 = vld [vmem:[%s2006 + $0x120] sm:$0xff]
    %v2044 = vld [vmem:[%s2006 + $0x128] sm:$0xff]
    %v2045 = vld [vmem:[%s2006 + $0x130] sm:$0xff]
    %v2046 = vld [vmem:[%s2006 + $0x138] sm:$0xff]
    %v2047 = vld [vmem:[%s2006 + $0x140] sm:$0xff]
    %v2048 = vld [vmem:[%s2006 + $0x148] sm:$0xff]
    %v2049 = vld [vmem:[%s2006 + $0x150] sm:$0xff]
    %v2050 = vld [vmem:[%s2006 + $0x158] sm:$0xff]
    %v2051 = vld [vmem:[%s2006 + $0x160] sm:$0xff]
    %v2052 = vld [vmem:[%s2006 + $0x168] sm:$0xff]
    %v2053 = vld [vmem:[%s2006 + $0x170] sm:$0xff]
    %v2054 = vld [vmem:[%s2006 + $0x178] sm:$0xff]
    %v2055 = vld [vmem:[%s2006 + $0x180] sm:$0xff]
    %v2056 = vld [vmem:[%s2006 + $0x188] sm:$0xff]
    %v2057 = vld [vmem:[%s2006 + $0x190] sm:$0xff]
    %v2058 = vld [vmem:[%s2006 + $0x198] sm:$0xff]
    %v2059 = vld [vmem:[%s2006 + $0x1a0] sm:$0xff]
    %v2060 = vld [vmem:[%s2006 + $0x1a8] sm:$0xff]
    %v2061 = vld [vmem:[%s2006 + $0x1b0] sm:$0xff]
    %v2062 = vld [vmem:[%s2006 + $0x1b8] sm:$0xff]
    %v2063 = vld [vmem:[%s2006 + $0x1c0] sm:$0xff]
    %v2064 = vld [vmem:[%s2006 + $0x1c8] sm:$0xff]
    %v2065 = vld [vmem:[%s2006 + $0x1d0] sm:$0xff]
    %v2066 = vld [vmem:[%s2006 + $0x1d8] sm:$0xff]
    %v2067 = vld [vmem:[%s2006 + $0x1e0] sm:$0xff]
    %v2068 = vld [vmem:[%s2006 + $0x1e8] sm:$0xff]
    %v2069 = vld [vmem:[%s2006 + $0x1f0] sm:$0xff]
    %v2070 = vld [vmem:[%s2006 + $0x1f8] sm:$0xff]
    %v2135 = vunpack.c.l.b16 %v2007
    %v2136 = vunpack.c.h.b16 %v2007
    %v2137 = vunpack.c.l.b16 %v2008
    %v2138 = vunpack.c.h.b16 %v2008
    %v2139 = vunpack.c.l.b16 %v2009
    %v2140 = vunpack.c.h.b16 %v2009
    %v2141 = vunpack.c.l.b16 %v2010
    %v2142 = vunpack.c.h.b16 %v2010
    %v2143 = vunpack.c.l.b16 %v2011
    %v2144 = vunpack.c.h.b16 %v2011
    %v2145 = vunpack.c.l.b16 %v2012
    %v2146 = vunpack.c.h.b16 %v2012
    %v2147 = vunpack.c.l.b16 %v2013
    %v2148 = vunpack.c.h.b16 %v2013
    %v2149 = vunpack.c.l.b16 %v2014
    %v2150 = vunpack.c.h.b16 %v2014
    %v2151 = vunpack.c.l.b16 %v2015
    %v2152 = vunpack.c.h.b16 %v2015
    %v2153 = vunpack.c.l.b16 %v2016
    %v2154 = vunpack.c.h.b16 %v2016
    %v2155 = vunpack.c.l.b16 %v2017
    %v2156 = vunpack.c.h.b16 %v2017
    %v2157 = vunpack.c.l.b16 %v2018
    %v2158 = vunpack.c.h.b16 %v2018
    %v2159 = vunpack.c.l.b16 %v2019
    %v2160 = vunpack.c.h.b16 %v2019
    %v2161 = vunpack.c.l.b16 %v2020
    %v2162 = vunpack.c.h.b16 %v2020
    %v2163 = vunpack.c.l.b16 %v2021
    %v2164 = vunpack.c.h.b16 %v2021
    %v2165 = vunpack.c.l.b16 %v2022
    %v2166 = vunpack.c.h.b16 %v2022
    %v2167 = vunpack.c.l.b16 %v2023
    %v2168 = vunpack.c.h.b16 %v2023
    %v2169 = vunpack.c.l.b16 %v2024
    %v2170 = vunpack.c.h.b16 %v2024
    %v2171 = vunpack.c.l.b16 %v2025
    %v2172 = vunpack.c.h.b16 %v2025
    %v2173 = vunpack.c.l.b16 %v2026
    %v2174 = vunpack.c.h.b16 %v2026
    %v2175 = vunpack.c.l.b16 %v2027
    %v2176 = vunpack.c.h.b16 %v2027
    %v2177 = vunpack.c.l.b16 %v2028
    %v2178 = vunpack.c.h.b16 %v2028
    %v2179 = vunpack.c.l.b16 %v2029
    %v2180 = vunpack.c.h.b16 %v2029
    %v2181 = vunpack.c.l.b16 %v2030
    %v2182 = vunpack.c.h.b16 %v2030
    %v2183 = vunpack.c.l.b16 %v2031
    %v2184 = vunpack.c.h.b16 %v2031
    %v2185 = vunpack.c.l.b16 %v2032
    %v2186 = vunpack.c.h.b16 %v2032
    %v2187 = vunpack.c.l.b16 %v2033
    %v2188 = vunpack.c.h.b16 %v2033
    %v2189 = vunpack.c.l.b16 %v2034
    %v2190 = vunpack.c.h.b16 %v2034
    %v2191 = vunpack.c.l.b16 %v2035
    %v2192 = vunpack.c.h.b16 %v2035
    %v2193 = vunpack.c.l.b16 %v2036
    %v2194 = vunpack.c.h.b16 %v2036
    %v2195 = vunpack.c.l.b16 %v2037
    %v2196 = vunpack.c.h.b16 %v2037
    %v2197 = vunpack.c.l.b16 %v2038
    %v2198 = vunpack.c.h.b16 %v2038
    %v2199 = vunpack.c.l.b16 %v2039
    %v2200 = vunpack.c.h.b16 %v2039
    %v2201 = vunpack.c.l.b16 %v2040
    %v2202 = vunpack.c.h.b16 %v2040
    %v2203 = vunpack.c.l.b16 %v2041
    %v2204 = vunpack.c.h.b16 %v2041
    %v2205 = vunpack.c.l.b16 %v2042
    %v2206 = vunpack.c.h.b16 %v2042
    %v2207 = vunpack.c.l.b16 %v2043
    %v2208 = vunpack.c.h.b16 %v2043
    %v2209 = vunpack.c.l.b16 %v2044
    %v2210 = vunpack.c.h.b16 %v2044
    %v2211 = vunpack.c.l.b16 %v2045
    %v2212 = vunpack.c.h.b16 %v2045
    %v2213 = vunpack.c.l.b16 %v2046
    %v2214 = vunpack.c.h.b16 %v2046
    %v2215 = vunpack.c.l.b16 %v2047
    %v2216 = vunpack.c.h.b16 %v2047
    %v2217 = vunpack.c.l.b16 %v2048
    %v2218 = vunpack.c.h.b16 %v2048
    %v2219 = vunpack.c.l.b16 %v2049
    %v2220 = vunpack.c.h.b16 %v2049
    %v2221 = vunpack.c.l.b16 %v2050
    %v2222 = vunpack.c.h.b16 %v2050
    %v2223 = vunpack.c.l.b16 %v2051
    %v2224 = vunpack.c.h.b16 %v2051
    %v2225 = vunpack.c.l.b16 %v2052
    %v2226 = vunpack.c.h.b16 %v2052
    %v2227 = vunpack.c.l.b16 %v2053
    %v2228 = vunpack.c.h.b16 %v2053
    %v2229 = vunpack.c.l.b16 %v2054
    %v2230 = vunpack.c.h.b16 %v2054
    %v2231 = vunpack.c.l.b16 %v2055
    %v2232 = vunpack.c.h.b16 %v2055
    %v2233 = vunpack.c.l.b16 %v2056
    %v2234 = vunpack.c.h.b16 %v2056
    %v2235 = vunpack.c.l.b16 %v2057
    %v2236 = vunpack.c.h.b16 %v2057
    %v2237 = vunpack.c.l.b16 %v2058
    %v2238 = vunpack.c.h.b16 %v2058
    %v2239 = vunpack.c.l.b16 %v2059
    %v2240 = vunpack.c.h.b16 %v2059
    %v2241 = vunpack.c.l.b16 %v2060
    %v2242 = vunpack.c.h.b16 %v2060
    %v2243 = vunpack.c.l.b16 %v2061
    %v2244 = vunpack.c.h.b16 %v2061
    %v2245 = vunpack.c.l.b16 %v2062
    %v2246 = vunpack.c.h.b16 %v2062
    %v2247 = vunpack.c.l.b16 %v2063
    %v2248 = vunpack.c.h.b16 %v2063
    %v2249 = vunpack.c.l.b16 %v2064
    %v2250 = vunpack.c.h.b16 %v2064
    %v2251 = vunpack.c.l.b16 %v2065
    %v2252 = vunpack.c.h.b16 %v2065
    %v2253 = vunpack.c.l.b16 %v2066
    %v2254 = vunpack.c.h.b16 %v2066
    %v2255 = vunpack.c.l.b16 %v2067
    %v2256 = vunpack.c.h.b16 %v2067
    %v2257 = vunpack.c.l.b16 %v2068
    %v2258 = vunpack.c.h.b16 %v2068
    %v2259 = vunpack.c.l.b16 %v2069
    %v2260 = vunpack.c.h.b16 %v2069
    %v2261 = vunpack.c.l.b16 %v2070
    %v2262 = vunpack.c.h.b16 %v2070
    %v2263 = vpack.c.b16 %v2139, %v2135
    %v2264 = vpack.c.b16 %v2140, %v2136
    %v2265 = vpack.c.b16 %v2141, %v2137
    %v2266 = vpack.c.b16 %v2142, %v2138
    %v2267 = vpack.c.b16 %v2147, %v2143
    %v2268 = vpack.c.b16 %v2148, %v2144
    %v2269 = vpack.c.b16 %v2149, %v2145
    %v2270 = vpack.c.b16 %v2150, %v2146
    %v2271 = vpack.c.b16 %v2155, %v2151
    %v2272 = vpack.c.b16 %v2156, %v2152
    %v2273 = vpack.c.b16 %v2157, %v2153
    %v2274 = vpack.c.b16 %v2158, %v2154
    %v2275 = vpack.c.b16 %v2163, %v2159
    %v2276 = vpack.c.b16 %v2164, %v2160
    %v2277 = vpack.c.b16 %v2165, %v2161
    %v2278 = vpack.c.b16 %v2166, %v2162
    %v2279 = vpack.c.b16 %v2171, %v2167
    %v2280 = vpack.c.b16 %v2172, %v2168
    %v2281 = vpack.c.b16 %v2173, %v2169
    %v2282 = vpack.c.b16 %v2174, %v2170
    %v2283 = vpack.c.b16 %v2179, %v2175
    %v2284 = vpack.c.b16 %v2180, %v2176
    %v2285 = vpack.c.b16 %v2181, %v2177
    %v2286 = vpack.c.b16 %v2182, %v2178
    %v2287 = vpack.c.b16 %v2187, %v2183
    %v2288 = vpack.c.b16 %v2188, %v2184
    %v2289 = vpack.c.b16 %v2189, %v2185
    %v2290 = vpack.c.b16 %v2190, %v2186
    %v2291 = vpack.c.b16 %v2195, %v2191
    %v2292 = vpack.c.b16 %v2196, %v2192
    %v2293 = vpack.c.b16 %v2197, %v2193
    %v2294 = vpack.c.b16 %v2198, %v2194
    %v2295 = vpack.c.b16 %v2203, %v2199
    %v2296 = vpack.c.b16 %v2204, %v2200
    %v2297 = vpack.c.b16 %v2205, %v2201
    %v2298 = vpack.c.b16 %v2206, %v2202
    %v2299 = vpack.c.b16 %v2211, %v2207
    %v2300 = vpack.c.b16 %v2212, %v2208
    %v2301 = vpack.c.b16 %v2213, %v2209
    %v2302 = vpack.c.b16 %v2214, %v2210
    %v2303 = vpack.c.b16 %v2219, %v2215
    %v2304 = vpack.c.b16 %v2220, %v2216
    %v2305 = vpack.c.b16 %v2221, %v2217
    %v2306 = vpack.c.b16 %v2222, %v2218
    %v2307 = vpack.c.b16 %v2227, %v2223
    %v2308 = vpack.c.b16 %v2228, %v2224
    %v2309 = vpack.c.b16 %v2229, %v2225
    %v2310 = vpack.c.b16 %v2230, %v2226
    %v2311 = vpack.c.b16 %v2235, %v2231
    %v2312 = vpack.c.b16 %v2236, %v2232
    %v2313 = vpack.c.b16 %v2237, %v2233
    %v2314 = vpack.c.b16 %v2238, %v2234
    %v2315 = vpack.c.b16 %v2243, %v2239
    %v2316 = vpack.c.b16 %v2244, %v2240
    %v2317 = vpack.c.b16 %v2245, %v2241
    %v2318 = vpack.c.b16 %v2246, %v2242
    %v2319 = vpack.c.b16 %v2251, %v2247
    %v2320 = vpack.c.b16 %v2252, %v2248
    %v2321 = vpack.c.b16 %v2253, %v2249
    %v2322 = vpack.c.b16 %v2254, %v2250
    %v2323 = vpack.c.b16 %v2259, %v2255
    %v2324 = vpack.c.b16 %v2260, %v2256
    %v2325 = vpack.c.b16 %v2261, %v2257
    %v2326 = vpack.c.b16 %v2262, %v2258
    %2391 = vmatprep.subr.bf16.mxu0 %v2292
    %2392 = vmatpush1.bf16.msra.mxu0 %v2291
    %2393 = vmatprep.subr.bf16.mxu0 %v2288
    %2394 = vmatpush1.bf16.msra.mxu0 %v2287
    %2395 = vmatprep.subr.bf16.mxu0 %v2284
    %2396 = vmatpush1.bf16.msra.mxu0 %v2283
    %2397 = vmatprep.subr.bf16.mxu0 %v2280
    %2398 = vmatpush1.bf16.msra.mxu0 %v2279
    %2399 = vmatprep.subr.bf16.mxu0 %v2276
    %2400 = vmatpush1.bf16.msra.mxu0 %v2275
    %2401 = vmatprep.subr.bf16.mxu0 %v2272
    %2402 = vmatpush1.bf16.msra.mxu0 %v2271
    %2403 = vmatprep.subr.bf16.mxu0 %v2268
    %2404 = vmatpush1.bf16.msra.mxu0 %v2267
    %2405 = vmatprep.subr.bf16.mxu0 %v2264
    %2406 = vmatpush1.bf16.msra.mxu0 %v2263
    %2407 = vmatprep.subr.bf16.mxu0 %v2324
    %2408 = vmatpush2.bf16.msra.mxu0 %v2323
    %2409 = vmatprep.subr.bf16.mxu0 %v2320
    %2410 = vmatpush2.bf16.msra.mxu0 %v2319
    %2411 = vmatprep.subr.bf16.mxu0 %v2316
    %2412 = vmatpush2.bf16.msra.mxu0 %v2315
    %2413 = vmatprep.subr.bf16.mxu0 %v2312
    %2414 = vmatpush2.bf16.msra.mxu0 %v2311
    %2415 = vmatprep.subr.bf16.mxu0 %v2308
    %2416 = vmatpush2.bf16.msra.mxu0 %v2307
    %2417 = vmatprep.subr.bf16.mxu0 %v2304
    %2418 = vmatpush2.bf16.msra.mxu0 %v2303
    %2419 = vmatprep.subr.bf16.mxu0 %v2300
    %2420 = vmatpush2.bf16.msra.mxu0 %v2299
    %2421 = vmatprep.subr.bf16.mxu0 %v2296
    %2422 = vmatpush2.bf16.msra.mxu0 %v2295
    %2423 = vmatprep.mubr.bf16.mxu0 %v2003
    %2424 = vmatmul.mubr.bf16.gmra.mxu0 %v2002
    %v2425 = vpop.f32.mrf.mxu0
    %v2426 = vadd.f32 0.0, %v2425
    %v2427 = vpop.f32.mrf.mxu0
    %v2428 = vadd.f32 0.0, %v2427
    %v2429 = vpop.f32.mrf.mxu0
    %v2430 = vadd.f32 0.0, %v2429
    %v2431 = vpop.f32.mrf.mxu0
    %v2432 = vadd.f32 0.0, %v2431
    %2433 = vmatprep.mubr.bf16.mxu0 %v2005
    %2434 = vmatmul.mubr.bf16.gmra.mxu0 %v2004
    %v2435 = vpop.f32.mrf.mxu0
    %v2436 = vadd.f32 0.0, %v2435
    %v2437 = vpop.f32.mrf.mxu0
    %v2438 = vadd.f32 0.0, %v2437
    %v2439 = vpop.f32.mrf.mxu0
    %v2440 = vpop.f32.mrf.mxu0
    %2441 = vdwg.mxu0
    %2442 = vmatprep.subr.bf16.mxu0 %v2294
    %2443 = vmatpush1.bf16.msra.mxu0 %v2293
    %2444 = vmatprep.subr.bf16.mxu0 %v2290
    %2445 = vmatpush1.bf16.msra.mxu0 %v2289
    %2446 = vmatprep.subr.bf16.mxu0 %v2286
    %2447 = vmatpush1.bf16.msra.mxu0 %v2285
    %2448 = vmatprep.subr.bf16.mxu0 %v2282
    %2449 = vmatpush1.bf16.msra.mxu0 %v2281
    %2450 = vmatprep.subr.bf16.mxu0 %v2278
    %2451 = vmatpush1.bf16.msra.mxu0 %v2277
    %2452 = vmatprep.subr.bf16.mxu0 %v2274
    %2453 = vmatpush1.bf16.msra.mxu0 %v2273
    %2454 = vmatprep.subr.bf16.mxu0 %v2270
    %2455 = vmatpush1.bf16.msra.mxu0 %v2269
    %2456 = vmatprep.subr.bf16.mxu0 %v2266
    %2457 = vmatpush1.bf16.msra.mxu0 %v2265
    %2458 = vmatprep.subr.bf16.mxu0 %v2326
    %2459 = vmatpush2.bf16.msra.mxu0 %v2325
    %2460 = vmatprep.subr.bf16.mxu0 %v2322
    %2461 = vmatpush2.bf16.msra.mxu0 %v2321
    %2462 = vmatprep.subr.bf16.mxu0 %v2318
    %2463 = vmatpush2.bf16.msra.mxu0 %v2317
    %2464 = vmatprep.subr.bf16.mxu0 %v2314
    %2465 = vmatpush2.bf16.msra.mxu0 %v2313
    %2466 = vmatprep.subr.bf16.mxu0 %v2310
    %2467 = vmatpush2.bf16.msra.mxu0 %v2309
    %2468 = vmatprep.subr.bf16.mxu0 %v2306
    %2469 = vmatpush2.bf16.msra.mxu0 %v2305
    %2470 = vmatprep.subr.bf16.mxu0 %v2302
    %2471 = vmatpush2.bf16.msra.mxu0 %v2301
    %2472 = vmatprep.subr.bf16.mxu0 %v2298
    %2473 = vmatpush2.bf16.msra.mxu0 %v2297
    %2474 = vmatprep.mubr.bf16.mxu0 %v2003
    %2475 = vmatmul.mubr.bf16.gmra.mxu0 %v2002
    %v2476 = vpop.f32.mrf.mxu0
    %v2477 = vadd.f32 0.0, %v2476
    %v2478 = vpop.f32.mrf.mxu0
    %v2479 = vadd.f32 0.0, %v2478
    %v2480 = vpop.f32.mrf.mxu0
    %v2481 = vadd.f32 0.0, %v2480
    %v2482 = vpop.f32.mrf.mxu0
    %v2483 = vadd.f32 0.0, %v2482
    %2484 = vmatprep.mubr.bf16.mxu0 %v2005
    %2485 = vmatmul.mubr.bf16.gmra.mxu0 %v2004
    %v2486 = vpop.f32.mrf.mxu0
    %v2487 = vadd.f32 0.0, %v2486
    %v2488 = vpop.f32.mrf.mxu0
    %v2489 = vadd.f32 0.0, %v2488
    %v2490 = vpop.f32.mrf.mxu0
    %v2491 = vpop.f32.mrf.mxu0
    %2492 = vdwg.mxu0
    %v2557 = vunpack.c.l.b16 %v1869
    %v2558 = vunpack.c.h.b16 %v1869
    %v2559 = vunpack.c.l.b16 %v1870
    %v2560 = vunpack.c.h.b16 %v1870
    %v2561 = vunpack.c.l.b16 %v1871
    %v2562 = vunpack.c.h.b16 %v1871
    %v2563 = vunpack.c.l.b16 %v1872
    %v2564 = vunpack.c.h.b16 %v1872
    %v2565 = vunpack.c.l.b16 %v1873
    %v2566 = vunpack.c.h.b16 %v1873
    %v2567 = vunpack.c.l.b16 %v1874
    %v2568 = vunpack.c.h.b16 %v1874
    %v2569 = vunpack.c.l.b16 %v1875
    %v2570 = vunpack.c.h.b16 %v1875
    %v2571 = vunpack.c.l.b16 %v1876
    %v2572 = vunpack.c.h.b16 %v1876
    %v2573 = vunpack.c.l.b16 %v1877
    %v2574 = vunpack.c.h.b16 %v1877
    %v2575 = vunpack.c.l.b16 %v1878
    %v2576 = vunpack.c.h.b16 %v1878
    %v2577 = vunpack.c.l.b16 %v1879
    %v2578 = vunpack.c.h.b16 %v1879
    %v2579 = vunpack.c.l.b16 %v1880
    %v2580 = vunpack.c.h.b16 %v1880
    %v2581 = vunpack.c.l.b16 %v1881
    %v2582 = vunpack.c.h.b16 %v1881
    %v2583 = vunpack.c.l.b16 %v1882
    %v2584 = vunpack.c.h.b16 %v1882
    %v2585 = vunpack.c.l.b16 %v1883
    %v2586 = vunpack.c.h.b16 %v1883
    %v2587 = vunpack.c.l.b16 %v1884
    %v2588 = vunpack.c.h.b16 %v1884
    %v2589 = vunpack.c.l.b16 %v1885
    %v2590 = vunpack.c.h.b16 %v1885
    %v2591 = vunpack.c.l.b16 %v1886
    %v2592 = vunpack.c.h.b16 %v1886
    %v2593 = vunpack.c.l.b16 %v1887
    %v2594 = vunpack.c.h.b16 %v1887
    %v2595 = vunpack.c.l.b16 %v1888
    %v2596 = vunpack.c.h.b16 %v1888
    %v2597 = vunpack.c.l.b16 %v1889
    %v2598 = vunpack.c.h.b16 %v1889
    %v2599 = vunpack.c.l.b16 %v1890
    %v2600 = vunpack.c.h.b16 %v1890
    %v2601 = vunpack.c.l.b16 %v1891
    %v2602 = vunpack.c.h.b16 %v1891
    %v2603 = vunpack.c.l.b16 %v1892
    %v2604 = vunpack.c.h.b16 %v1892
    %v2605 = vunpack.c.l.b16 %v1893
    %v2606 = vunpack.c.h.b16 %v1893
    %v2607 = vunpack.c.l.b16 %v1894
    %v2608 = vunpack.c.h.b16 %v1894
    %v2609 = vunpack.c.l.b16 %v1895
    %v2610 = vunpack.c.h.b16 %v1895
    %v2611 = vunpack.c.l.b16 %v1896
    %v2612 = vunpack.c.h.b16 %v1896
    %v2613 = vunpack.c.l.b16 %v1897
    %v2614 = vunpack.c.h.b16 %v1897
    %v2615 = vunpack.c.l.b16 %v1898
    %v2616 = vunpack.c.h.b16 %v1898
    %v2617 = vunpack.c.l.b16 %v1899
    %v2618 = vunpack.c.h.b16 %v1899
    %v2619 = vunpack.c.l.b16 %v1900
    %v2620 = vunpack.c.h.b16 %v1900
    %v2621 = vunpack.c.l.b16 %v1901
    %v2622 = vunpack.c.h.b16 %v1901
    %v2623 = vunpack.c.l.b16 %v1902
    %v2624 = vunpack.c.h.b16 %v1902
    %v2625 = vunpack.c.l.b16 %v1903
    %v2626 = vunpack.c.h.b16 %v1903
    %v2627 = vunpack.c.l.b16 %v1904
    %v2628 = vunpack.c.h.b16 %v1904
    %v2629 = vunpack.c.l.b16 %v1905
    %v2630 = vunpack.c.h.b16 %v1905
    %v2631 = vunpack.c.l.b16 %v1906
    %v2632 = vunpack.c.h.b16 %v1906
    %v2633 = vunpack.c.l.b16 %v1907
    %v2634 = vunpack.c.h.b16 %v1907
    %v2635 = vunpack.c.l.b16 %v1908
    %v2636 = vunpack.c.h.b16 %v1908
    %v2637 = vunpack.c.l.b16 %v1909
    %v2638 = vunpack.c.h.b16 %v1909
    %v2639 = vunpack.c.l.b16 %v1910
    %v2640 = vunpack.c.h.b16 %v1910
    %v2641 = vunpack.c.l.b16 %v1911
    %v2642 = vunpack.c.h.b16 %v1911
    %v2643 = vunpack.c.l.b16 %v1912
    %v2644 = vunpack.c.h.b16 %v1912
    %v2645 = vunpack.c.l.b16 %v1913
    %v2646 = vunpack.c.h.b16 %v1913
    %v2647 = vunpack.c.l.b16 %v1914
    %v2648 = vunpack.c.h.b16 %v1914
    %v2649 = vunpack.c.l.b16 %v1915
    %v2650 = vunpack.c.h.b16 %v1915
    %v2651 = vunpack.c.l.b16 %v1916
    %v2652 = vunpack.c.h.b16 %v1916
    %v2653 = vunpack.c.l.b16 %v1917
    %v2654 = vunpack.c.h.b16 %v1917
    %v2655 = vunpack.c.l.b16 %v1918
    %v2656 = vunpack.c.h.b16 %v1918
    %v2657 = vunpack.c.l.b16 %v1919
    %v2658 = vunpack.c.h.b16 %v1919
    %v2659 = vunpack.c.l.b16 %v1920
    %v2660 = vunpack.c.h.b16 %v1920
    %v2661 = vunpack.c.l.b16 %v1921
    %v2662 = vunpack.c.h.b16 %v1921
    %v2663 = vunpack.c.l.b16 %v1922
    %v2664 = vunpack.c.h.b16 %v1922
    %v2665 = vunpack.c.l.b16 %v1923
    %v2666 = vunpack.c.h.b16 %v1923
    %v2667 = vunpack.c.l.b16 %v1924
    %v2668 = vunpack.c.h.b16 %v1924
    %v2669 = vunpack.c.l.b16 %v1925
    %v2670 = vunpack.c.h.b16 %v1925
    %v2671 = vunpack.c.l.b16 %v1926
    %v2672 = vunpack.c.h.b16 %v1926
    %v2673 = vunpack.c.l.b16 %v1927
    %v2674 = vunpack.c.h.b16 %v1927
    %v2675 = vunpack.c.l.b16 %v1928
    %v2676 = vunpack.c.h.b16 %v1928
    %v2677 = vunpack.c.l.b16 %v1929
    %v2678 = vunpack.c.h.b16 %v1929
    %v2679 = vunpack.c.l.b16 %v1930
    %v2680 = vunpack.c.h.b16 %v1930
    %v2681 = vunpack.c.l.b16 %v1931
    %v2682 = vunpack.c.h.b16 %v1931
    %v2683 = vunpack.c.l.b16 %v1932
    %v2684 = vunpack.c.h.b16 %v1932
    %v2685 = vpack.c.b16 %v2561, %v2557
    %v2686 = vpack.c.b16 %v2562, %v2558
    %v2687 = vpack.c.b16 %v2563, %v2559
    %v2688 = vpack.c.b16 %v2564, %v2560
    %v2689 = vpack.c.b16 %v2569, %v2565
    %v2690 = vpack.c.b16 %v2570, %v2566
    %v2691 = vpack.c.b16 %v2571, %v2567
    %v2692 = vpack.c.b16 %v2572, %v2568
    %v2693 = vpack.c.b16 %v2577, %v2573
    %v2694 = vpack.c.b16 %v2578, %v2574
    %v2695 = vpack.c.b16 %v2579, %v2575
    %v2696 = vpack.c.b16 %v2580, %v2576
    %v2697 = vpack.c.b16 %v2585, %v2581
    %v2698 = vpack.c.b16 %v2586, %v2582
    %v2699 = vpack.c.b16 %v2587, %v2583
    %v2700 = vpack.c.b16 %v2588, %v2584
    %v2701 = vpack.c.b16 %v2593, %v2589
    %v2702 = vpack.c.b16 %v2594, %v2590
    %v2703 = vpack.c.b16 %v2595, %v2591
    %v2704 = vpack.c.b16 %v2596, %v2592
    %v2705 = vpack.c.b16 %v2601, %v2597
    %v2706 = vpack.c.b16 %v2602, %v2598
    %v2707 = vpack.c.b16 %v2603, %v2599
    %v2708 = vpack.c.b16 %v2604, %v2600
    %v2709 = vpack.c.b16 %v2609, %v2605
    %v2710 = vpack.c.b16 %v2610, %v2606
    %v2711 = vpack.c.b16 %v2611, %v2607
    %v2712 = vpack.c.b16 %v2612, %v2608
    %v2713 = vpack.c.b16 %v2617, %v2613
    %v2714 = vpack.c.b16 %v2618, %v2614
    %v2715 = vpack.c.b16 %v2619, %v2615
    %v2716 = vpack.c.b16 %v2620, %v2616
    %v2717 = vpack.c.b16 %v2625, %v2621
    %v2718 = vpack.c.b16 %v2626, %v2622
    %v2719 = vpack.c.b16 %v2627, %v2623
    %v2720 = vpack.c.b16 %v2628, %v2624
    %v2721 = vpack.c.b16 %v2633, %v2629
    %v2722 = vpack.c.b16 %v2634, %v2630
    %v2723 = vpack.c.b16 %v2635, %v2631
    %v2724 = vpack.c.b16 %v2636, %v2632
    %v2725 = vpack.c.b16 %v2641, %v2637
    %v2726 = vpack.c.b16 %v2642, %v2638
    %v2727 = vpack.c.b16 %v2643, %v2639
    %v2728 = vpack.c.b16 %v2644, %v2640
    %v2729 = vpack.c.b16 %v2649, %v2645
    %v2730 = vpack.c.b16 %v2650, %v2646
    %v2731 = vpack.c.b16 %v2651, %v2647
    %v2732 = vpack.c.b16 %v2652, %v2648
    %v2733 = vpack.c.b16 %v2657, %v2653
    %v2734 = vpack.c.b16 %v2658, %v2654
    %v2735 = vpack.c.b16 %v2659, %v2655
    %v2736 = vpack.c.b16 %v2660, %v2656
    %v2737 = vpack.c.b16 %v2665, %v2661
    %v2738 = vpack.c.b16 %v2666, %v2662
    %v2739 = vpack.c.b16 %v2667, %v2663
    %v2740 = vpack.c.b16 %v2668, %v2664
    %v2741 = vpack.c.b16 %v2673, %v2669
    %v2742 = vpack.c.b16 %v2674, %v2670
    %v2743 = vpack.c.b16 %v2675, %v2671
    %v2744 = vpack.c.b16 %v2676, %v2672
    %v2745 = vpack.c.b16 %v2681, %v2677
    %v2746 = vpack.c.b16 %v2682, %v2678
    %v2747 = vpack.c.b16 %v2683, %v2679
    %v2748 = vpack.c.b16 %v2684, %v2680
    %2813 = vmatprep.subr.bf16.mxu0 %v2714
    %2814 = vmatpush1.bf16.msra.mxu0 %v2713
    %2815 = vmatprep.subr.bf16.mxu0 %v2710
    %2816 = vmatpush1.bf16.msra.mxu0 %v2709
    %2817 = vmatprep.subr.bf16.mxu0 %v2706
    %2818 = vmatpush1.bf16.msra.mxu0 %v2705
    %2819 = vmatprep.subr.bf16.mxu0 %v2702
    %2820 = vmatpush1.bf16.msra.mxu0 %v2701
    %2821 = vmatprep.subr.bf16.mxu0 %v2698
    %2822 = vmatpush1.bf16.msra.mxu0 %v2697
    %2823 = vmatprep.subr.bf16.mxu0 %v2694
    %2824 = vmatpush1.bf16.msra.mxu0 %v2693
    %2825 = vmatprep.subr.bf16.mxu0 %v2690
    %2826 = vmatpush1.bf16.msra.mxu0 %v2689
    %2827 = vmatprep.subr.bf16.mxu0 %v2686
    %2828 = vmatpush1.bf16.msra.mxu0 %v2685
    %2829 = vmatprep.subr.bf16.mxu0 %v2746
    %2830 = vmatpush2.bf16.msra.mxu0 %v2745
    %2831 = vmatprep.subr.bf16.mxu0 %v2742
    %2832 = vmatpush2.bf16.msra.mxu0 %v2741
    %2833 = vmatprep.subr.bf16.mxu0 %v2738
    %2834 = vmatpush2.bf16.msra.mxu0 %v2737
    %2835 = vmatprep.subr.bf16.mxu0 %v2734
    %2836 = vmatpush2.bf16.msra.mxu0 %v2733
    %2837 = vmatprep.subr.bf16.mxu0 %v2730
    %2838 = vmatpush2.bf16.msra.mxu0 %v2729
    %2839 = vmatprep.subr.bf16.mxu0 %v2726
    %2840 = vmatpush2.bf16.msra.mxu0 %v2725
    %2841 = vmatprep.subr.bf16.mxu0 %v2722
    %2842 = vmatpush2.bf16.msra.mxu0 %v2721
    %2843 = vmatprep.subr.bf16.mxu0 %v2718
    %2844 = vmatpush2.bf16.msra.mxu0 %v2717
    %2845 = vmatprep.mubr.bf16.mxu0 %v1866
    %2846 = vmatmul.mubr.bf16.gmra.mxu0 %v1865
    %v2847 = vpop.f32.mrf.mxu0
    %v2848 = vadd.f32 %v2426, %v2847
    %v2849 = vpop.f32.mrf.mxu0
    %v2850 = vadd.f32 %v2428, %v2849
    %v2851 = vpop.f32.mrf.mxu0
    %v2852 = vadd.f32 %v2430, %v2851
    %v2853 = vpop.f32.mrf.mxu0
    %v2854 = vadd.f32 %v2432, %v2853
    %2855 = vmatprep.mubr.bf16.mxu0 %v1868
    %2856 = vmatmul.mubr.bf16.gmra.mxu0 %v1867
    %v2857 = vpop.f32.mrf.mxu0
    %v2858 = vadd.f32 %v2436, %v2857
    %v2859 = vpop.f32.mrf.mxu0
    %v2860 = vadd.f32 %v2438, %v2859
    %v2861 = vpop.f32.mrf.mxu0
    %v2862 = vpop.f32.mrf.mxu0
    %2863 = vdwg.mxu0
    %2864 = vmatprep.subr.bf16.mxu0 %v2716
    %2865 = vmatpush1.bf16.msra.mxu0 %v2715
    %2866 = vmatprep.subr.bf16.mxu0 %v2712
    %2867 = vmatpush1.bf16.msra.mxu0 %v2711
    %2868 = vmatprep.subr.bf16.mxu0 %v2708
    %2869 = vmatpush1.bf16.msra.mxu0 %v2707
    %2870 = vmatprep.subr.bf16.mxu0 %v2704
    %2871 = vmatpush1.bf16.msra.mxu0 %v2703
    %2872 = vmatprep.subr.bf16.mxu0 %v2700
    %2873 = vmatpush1.bf16.msra.mxu0 %v2699
    %2874 = vmatprep.subr.bf16.mxu0 %v2696
    %2875 = vmatpush1.bf16.msra.mxu0 %v2695
    %2876 = vmatprep.subr.bf16.mxu0 %v2692
    %2877 = vmatpush1.bf16.msra.mxu0 %v2691
    %2878 = vmatprep.subr.bf16.mxu0 %v2688
    %2879 = vmatpush1.bf16.msra.mxu0 %v2687
    %2880 = vmatprep.subr.bf16.mxu0 %v2748
    %2881 = vmatpush2.bf16.msra.mxu0 %v2747
    %2882 = vmatprep.subr.bf16.mxu0 %v2744
    %2883 = vmatpush2.bf16.msra.mxu0 %v2743
    %2884 = vmatprep.subr.bf16.mxu0 %v2740
    %2885 = vmatpush2.bf16.msra.mxu0 %v2739
    %2886 = vmatprep.subr.bf16.mxu0 %v2736
    %2887 = vmatpush2.bf16.msra.mxu0 %v2735
    %2888 = vmatprep.subr.bf16.mxu0 %v2732
    %2889 = vmatpush2.bf16.msra.mxu0 %v2731
    %2890 = vmatprep.subr.bf16.mxu0 %v2728
    %2891 = vmatpush2.bf16.msra.mxu0 %v2727
    %2892 = vmatprep.subr.bf16.mxu0 %v2724
    %2893 = vmatpush2.bf16.msra.mxu0 %v2723
    %2894 = vmatprep.subr.bf16.mxu0 %v2720
    %2895 = vmatpush2.bf16.msra.mxu0 %v2719
    %2896 = vmatprep.mubr.bf16.mxu0 %v1866
    %2897 = vmatmul.mubr.bf16.gmra.mxu0 %v1865
    %v2898 = vpop.f32.mrf.mxu0
    %v2899 = vadd.f32 %v2477, %v2898
    %v2900 = vpop.f32.mrf.mxu0
    %v2901 = vadd.f32 %v2479, %v2900
    %v2902 = vpop.f32.mrf.mxu0
    %v2903 = vadd.f32 %v2481, %v2902
    %v2904 = vpop.f32.mrf.mxu0
    %v2905 = vadd.f32 %v2483, %v2904
    %2906 = vmatprep.mubr.bf16.mxu0 %v1868
    %2907 = vmatmul.mubr.bf16.gmra.mxu0 %v1867
    %v2908 = vpop.f32.mrf.mxu0
    %v2909 = vadd.f32 %v2487, %v2908
    %v2910 = vpop.f32.mrf.mxu0
    %v2911 = vadd.f32 %v2489, %v2910
    %v2912 = vpop.f32.mrf.mxu0
    %v2913 = vpop.f32.mrf.mxu0
    %2914 = vdwg.mxu0
    %s2915 = scalar_lea.vmem [#allocation4], 24
    %v2916 = vld [vmem:[%s2915] sm:$0xf]
    %v2917 = vld [vmem:[%s2915 + $0x4] sm:$0xf]
    %v2918 = vld [vmem:[%s2915 + $0x8] sm:$0xf]
    %v2922 = vunpack.c.l.b16 %v2916
    %v2923 = vunpack.c.l.b16 %v2917
    %v2924 = vunpack.c.l.b16 %v2918
    %v2925 = vpack.c.b16 %v2923, %v2922
    %v2926 = vpack.c.b16 %v2924, %v2924
    %v2928 = vsel %vm1800, %v2925, 0
    %v2931 = vsel %vm1800, %v2926, 0
    %2933 = vmatprep.subr.bf16.mxu0 0
    %2934 = vmatpush1.bf16.msra.mxu0 0
    %2935 = vmatprep.subr.bf16.mxu0 0
    %2936 = vmatpush1.bf16.msra.mxu0 0
    %2937 = vmatprep.subr.bf16.mxu0 0
    %2938 = vmatpush1.bf16.msra.mxu0 0
    %2939 = vmatprep.subr.bf16.mxu0 0
    %2940 = vmatpush1.bf16.msra.mxu0 0
    %2941 = vmatprep.subr.bf16.mxu0 0
    %2942 = vmatpush1.bf16.msra.mxu0 0
    %2943 = vmatprep.subr.bf16.mxu0 %v1812
    %2944 = vmatpush1.bf16.msra.mxu0 %v1809
    %2945 = vmatprep.subr.bf16.mxu0 %v1786
    %2946 = vmatpush1.bf16.msra.mxu0 %v1785
    %2947 = vmatprep.subr.bf16.mxu0 %v1784
    %2948 = vmatpush1.bf16.msra.mxu0 %v1783
    %2949 = vmatprep.subr.bf16.mxu0 0
    %2950 = vmatpush2.bf16.msra.mxu0 0
    %2951 = vmatprep.subr.bf16.mxu0 0
    %2952 = vmatpush2.bf16.msra.mxu0 0
    %2953 = vmatprep.subr.bf16.mxu0 0
    %2954 = vmatpush2.bf16.msra.mxu0 0
    %2955 = vmatprep.subr.bf16.mxu0 0
    %2956 = vmatpush2.bf16.msra.mxu0 0
    %2957 = vmatprep.subr.bf16.mxu0 0
    %2958 = vmatpush2.bf16.msra.mxu0 0
    %2959 = vmatprep.subr.bf16.mxu0 0
    %2960 = vmatpush2.bf16.msra.mxu0 0
    %2961 = vmatprep.subr.bf16.mxu0 0
    %2962 = vmatpush2.bf16.msra.mxu0 0
    %2963 = vmatprep.subr.bf16.mxu0 0
    %2964 = vmatpush2.bf16.msra.mxu0 0
    %2965 = vmatprep.mubr.bf16.mxu0 0
    %2966 = vmatmul.mubr.bf16.gmra.mxu0 %v2928
    %v2967 = vpop.f32.mrf.mxu0
    %v2968 = vadd.f32 0.0, %v2967
    %v2969 = vpop.f32.mrf.mxu0
    %v2970 = vadd.f32 0.0, %v2969
    %v2971 = vpop.f32.mrf.mxu0
    %v2972 = vadd.f32 0.0, %v2971
    %v2973 = vpop.f32.mrf.mxu0
    %v2974 = vadd.f32 0.0, %v2973
    %2975 = vmatprep.mubr.bf16.mxu0 0
    %2976 = vmatmul.mubr.bf16.gmra.mxu0 %v2931
    %v2977 = vpop.f32.mrf.mxu0
    %v2978 = vadd.f32 0.0, %v2977
    %v2979 = vpop.f32.mrf.mxu0
    %v2980 = vadd.f32 0.0, %v2979
    %v2981 = vpop.f32.mrf.mxu0
    %v2982 = vpop.f32.mrf.mxu0
    %2983 = vdwg.mxu0
    %v2984 = vpack.c.bf16 %v2972, %v2968
    %v2985 = vpack.c.bf16 %v2974, %v2970
    %v2986 = vpack.c.bf16 %v2978, %v2978
    %v2987 = vpack.c.bf16 %v2980, %v2980
    %s2988 = scalar_lea.vmem [#allocation6], 1024
    %v2989 = vld [vmem:[%s2988] sm:$0xff]
    %v2990 = vld [vmem:[%s2988 + $0x8] sm:$0xff]
    %v2991 = vld [vmem:[%s2988 + $0x10] sm:$0xff]
    %v2992 = vld [vmem:[%s2988 + $0x18] sm:$0xff]
    %v2993 = vld [vmem:[%s2988 + $0x20] sm:$0xff]
    %v2994 = vld [vmem:[%s2988 + $0x28] sm:$0xff]
    %v2995 = vld [vmem:[%s2988 + $0x30] sm:$0xff]
    %v2996 = vld [vmem:[%s2988 + $0x38] sm:$0xff]
    %v2997 = vld [vmem:[%s2988 + $0x40] sm:$0xff]
    %v2998 = vld [vmem:[%s2988 + $0x48] sm:$0xff]
    %v2999 = vld [vmem:[%s2988 + $0x50] sm:$0xff]
    %v3000 = vld [vmem:[%s2988 + $0x58] sm:$0xff]
    %v3001 = vld [vmem:[%s2988 + $0x60] sm:$0xff]
    %v3002 = vld [vmem:[%s2988 + $0x68] sm:$0xff]
    %v3003 = vld [vmem:[%s2988 + $0x70] sm:$0xff]
    %v3004 = vld [vmem:[%s2988 + $0x78] sm:$0xff]
    %v3005 = vld [vmem:[%s2988 + $0x80] sm:$0xff]
    %v3006 = vld [vmem:[%s2988 + $0x88] sm:$0xff]
    %v3007 = vld [vmem:[%s2988 + $0x90] sm:$0xff]
    %v3008 = vld [vmem:[%s2988 + $0x98] sm:$0xff]
    %v3009 = vld [vmem:[%s2988 + $0xa0] sm:$0xff]
    %v3010 = vld [vmem:[%s2988 + $0xa8] sm:$0xff]
    %v3011 = vld [vmem:[%s2988 + $0xb0] sm:$0xff]
    %v3012 = vld [vmem:[%s2988 + $0xb8] sm:$0xff]
    %v3013 = vld [vmem:[%s2988 + $0xc0] sm:$0xff]
    %v3014 = vld [vmem:[%s2988 + $0xc8] sm:$0xff]
    %v3015 = vld [vmem:[%s2988 + $0xd0] sm:$0xff]
    %v3016 = vld [vmem:[%s2988 + $0xd8] sm:$0xff]
    %v3017 = vld [vmem:[%s2988 + $0xe0] sm:$0xff]
    %v3018 = vld [vmem:[%s2988 + $0xe8] sm:$0xff]
    %v3019 = vld [vmem:[%s2988 + $0xf0] sm:$0xff]
    %v3020 = vld [vmem:[%s2988 + $0xf8] sm:$0xff]
    %v3021 = vld [vmem:[%s2988 + $0x100] sm:$0xff]
    %v3022 = vld [vmem:[%s2988 + $0x108] sm:$0xff]
    %v3023 = vld [vmem:[%s2988 + $0x110] sm:$0xff]
    %v3024 = vld [vmem:[%s2988 + $0x118] sm:$0xff]
    %v3025 = vld [vmem:[%s2988 + $0x120] sm:$0xff]
    %v3026 = vld [vmem:[%s2988 + $0x128] sm:$0xff]
    %v3027 = vld [vmem:[%s2988 + $0x130] sm:$0xff]
    %v3028 = vld [vmem:[%s2988 + $0x138] sm:$0xff]
    %v3029 = vld [vmem:[%s2988 + $0x140] sm:$0xff]
    %v3030 = vld [vmem:[%s2988 + $0x148] sm:$0xff]
    %v3031 = vld [vmem:[%s2988 + $0x150] sm:$0xff]
    %v3032 = vld [vmem:[%s2988 + $0x158] sm:$0xff]
    %v3033 = vld [vmem:[%s2988 + $0x160] sm:$0xff]
    %v3034 = vld [vmem:[%s2988 + $0x168] sm:$0xff]
    %v3035 = vld [vmem:[%s2988 + $0x170] sm:$0xff]
    %v3036 = vld [vmem:[%s2988 + $0x178] sm:$0xff]
    %v3037 = vld [vmem:[%s2988 + $0x180] sm:$0xff]
    %v3038 = vld [vmem:[%s2988 + $0x188] sm:$0xff]
    %v3039 = vld [vmem:[%s2988 + $0x190] sm:$0xff]
    %v3040 = vld [vmem:[%s2988 + $0x198] sm:$0xff]
    %v3041 = vld [vmem:[%s2988 + $0x1a0] sm:$0xff]
    %v3042 = vld [vmem:[%s2988 + $0x1a8] sm:$0xff]
    %v3043 = vld [vmem:[%s2988 + $0x1b0] sm:$0xff]
    %v3044 = vld [vmem:[%s2988 + $0x1b8] sm:$0xff]
    %v3045 = vld [vmem:[%s2988 + $0x1c0] sm:$0xff]
    %v3046 = vld [vmem:[%s2988 + $0x1c8] sm:$0xff]
    %v3047 = vld [vmem:[%s2988 + $0x1d0] sm:$0xff]
    %v3048 = vld [vmem:[%s2988 + $0x1d8] sm:$0xff]
    %v3049 = vld [vmem:[%s2988 + $0x1e0] sm:$0xff]
    %v3050 = vld [vmem:[%s2988 + $0x1e8] sm:$0xff]
    %v3051 = vld [vmem:[%s2988 + $0x1f0] sm:$0xff]
    %v3052 = vld [vmem:[%s2988 + $0x1f8] sm:$0xff]
    %v3117 = vunpack.c.l.b16 %v2989
    %v3118 = vunpack.c.h.b16 %v2989
    %v3119 = vunpack.c.l.b16 %v2990
    %v3120 = vunpack.c.h.b16 %v2990
    %v3121 = vunpack.c.l.b16 %v2991
    %v3122 = vunpack.c.h.b16 %v2991
    %v3123 = vunpack.c.l.b16 %v2992
    %v3124 = vunpack.c.h.b16 %v2992
    %v3125 = vunpack.c.l.b16 %v2993
    %v3126 = vunpack.c.h.b16 %v2993
    %v3127 = vunpack.c.l.b16 %v2994
    %v3128 = vunpack.c.h.b16 %v2994
    %v3129 = vunpack.c.l.b16 %v2995
    %v3130 = vunpack.c.h.b16 %v2995
    %v3131 = vunpack.c.l.b16 %v2996
    %v3132 = vunpack.c.h.b16 %v2996
    %v3133 = vunpack.c.l.b16 %v2997
    %v3134 = vunpack.c.h.b16 %v2997
    %v3135 = vunpack.c.l.b16 %v2998
    %v3136 = vunpack.c.h.b16 %v2998
    %v3137 = vunpack.c.l.b16 %v2999
    %v3138 = vunpack.c.h.b16 %v2999
    %v3139 = vunpack.c.l.b16 %v3000
    %v3140 = vunpack.c.h.b16 %v3000
    %v3141 = vunpack.c.l.b16 %v3001
    %v3142 = vunpack.c.h.b16 %v3001
    %v3143 = vunpack.c.l.b16 %v3002
    %v3144 = vunpack.c.h.b16 %v3002
    %v3145 = vunpack.c.l.b16 %v3003
    %v3146 = vunpack.c.h.b16 %v3003
    %v3147 = vunpack.c.l.b16 %v3004
    %v3148 = vunpack.c.h.b16 %v3004
    %v3149 = vunpack.c.l.b16 %v3005
    %v3150 = vunpack.c.h.b16 %v3005
    %v3151 = vunpack.c.l.b16 %v3006
    %v3152 = vunpack.c.h.b16 %v3006
    %v3153 = vunpack.c.l.b16 %v3007
    %v3154 = vunpack.c.h.b16 %v3007
    %v3155 = vunpack.c.l.b16 %v3008
    %v3156 = vunpack.c.h.b16 %v3008
    %v3157 = vunpack.c.l.b16 %v3009
    %v3158 = vunpack.c.h.b16 %v3009
    %v3159 = vunpack.c.l.b16 %v3010
    %v3160 = vunpack.c.h.b16 %v3010
    %v3161 = vunpack.c.l.b16 %v3011
    %v3162 = vunpack.c.h.b16 %v3011
    %v3163 = vunpack.c.l.b16 %v3012
    %v3164 = vunpack.c.h.b16 %v3012
    %v3165 = vunpack.c.l.b16 %v3013
    %v3166 = vunpack.c.h.b16 %v3013
    %v3167 = vunpack.c.l.b16 %v3014
    %v3168 = vunpack.c.h.b16 %v3014
    %v3169 = vunpack.c.l.b16 %v3015
    %v3170 = vunpack.c.h.b16 %v3015
    %v3171 = vunpack.c.l.b16 %v3016
    %v3172 = vunpack.c.h.b16 %v3016
    %v3173 = vunpack.c.l.b16 %v3017
    %v3174 = vunpack.c.h.b16 %v3017
    %v3175 = vunpack.c.l.b16 %v3018
    %v3176 = vunpack.c.h.b16 %v3018
    %v3177 = vunpack.c.l.b16 %v3019
    %v3178 = vunpack.c.h.b16 %v3019
    %v3179 = vunpack.c.l.b16 %v3020
    %v3180 = vunpack.c.h.b16 %v3020
    %v3181 = vunpack.c.l.b16 %v3021
    %v3182 = vunpack.c.h.b16 %v3021
    %v3183 = vunpack.c.l.b16 %v3022
    %v3184 = vunpack.c.h.b16 %v3022
    %v3185 = vunpack.c.l.b16 %v3023
    %v3186 = vunpack.c.h.b16 %v3023
    %v3187 = vunpack.c.l.b16 %v3024
    %v3188 = vunpack.c.h.b16 %v3024
    %v3189 = vunpack.c.l.b16 %v3025
    %v3190 = vunpack.c.h.b16 %v3025
    %v3191 = vunpack.c.l.b16 %v3026
    %v3192 = vunpack.c.h.b16 %v3026
    %v3193 = vunpack.c.l.b16 %v3027
    %v3194 = vunpack.c.h.b16 %v3027
    %v3195 = vunpack.c.l.b16 %v3028
    %v3196 = vunpack.c.h.b16 %v3028
    %v3197 = vunpack.c.l.b16 %v3029
    %v3198 = vunpack.c.h.b16 %v3029
    %v3199 = vunpack.c.l.b16 %v3030
    %v3200 = vunpack.c.h.b16 %v3030
    %v3201 = vunpack.c.l.b16 %v3031
    %v3202 = vunpack.c.h.b16 %v3031
    %v3203 = vunpack.c.l.b16 %v3032
    %v3204 = vunpack.c.h.b16 %v3032
    %v3205 = vunpack.c.l.b16 %v3033
    %v3206 = vunpack.c.h.b16 %v3033
    %v3207 = vunpack.c.l.b16 %v3034
    %v3208 = vunpack.c.h.b16 %v3034
    %v3209 = vunpack.c.l.b16 %v3035
    %v3210 = vunpack.c.h.b16 %v3035
    %v3211 = vunpack.c.l.b16 %v3036
    %v3212 = vunpack.c.h.b16 %v3036
    %v3213 = vunpack.c.l.b16 %v3037
    %v3214 = vunpack.c.h.b16 %v3037
    %v3215 = vunpack.c.l.b16 %v3038
    %v3216 = vunpack.c.h.b16 %v3038
    %v3217 = vunpack.c.l.b16 %v3039
    %v3218 = vunpack.c.h.b16 %v3039
    %v3219 = vunpack.c.l.b16 %v3040
    %v3220 = vunpack.c.h.b16 %v3040
    %v3221 = vunpack.c.l.b16 %v3041
    %v3222 = vunpack.c.h.b16 %v3041
    %v3223 = vunpack.c.l.b16 %v3042
    %v3224 = vunpack.c.h.b16 %v3042
    %v3225 = vunpack.c.l.b16 %v3043
    %v3226 = vunpack.c.h.b16 %v3043
    %v3227 = vunpack.c.l.b16 %v3044
    %v3228 = vunpack.c.h.b16 %v3044
    %v3229 = vunpack.c.l.b16 %v3045
    %v3230 = vunpack.c.h.b16 %v3045
    %v3231 = vunpack.c.l.b16 %v3046
    %v3232 = vunpack.c.h.b16 %v3046
    %v3233 = vunpack.c.l.b16 %v3047
    %v3234 = vunpack.c.h.b16 %v3047
    %v3235 = vunpack.c.l.b16 %v3048
    %v3236 = vunpack.c.h.b16 %v3048
    %v3237 = vunpack.c.l.b16 %v3049
    %v3238 = vunpack.c.h.b16 %v3049
    %v3239 = vunpack.c.l.b16 %v3050
    %v3240 = vunpack.c.h.b16 %v3050
    %v3241 = vunpack.c.l.b16 %v3051
    %v3242 = vunpack.c.h.b16 %v3051
    %v3243 = vunpack.c.l.b16 %v3052
    %v3244 = vunpack.c.h.b16 %v3052
    %v3245 = vpack.c.b16 %v3121, %v3117
    %v3246 = vpack.c.b16 %v3122, %v3118
    %v3247 = vpack.c.b16 %v3123, %v3119
    %v3248 = vpack.c.b16 %v3124, %v3120
    %v3249 = vpack.c.b16 %v3129, %v3125
    %v3250 = vpack.c.b16 %v3130, %v3126
    %v3251 = vpack.c.b16 %v3131, %v3127
    %v3252 = vpack.c.b16 %v3132, %v3128
    %v3253 = vpack.c.b16 %v3137, %v3133
    %v3254 = vpack.c.b16 %v3138, %v3134
    %v3255 = vpack.c.b16 %v3139, %v3135
    %v3256 = vpack.c.b16 %v3140, %v3136
    %v3257 = vpack.c.b16 %v3145, %v3141
    %v3258 = vpack.c.b16 %v3146, %v3142
    %v3259 = vpack.c.b16 %v3147, %v3143
    %v3260 = vpack.c.b16 %v3148, %v3144
    %v3261 = vpack.c.b16 %v3153, %v3149
    %v3262 = vpack.c.b16 %v3154, %v3150
    %v3263 = vpack.c.b16 %v3155, %v3151
    %v3264 = vpack.c.b16 %v3156, %v3152
    %v3265 = vpack.c.b16 %v3161, %v3157
    %v3266 = vpack.c.b16 %v3162, %v3158
    %v3267 = vpack.c.b16 %v3163, %v3159
    %v3268 = vpack.c.b16 %v3164, %v3160
    %v3269 = vpack.c.b16 %v3169, %v3165
    %v3270 = vpack.c.b16 %v3170, %v3166
    %v3271 = vpack.c.b16 %v3171, %v3167
    %v3272 = vpack.c.b16 %v3172, %v3168
    %v3273 = vpack.c.b16 %v3177, %v3173
    %v3274 = vpack.c.b16 %v3178, %v3174
    %v3275 = vpack.c.b16 %v3179, %v3175
    %v3276 = vpack.c.b16 %v3180, %v3176
    %v3277 = vpack.c.b16 %v3185, %v3181
    %v3278 = vpack.c.b16 %v3186, %v3182
    %v3279 = vpack.c.b16 %v3187, %v3183
    %v3280 = vpack.c.b16 %v3188, %v3184
    %v3281 = vpack.c.b16 %v3193, %v3189
    %v3282 = vpack.c.b16 %v3194, %v3190
    %v3283 = vpack.c.b16 %v3195, %v3191
    %v3284 = vpack.c.b16 %v3196, %v3192
    %v3285 = vpack.c.b16 %v3201, %v3197
    %v3286 = vpack.c.b16 %v3202, %v3198
    %v3287 = vpack.c.b16 %v3203, %v3199
    %v3288 = vpack.c.b16 %v3204, %v3200
    %v3289 = vpack.c.b16 %v3209, %v3205
    %v3290 = vpack.c.b16 %v3210, %v3206
    %v3291 = vpack.c.b16 %v3211, %v3207
    %v3292 = vpack.c.b16 %v3212, %v3208
    %v3293 = vpack.c.b16 %v3217, %v3213
    %v3294 = vpack.c.b16 %v3218, %v3214
    %v3295 = vpack.c.b16 %v3219, %v3215
    %v3296 = vpack.c.b16 %v3220, %v3216
    %v3297 = vpack.c.b16 %v3225, %v3221
    %v3298 = vpack.c.b16 %v3226, %v3222
    %v3299 = vpack.c.b16 %v3227, %v3223
    %v3300 = vpack.c.b16 %v3228, %v3224
    %v3301 = vpack.c.b16 %v3233, %v3229
    %v3302 = vpack.c.b16 %v3234, %v3230
    %v3303 = vpack.c.b16 %v3235, %v3231
    %v3304 = vpack.c.b16 %v3236, %v3232
    %v3305 = vpack.c.b16 %v3241, %v3237
    %v3306 = vpack.c.b16 %v3242, %v3238
    %v3307 = vpack.c.b16 %v3243, %v3239
    %v3308 = vpack.c.b16 %v3244, %v3240
    %3373 = vmatprep.subr.bf16.mxu0 %v3274
    %3374 = vmatpush1.bf16.msra.mxu0 %v3273
    %3375 = vmatprep.subr.bf16.mxu0 %v3270
    %3376 = vmatpush1.bf16.msra.mxu0 %v3269
    %3377 = vmatprep.subr.bf16.mxu0 %v3266
    %3378 = vmatpush1.bf16.msra.mxu0 %v3265
    %3379 = vmatprep.subr.bf16.mxu0 %v3262
    %3380 = vmatpush1.bf16.msra.mxu0 %v3261
    %3381 = vmatprep.subr.bf16.mxu0 %v3258
    %3382 = vmatpush1.bf16.msra.mxu0 %v3257
    %3383 = vmatprep.subr.bf16.mxu0 %v3254
    %3384 = vmatpush1.bf16.msra.mxu0 %v3253
    %3385 = vmatprep.subr.bf16.mxu0 %v3250
    %3386 = vmatpush1.bf16.msra.mxu0 %v3249
    %3387 = vmatprep.subr.bf16.mxu0 %v3246
    %3388 = vmatpush1.bf16.msra.mxu0 %v3245
    %3389 = vmatprep.subr.bf16.mxu0 %v3306
    %3390 = vmatpush2.bf16.msra.mxu0 %v3305
    %3391 = vmatprep.subr.bf16.mxu0 %v3302
    %3392 = vmatpush2.bf16.msra.mxu0 %v3301
    %3393 = vmatprep.subr.bf16.mxu0 %v3298
    %3394 = vmatpush2.bf16.msra.mxu0 %v3297
    %3395 = vmatprep.subr.bf16.mxu0 %v3294
    %3396 = vmatpush2.bf16.msra.mxu0 %v3293
    %3397 = vmatprep.subr.bf16.mxu0 %v3290
    %3398 = vmatpush2.bf16.msra.mxu0 %v3289
    %3399 = vmatprep.subr.bf16.mxu0 %v3286
    %3400 = vmatpush2.bf16.msra.mxu0 %v3285
    %3401 = vmatprep.subr.bf16.mxu0 %v3282
    %3402 = vmatpush2.bf16.msra.mxu0 %v3281
    %3403 = vmatprep.subr.bf16.mxu0 %v3278
    %3404 = vmatpush2.bf16.msra.mxu0 %v3277
    %3405 = vmatprep.mubr.bf16.mxu0 %v2985
    %3406 = vmatmul.mubr.bf16.gmra.mxu0 %v2984
    %v3407 = vpop.f32.mrf.mxu0
    %v3408 = vadd.f32 0.0, %v3407
    %v3409 = vpop.f32.mrf.mxu0
    %v3410 = vadd.f32 0.0, %v3409
    %v3411 = vpop.f32.mrf.mxu0
    %v3412 = vadd.f32 0.0, %v3411
    %v3413 = vpop.f32.mrf.mxu0
    %v3414 = vadd.f32 0.0, %v3413
    %3415 = vmatprep.mubr.bf16.mxu0 %v2987
    %3416 = vmatmul.mubr.bf16.gmra.mxu0 %v2986
    %v3417 = vpop.f32.mrf.mxu0
    %v3418 = vadd.f32 0.0, %v3417
    %v3419 = vpop.f32.mrf.mxu0
    %v3420 = vadd.f32 0.0, %v3419
    %v3421 = vpop.f32.mrf.mxu0
    %v3422 = vpop.f32.mrf.mxu0
    %3423 = vdwg.mxu0
    %3424 = vmatprep.subr.bf16.mxu0 %v3276
    %3425 = vmatpush1.bf16.msra.mxu0 %v3275
    %3426 = vmatprep.subr.bf16.mxu0 %v3272
    %3427 = vmatpush1.bf16.msra.mxu0 %v3271
    %3428 = vmatprep.subr.bf16.mxu0 %v3268
    %3429 = vmatpush1.bf16.msra.mxu0 %v3267
    %3430 = vmatprep.subr.bf16.mxu0 %v3264
    %3431 = vmatpush1.bf16.msra.mxu0 %v3263
    %3432 = vmatprep.subr.bf16.mxu0 %v3260
    %3433 = vmatpush1.bf16.msra.mxu0 %v3259
    %3434 = vmatprep.subr.bf16.mxu0 %v3256
    %3435 = vmatpush1.bf16.msra.mxu0 %v3255
    %3436 = vmatprep.subr.bf16.mxu0 %v3252
    %3437 = vmatpush1.bf16.msra.mxu0 %v3251
    %3438 = vmatprep.subr.bf16.mxu0 %v3248
    %3439 = vmatpush1.bf16.msra.mxu0 %v3247
    %3440 = vmatprep.subr.bf16.mxu0 %v3308
    %3441 = vmatpush2.bf16.msra.mxu0 %v3307
    %3442 = vmatprep.subr.bf16.mxu0 %v3304
    %3443 = vmatpush2.bf16.msra.mxu0 %v3303
    %3444 = vmatprep.subr.bf16.mxu0 %v3300
    %3445 = vmatpush2.bf16.msra.mxu0 %v3299
    %3446 = vmatprep.subr.bf16.mxu0 %v3296
    %3447 = vmatpush2.bf16.msra.mxu0 %v3295
    %3448 = vmatprep.subr.bf16.mxu0 %v3292
    %3449 = vmatpush2.bf16.msra.mxu0 %v3291
    %3450 = vmatprep.subr.bf16.mxu0 %v3288
    %3451 = vmatpush2.bf16.msra.mxu0 %v3287
    %3452 = vmatprep.subr.bf16.mxu0 %v3284
    %3453 = vmatpush2.bf16.msra.mxu0 %v3283
    %3454 = vmatprep.subr.bf16.mxu0 %v3280
    %3455 = vmatpush2.bf16.msra.mxu0 %v3279
    %3456 = vmatprep.mubr.bf16.mxu0 %v2985
    %3457 = vmatmul.mubr.bf16.gmra.mxu0 %v2984
    %v3458 = vpop.f32.mrf.mxu0
    %v3459 = vadd.f32 0.0, %v3458
    %v3460 = vpop.f32.mrf.mxu0
    %v3461 = vadd.f32 0.0, %v3460
    %v3462 = vpop.f32.mrf.mxu0
    %v3463 = vadd.f32 0.0, %v3462
    %v3464 = vpop.f32.mrf.mxu0
    %v3465 = vadd.f32 0.0, %v3464
    %3466 = vmatprep.mubr.bf16.mxu0 %v2987
    %3467 = vmatmul.mubr.bf16.gmra.mxu0 %v2986
    %v3468 = vpop.f32.mrf.mxu0
    %v3469 = vadd.f32 0.0, %v3468
    %v3470 = vpop.f32.mrf.mxu0
    %v3471 = vadd.f32 0.0, %v3470
    %v3472 = vpop.f32.mrf.mxu0
    %v3473 = vpop.f32.mrf.mxu0
    %3474 = vdwg.mxu0
    %v3475 = vadd.f32 %v2848, %v3408
    %v3476 = vadd.f32 %v2850, %v3410
    %v3477 = vadd.f32 %v2899, %v3459
    %v3478 = vadd.f32 %v2901, %v3461
    %v3479 = vadd.f32 %v2852, %v3412
    %v3480 = vadd.f32 %v2854, %v3414
    %v3481 = vadd.f32 %v2903, %v3463
    %v3482 = vadd.f32 %v2905, %v3465
    %v3483 = vadd.f32 %v2858, %v3418
    %v3484 = vadd.f32 %v2860, %v3420
    %v3485 = vadd.f32 %v2909, %v3469
    %v3486 = vadd.f32 %v2911, %v3471
    %v3487 = vld [vmem:[%s1 + $0x3] sm:$0xf]
    %v3489 = vlaneseq
    %v3490 = vshrl.u32 %v3489, 7
    %v3491 = vsub.s32 0, %v3490
    %v3492 = vrot.slane %v3487, %v3491
    %v3493 = vlaneseq
    %v3494 = vshrl.u32 %v3493, 7
    %v3495 = vsub.s32 1, %v3494
    %v3496 = vrot.slane %v3487, %v3495
    %v3497 = vlaneseq
    %v3498 = vshrl.u32 %v3497, 7
    %v3499 = vsub.s32 2, %v3498
    %v3500 = vrot.slane %v3487, %v3499
    %v3501 = vlaneseq
    %v3502 = vshrl.u32 %v3501, 7
    %v3503 = vsub.s32 3, %v3502
    %v3504 = vrot.slane %v3487, %v3503
    %v3509 = vadd.f32 %v3475, %v3492
    %v3510 = vadd.f32 %v3476, %v3496
    %v3511 = vadd.f32 %v3477, %v3500
    %v3512 = vadd.f32 %v3478, %v3504
    %v3513 = vadd.f32 %v3479, %v3492
    %v3514 = vadd.f32 %v3480, %v3496
    %v3515 = vadd.f32 %v3481, %v3500
    %v3516 = vadd.f32 %v3482, %v3504
    %v3517 = vadd.f32 %v3483, %v3492
    %v3518 = vadd.f32 %v3484, %v3496
    %v3519 = vadd.f32 %v3485, %v3500
    %v3520 = vadd.f32 %v3486, %v3504
    %vm3521 = vcmp.ge.f32.partialorder %v3509, 0.0
    %vm3522 = vcmp.ge.f32.partialorder %v3510, 0.0
    %vm3523 = vcmp.ge.f32.partialorder %v3511, 0.0
    %vm3524 = vcmp.ge.f32.partialorder %v3512, 0.0
    %vm3525 = vcmp.ge.f32.partialorder %v3513, 0.0
    %vm3526 = vcmp.ge.f32.partialorder %v3514, 0.0
    %vm3527 = vcmp.ge.f32.partialorder %v3515, 0.0
    %vm3528 = vcmp.ge.f32.partialorder %v3516, 0.0
    %vm3529 = vcmp.ge.f32.partialorder %v3517, 0.0
    %vm3530 = vcmp.ge.f32.partialorder %v3518, 0.0
    %vm3531 = vcmp.ge.f32.partialorder %v3519, 0.0
    %vm3532 = vcmp.ge.f32.partialorder %v3520, 0.0
    %v3533 = vmul.f32 %v3509, 0.1
    %v3534 = vmul.f32 %v3510, 0.1
    %v3535 = vmul.f32 %v3511, 0.1
    %v3536 = vmul.f32 %v3512, 0.1
    %v3537 = vmul.f32 %v3513, 0.1
    %v3538 = vmul.f32 %v3514, 0.1
    %v3539 = vmul.f32 %v3515, 0.1
    %v3540 = vmul.f32 %v3516, 0.1
    %v3541 = vmul.f32 %v3517, 0.1
    %v3542 = vmul.f32 %v3518, 0.1
    %v3543 = vmul.f32 %v3519, 0.1
    %v3544 = vmul.f32 %v3520, 0.1
    %v3545 = vsel %vm3521, %v3509, %v3533
    %v3546 = vsel %vm3522, %v3510, %v3534
    %v3547 = vsel %vm3523, %v3511, %v3535
    %v3548 = vsel %vm3524, %v3512, %v3536
    %v3549 = vsel %vm3525, %v3513, %v3537
    %v3550 = vsel %vm3526, %v3514, %v3538
    %v3551 = vsel %vm3527, %v3515, %v3539
    %v3552 = vsel %vm3528, %v3516, %v3540
    %v3553 = vsel %vm3529, %v3517, %v3541
    %v3554 = vsel %vm3530, %v3518, %v3542
    %v3555 = vsel %vm3531, %v3519, %v3543
    %v3556 = vsel %vm3532, %v3520, %v3544
    %3557 = vst [vmem:[%s12] sm:$0xff] %v3545
    %3558 = vst [vmem:[%s12 + $0x8] sm:$0xff] %v3546
    %3559 = vst [vmem:[%s12 + $0x10] sm:$0xff] %v3547
    %3560 = vst [vmem:[%s12 + $0x18] sm:$0xff] %v3548
    %3561 = vst [vmem:[%s12 + $0x20] sm:$0xff] %v3549
    %3562 = vst [vmem:[%s12 + $0x28] sm:$0xff] %v3550
    %3563 = vst [vmem:[%s12 + $0x30] sm:$0xff] %v3551
    %3564 = vst [vmem:[%s12 + $0x38] sm:$0xff] %v3552
    %3565 = vst [vmem:[%s12 + $0x40] sm:$0xff] %v3553
    %3566 = vst [vmem:[%s12 + $0x48] sm:$0xff] %v3554
    %3567 = vst [vmem:[%s12 + $0x50] sm:$0xff] %v3555
    %3568 = vst [vmem:[%s12 + $0x58] sm:$0xff] %v3556
    %v3569 = vpack.c.bf16 %v3549, %v3545
    %v3570 = vpack.c.bf16 %v3550, %v3546
    %v3571 = vpack.c.bf16 %v3551, %v3547
    %v3572 = vpack.c.bf16 %v3552, %v3548
    %v3573 = vpack.c.bf16 %v3553, %v3553
    %v3574 = vpack.c.bf16 %v3554, %v3554
    %v3575 = vpack.c.bf16 %v3555, %v3555
    %v3576 = vpack.c.bf16 %v3556, %v3556
    %v3577 = vld [vmem:[%s8] sm:$0xf]
    %v3578 = vld [vmem:[%s8 + $0x4] sm:$0xf]
    %v3579 = vld [vmem:[%s8 + $0x8] sm:$0xf]
    %v3583 = vunpack.c.l.b16 %v3577
    %v3584 = vunpack.c.l.b16 %v3578
    %v3585 = vunpack.c.l.b16 %v3579
    %v3586 = vpack.c.b16 %v3584, %v3583
    %v3587 = vpack.c.b16 %v3585, %v3585
    %vm3588 = vcmask 195584
    %v3590 = vsel %vm3588, %v3586, 0
    %v3593 = vsel %vm3588, %v3587, 0
    %v3596 = vsel %vm1807, %v3573, 0
    %v3599 = vsel %vm1807, %v3574, 0
    %v3602 = vsel %vm1807, %v3575, 0
    %v3605 = vsel %vm1807, %v3576, 0
    %3607 = vmatprep.subr.bf16.mxu0 0
    %3608 = vmatpush1.bf16.msra.mxu0 0
    %3609 = vmatprep.subr.bf16.mxu0 0
    %3610 = vmatpush1.bf16.msra.mxu0 0
    %3611 = vmatprep.subr.bf16.mxu0 0
    %3612 = vmatpush1.bf16.msra.mxu0 0
    %3613 = vmatprep.subr.bf16.mxu0 0
    %3614 = vmatpush1.bf16.msra.mxu0 0
    %3615 = vmatprep.subr.bf16.mxu0 0
    %3616 = vmatpush1.bf16.msra.mxu0 0
    %3617 = vmatprep.subr.bf16.mxu0 0
    %3618 = vmatpush1.bf16.msra.mxu0 0
    %3619 = vmatprep.subr.bf16.mxu0 %v3599
    %3620 = vmatpush1.bf16.msra.mxu0 %v3596
    %3621 = vmatprep.subr.bf16.mxu0 %v3570
    %3622 = vmatpush1.bf16.msra.mxu0 %v3569
    %3623 = vmatprep.subr.bf16.mxu0 0
    %3624 = vmatpush2.bf16.msra.mxu0 0
    %3625 = vmatprep.subr.bf16.mxu0 0
    %3626 = vmatpush2.bf16.msra.mxu0 0
    %3627 = vmatprep.subr.bf16.mxu0 0
    %3628 = vmatpush2.bf16.msra.mxu0 0
    %3629 = vmatprep.subr.bf16.mxu0 0
    %3630 = vmatpush2.bf16.msra.mxu0 0
    %3631 = vmatprep.subr.bf16.mxu0 0
    %3632 = vmatpush2.bf16.msra.mxu0 0
    %3633 = vmatprep.subr.bf16.mxu0 0
    %3634 = vmatpush2.bf16.msra.mxu0 0
    %3635 = vmatprep.subr.bf16.mxu0 0
    %3636 = vmatpush2.bf16.msra.mxu0 0
    %3637 = vmatprep.subr.bf16.mxu0 0
    %3638 = vmatpush2.bf16.msra.mxu0 0
    %3639 = vmatprep.mubr.bf16.mxu0 0
    %3640 = vmatmul.mubr.bf16.gmra.mxu0 %v3590
    %v3641 = vpop.f32.mrf.mxu0
    %v3642 = vadd.f32 0.0, %v3641
    %v3643 = vpop.f32.mrf.mxu0
    %v3644 = vadd.f32 0.0, %v3643
    %v3645 = vpop.f32.mrf.mxu0
    %v3646 = vadd.f32 0.0, %v3645
    %v3647 = vpop.f32.mrf.mxu0
    %v3648 = vadd.f32 0.0, %v3647
    %3649 = vmatprep.mubr.bf16.mxu0 0
    %3650 = vmatmul.mubr.bf16.gmra.mxu0 %v3593
    %v3651 = vpop.f32.mrf.mxu0
    %v3652 = vadd.f32 0.0, %v3651
    %v3653 = vpop.f32.mrf.mxu0
    %v3654 = vadd.f32 0.0, %v3653
    %v3655 = vpop.f32.mrf.mxu0
    %v3656 = vpop.f32.mrf.mxu0
    %3657 = vdwg.mxu0
    %3658 = vmatprep.subr.bf16.mxu0 0
    %3659 = vmatpush1.bf16.msra.mxu0 0
    %3660 = vmatprep.subr.bf16.mxu0 0
    %3661 = vmatpush1.bf16.msra.mxu0 0
    %3662 = vmatprep.subr.bf16.mxu0 0
    %3663 = vmatpush1.bf16.msra.mxu0 0
    %3664 = vmatprep.subr.bf16.mxu0 0
    %3665 = vmatpush1.bf16.msra.mxu0 0
    %3666 = vmatprep.subr.bf16.mxu0 0
    %3667 = vmatpush1.bf16.msra.mxu0 0
    %3668 = vmatprep.subr.bf16.mxu0 0
    %3669 = vmatpush1.bf16.msra.mxu0 0
    %3670 = vmatprep.subr.bf16.mxu0 %v3605
    %3671 = vmatpush1.bf16.msra.mxu0 %v3602
    %3672 = vmatprep.subr.bf16.mxu0 %v3572
    %3673 = vmatpush1.bf16.msra.mxu0 %v3571
    %3674 = vmatprep.subr.bf16.mxu0 0
    %3675 = vmatpush2.bf16.msra.mxu0 0
    %3676 = vmatprep.subr.bf16.mxu0 0
    %3677 = vmatpush2.bf16.msra.mxu0 0
    %3678 = vmatprep.subr.bf16.mxu0 0
    %3679 = vmatpush2.bf16.msra.mxu0 0
    %3680 = vmatprep.subr.bf16.mxu0 0
    %3681 = vmatpush2.bf16.msra.mxu0 0
    %3682 = vmatprep.subr.bf16.mxu0 0
    %3683 = vmatpush2.bf16.msra.mxu0 0
    %3684 = vmatprep.subr.bf16.mxu0 0
    %3685 = vmatpush2.bf16.msra.mxu0 0
    %3686 = vmatprep.subr.bf16.mxu0 0
    %3687 = vmatpush2.bf16.msra.mxu0 0
    %3688 = vmatprep.subr.bf16.mxu0 0
    %3689 = vmatpush2.bf16.msra.mxu0 0
    %3690 = vmatprep.mubr.bf16.mxu0 0
    %3691 = vmatmul.mubr.bf16.gmra.mxu0 %v3590
    %v3692 = vpop.f32.mrf.mxu0
    %v3693 = vadd.f32 0.0, %v3692
    %v3694 = vpop.f32.mrf.mxu0
    %v3695 = vadd.f32 0.0, %v3694
    %v3696 = vpop.f32.mrf.mxu0
    %v3697 = vadd.f32 0.0, %v3696
    %v3698 = vpop.f32.mrf.mxu0
    %v3699 = vadd.f32 0.0, %v3698
    %3700 = vmatprep.mubr.bf16.mxu0 0
    %3701 = vmatmul.mubr.bf16.gmra.mxu0 %v3593
    %v3702 = vpop.f32.mrf.mxu0
    %v3703 = vadd.f32 0.0, %v3702
    %v3704 = vpop.f32.mrf.mxu0
    %v3705 = vadd.f32 0.0, %v3704
    %v3706 = vpop.f32.mrf.mxu0
    %v3707 = vpop.f32.mrf.mxu0
    %3708 = vdwg.mxu0
    %v3709 = vpack.c.bf16 %v3646, %v3642
    %v3710 = vpack.c.bf16 %v3648, %v3644
    %v3711 = vpack.c.bf16 %v3697, %v3693
    %v3712 = vpack.c.bf16 %v3699, %v3695
    %v3713 = vpack.c.bf16 %v3652, %v3652
    %v3714 = vpack.c.bf16 %v3654, %v3654
    %v3715 = vpack.c.bf16 %v3703, %v3703
    %v3716 = vpack.c.bf16 %v3705, %v3705
    %v3717 = vld [vmem:[#allocation7] sm:$0xf]
    %v3718 = vld [vmem:[#allocation7 + $0x4] sm:$0xf]
    %v3719 = vld [vmem:[#allocation7 + $0x8] sm:$0xf]
    %v3720 = vld [vmem:[#allocation7 + $0xc] sm:$0xf]
    %v3721 = vld [vmem:[#allocation7 + $0x10] sm:$0xf]
    %v3722 = vld [vmem:[#allocation7 + $0x14] sm:$0xf]
    %v3723 = vld [vmem:[#allocation7 + $0x18] sm:$0xf]
    %v3724 = vld [vmem:[#allocation7 + $0x1c] sm:$0xf]
    %v3725 = vld [vmem:[#allocation7 + $0x20] sm:$0xf]
    %v3726 = vld [vmem:[#allocation7 + $0x24] sm:$0xf]
    %v3727 = vld [vmem:[#allocation7 + $0x28] sm:$0xf]
    %v3728 = vld [vmem:[#allocation7 + $0x2c] sm:$0xf]
    %v3729 = vld [vmem:[#allocation7 + $0x30] sm:$0xf]
    %v3730 = vld [vmem:[#allocation7 + $0x34] sm:$0xf]
    %v3731 = vld [vmem:[#allocation7 + $0x38] sm:$0xf]
    %v3732 = vld [vmem:[#allocation7 + $0x3c] sm:$0xf]
    %v3733 = vld [vmem:[#allocation7 + $0x40] sm:$0xf]
    %v3734 = vld [vmem:[#allocation7 + $0x44] sm:$0xf]
    %v3735 = vld [vmem:[#allocation7 + $0x48] sm:$0xf]
    %v3736 = vld [vmem:[#allocation7 + $0x4c] sm:$0xf]
    %v3737 = vld [vmem:[#allocation7 + $0x50] sm:$0xf]
    %v3738 = vld [vmem:[#allocation7 + $0x54] sm:$0xf]
    %v3739 = vld [vmem:[#allocation7 + $0x58] sm:$0xf]
    %v3740 = vld [vmem:[#allocation7 + $0x5c] sm:$0xf]
    %v3741 = vld [vmem:[#allocation7 + $0x60] sm:$0xf]
    %v3742 = vld [vmem:[#allocation7 + $0x64] sm:$0xf]
    %v3743 = vld [vmem:[#allocation7 + $0x68] sm:$0xf]
    %v3744 = vld [vmem:[#allocation7 + $0x6c] sm:$0xf]
    %v3745 = vld [vmem:[#allocation7 + $0x70] sm:$0xf]
    %v3746 = vld [vmem:[#allocation7 + $0x74] sm:$0xf]
    %v3747 = vld [vmem:[#allocation7 + $0x78] sm:$0xf]
    %v3748 = vld [vmem:[#allocation7 + $0x7c] sm:$0xf]
    %v3749 = vld [vmem:[#allocation7 + $0x80] sm:$0xf]
    %v3750 = vld [vmem:[#allocation7 + $0x84] sm:$0xf]
    %v3751 = vld [vmem:[#allocation7 + $0x88] sm:$0xf]
    %v3752 = vld [vmem:[#allocation7 + $0x8c] sm:$0xf]
    %v3753 = vld [vmem:[#allocation7 + $0x90] sm:$0xf]
    %v3754 = vld [vmem:[#allocation7 + $0x94] sm:$0xf]
    %v3755 = vld [vmem:[#allocation7 + $0x98] sm:$0xf]
    %v3756 = vld [vmem:[#allocation7 + $0x9c] sm:$0xf]
    %v3757 = vld [vmem:[#allocation7 + $0xa0] sm:$0xf]
    %v3758 = vld [vmem:[#allocation7 + $0xa4] sm:$0xf]
    %v3759 = vld [vmem:[#allocation7 + $0xa8] sm:$0xf]
    %v3760 = vld [vmem:[#allocation7 + $0xac] sm:$0xf]
    %v3761 = vld [vmem:[#allocation7 + $0xb0] sm:$0xf]
    %v3762 = vld [vmem:[#allocation7 + $0xb4] sm:$0xf]
    %v3763 = vld [vmem:[#allocation7 + $0xb8] sm:$0xf]
    %v3764 = vld [vmem:[#allocation7 + $0xbc] sm:$0xf]
    %v3765 = vld [vmem:[#allocation7 + $0xc0] sm:$0xf]
    %v3766 = vld [vmem:[#allocation7 + $0xc4] sm:$0xf]
    %v3767 = vld [vmem:[#allocation7 + $0xc8] sm:$0xf]
    %v3768 = vld [vmem:[#allocation7 + $0xcc] sm:$0xf]
    %v3769 = vld [vmem:[#allocation7 + $0xd0] sm:$0xf]
    %v3770 = vld [vmem:[#allocation7 + $0xd4] sm:$0xf]
    %v3771 = vld [vmem:[#allocation7 + $0xd8] sm:$0xf]
    %v3772 = vld [vmem:[#allocation7 + $0xdc] sm:$0xf]
    %v3773 = vld [vmem:[#allocation7 + $0xe0] sm:$0xf]
    %v3774 = vld [vmem:[#allocation7 + $0xe4] sm:$0xf]
    %v3775 = vld [vmem:[#allocation7 + $0xe8] sm:$0xf]
    %v3776 = vld [vmem:[#allocation7 + $0xec] sm:$0xf]
    %v3777 = vld [vmem:[#allocation7 + $0xf0] sm:$0xf]
    %v3778 = vld [vmem:[#allocation7 + $0xf4] sm:$0xf]
    %v3779 = vld [vmem:[#allocation7 + $0xf8] sm:$0xf]
    %v3780 = vld [vmem:[#allocation7 + $0xfc] sm:$0xf]
    %s3781 = scalar_lea.vmem %s8, 12
    %v3782 = vld [vmem:[%s3781] sm:$0xf]
    %v3783 = vld [vmem:[%s3781 + $0x4] sm:$0xf]
    %v3784 = vld [vmem:[%s3781 + $0x8] sm:$0xf]
    %v3788 = vunpack.c.l.b16 %v3782
    %v3789 = vunpack.c.l.b16 %v3783
    %v3790 = vunpack.c.l.b16 %v3784
    %v3791 = vpack.c.b16 %v3789, %v3788
    %v3792 = vpack.c.b16 %v3790, %v3790
    %v3794 = vsel %vm3588, %v3791, 0
    %v3797 = vsel %vm3588, %v3792, 0
    %3799 = vmatprep.subr.bf16.mxu0 0
    %3800 = vmatpush1.bf16.msra.mxu0 0
    %3801 = vmatprep.subr.bf16.mxu0 0
    %3802 = vmatpush1.bf16.msra.mxu0 0
    %3803 = vmatprep.subr.bf16.mxu0 0
    %3804 = vmatpush1.bf16.msra.mxu0 0
    %3805 = vmatprep.subr.bf16.mxu0 0
    %3806 = vmatpush1.bf16.msra.mxu0 0
    %3807 = vmatprep.subr.bf16.mxu0 0
    %3808 = vmatpush1.bf16.msra.mxu0 0
    %3809 = vmatprep.subr.bf16.mxu0 0
    %3810 = vmatpush1.bf16.msra.mxu0 0
    %3811 = vmatprep.subr.bf16.mxu0 %v3599
    %3812 = vmatpush1.bf16.msra.mxu0 %v3596
    %3813 = vmatprep.subr.bf16.mxu0 %v3570
    %3814 = vmatpush1.bf16.msra.mxu0 %v3569
    %3815 = vmatprep.subr.bf16.mxu0 0
    %3816 = vmatpush2.bf16.msra.mxu0 0
    %3817 = vmatprep.subr.bf16.mxu0 0
    %3818 = vmatpush2.bf16.msra.mxu0 0
    %3819 = vmatprep.subr.bf16.mxu0 0
    %3820 = vmatpush2.bf16.msra.mxu0 0
    %3821 = vmatprep.subr.bf16.mxu0 0
    %3822 = vmatpush2.bf16.msra.mxu0 0
    %3823 = vmatprep.subr.bf16.mxu0 0
    %3824 = vmatpush2.bf16.msra.mxu0 0
    %3825 = vmatprep.subr.bf16.mxu0 0
    %3826 = vmatpush2.bf16.msra.mxu0 0
    %3827 = vmatprep.subr.bf16.mxu0 0
    %3828 = vmatpush2.bf16.msra.mxu0 0
    %3829 = vmatprep.subr.bf16.mxu0 0
    %3830 = vmatpush2.bf16.msra.mxu0 0
    %3831 = vmatprep.mubr.bf16.mxu0 0
    %3832 = vmatmul.mubr.bf16.gmra.mxu0 %v3794
    %v3833 = vpop.f32.mrf.mxu0
    %v3834 = vadd.f32 0.0, %v3833
    %v3835 = vpop.f32.mrf.mxu0
    %v3836 = vadd.f32 0.0, %v3835
    %v3837 = vpop.f32.mrf.mxu0
    %v3838 = vadd.f32 0.0, %v3837
    %v3839 = vpop.f32.mrf.mxu0
    %v3840 = vadd.f32 0.0, %v3839
    %3841 = vmatprep.mubr.bf16.mxu0 0
    %3842 = vmatmul.mubr.bf16.gmra.mxu0 %v3797
    %v3843 = vpop.f32.mrf.mxu0
    %v3844 = vadd.f32 0.0, %v3843
    %v3845 = vpop.f32.mrf.mxu0
    %v3846 = vadd.f32 0.0, %v3845
    %v3847 = vpop.f32.mrf.mxu0
    %v3848 = vpop.f32.mrf.mxu0
    %3849 = vdwg.mxu0
    %3850 = vmatprep.subr.bf16.mxu0 0
    %3851 = vmatpush1.bf16.msra.mxu0 0
    %3852 = vmatprep.subr.bf16.mxu0 0
    %3853 = vmatpush1.bf16.msra.mxu0 0
    %3854 = vmatprep.subr.bf16.mxu0 0
    %3855 = vmatpush1.bf16.msra.mxu0 0
    %3856 = vmatprep.subr.bf16.mxu0 0
    %3857 = vmatpush1.bf16.msra.mxu0 0
    %3858 = vmatprep.subr.bf16.mxu0 0
    %3859 = vmatpush1.bf16.msra.mxu0 0
    %3860 = vmatprep.subr.bf16.mxu0 0
    %3861 = vmatpush1.bf16.msra.mxu0 0
    %3862 = vmatprep.subr.bf16.mxu0 %v3605
    %3863 = vmatpush1.bf16.msra.mxu0 %v3602
    %3864 = vmatprep.subr.bf16.mxu0 %v3572
    %3865 = vmatpush1.bf16.msra.mxu0 %v3571
    %3866 = vmatprep.subr.bf16.mxu0 0
    %3867 = vmatpush2.bf16.msra.mxu0 0
    %3868 = vmatprep.subr.bf16.mxu0 0
    %3869 = vmatpush2.bf16.msra.mxu0 0
    %3870 = vmatprep.subr.bf16.mxu0 0
    %3871 = vmatpush2.bf16.msra.mxu0 0
    %3872 = vmatprep.subr.bf16.mxu0 0
    %3873 = vmatpush2.bf16.msra.mxu0 0
    %3874 = vmatprep.subr.bf16.mxu0 0
    %3875 = vmatpush2.bf16.msra.mxu0 0
    %3876 = vmatprep.subr.bf16.mxu0 0
    %3877 = vmatpush2.bf16.msra.mxu0 0
    %3878 = vmatprep.subr.bf16.mxu0 0
    %3879 = vmatpush2.bf16.msra.mxu0 0
    %3880 = vmatprep.subr.bf16.mxu0 0
    %3881 = vmatpush2.bf16.msra.mxu0 0
    %3882 = vmatprep.mubr.bf16.mxu0 0
    %3883 = vmatmul.mubr.bf16.gmra.mxu0 %v3794
    %v3884 = vpop.f32.mrf.mxu0
    %v3885 = vadd.f32 0.0, %v3884
    %v3886 = vpop.f32.mrf.mxu0
    %v3887 = vadd.f32 0.0, %v3886
    %v3888 = vpop.f32.mrf.mxu0
    %v3889 = vadd.f32 0.0, %v3888
    %v3890 = vpop.f32.mrf.mxu0
    %v3891 = vadd.f32 0.0, %v3890
    %3892 = vmatprep.mubr.bf16.mxu0 0
    %3893 = vmatmul.mubr.bf16.gmra.mxu0 %v3797
    %v3894 = vpop.f32.mrf.mxu0
    %v3895 = vadd.f32 0.0, %v3894
    %v3896 = vpop.f32.mrf.mxu0
    %v3897 = vadd.f32 0.0, %v3896
    %v3898 = vpop.f32.mrf.mxu0
    %v3899 = vpop.f32.mrf.mxu0
    %3900 = vdwg.mxu0
    %v3901 = vpack.c.bf16 %v3838, %v3834
    %v3902 = vpack.c.bf16 %v3840, %v3836
    %v3903 = vpack.c.bf16 %v3889, %v3885
    %v3904 = vpack.c.bf16 %v3891, %v3887
    %v3905 = vpack.c.bf16 %v3844, %v3844
    %v3906 = vpack.c.bf16 %v3846, %v3846
    %v3907 = vpack.c.bf16 %v3895, %v3895
    %v3908 = vpack.c.bf16 %v3897, %v3897
    %s3909 = scalar_lea.vmem [#allocation7], 256
    %v3910 = vld [vmem:[%s3909] sm:$0xf]
    %v3911 = vld [vmem:[%s3909 + $0x4] sm:$0xf]
    %v3912 = vld [vmem:[%s3909 + $0x8] sm:$0xf]
    %v3913 = vld [vmem:[%s3909 + $0xc] sm:$0xf]
    %v3914 = vld [vmem:[%s3909 + $0x10] sm:$0xf]
    %v3915 = vld [vmem:[%s3909 + $0x14] sm:$0xf]
    %v3916 = vld [vmem:[%s3909 + $0x18] sm:$0xf]
    %v3917 = vld [vmem:[%s3909 + $0x1c] sm:$0xf]
    %v3918 = vld [vmem:[%s3909 + $0x20] sm:$0xf]
    %v3919 = vld [vmem:[%s3909 + $0x24] sm:$0xf]
    %v3920 = vld [vmem:[%s3909 + $0x28] sm:$0xf]
    %v3921 = vld [vmem:[%s3909 + $0x2c] sm:$0xf]
    %v3922 = vld [vmem:[%s3909 + $0x30] sm:$0xf]
    %v3923 = vld [vmem:[%s3909 + $0x34] sm:$0xf]
    %v3924 = vld [vmem:[%s3909 + $0x38] sm:$0xf]
    %v3925 = vld [vmem:[%s3909 + $0x3c] sm:$0xf]
    %v3926 = vld [vmem:[%s3909 + $0x40] sm:$0xf]
    %v3927 = vld [vmem:[%s3909 + $0x44] sm:$0xf]
    %v3928 = vld [vmem:[%s3909 + $0x48] sm:$0xf]
    %v3929 = vld [vmem:[%s3909 + $0x4c] sm:$0xf]
    %v3930 = vld [vmem:[%s3909 + $0x50] sm:$0xf]
    %v3931 = vld [vmem:[%s3909 + $0x54] sm:$0xf]
    %v3932 = vld [vmem:[%s3909 + $0x58] sm:$0xf]
    %v3933 = vld [vmem:[%s3909 + $0x5c] sm:$0xf]
    %v3934 = vld [vmem:[%s3909 + $0x60] sm:$0xf]
    %v3935 = vld [vmem:[%s3909 + $0x64] sm:$0xf]
    %v3936 = vld [vmem:[%s3909 + $0x68] sm:$0xf]
    %v3937 = vld [vmem:[%s3909 + $0x6c] sm:$0xf]
    %v3938 = vld [vmem:[%s3909 + $0x70] sm:$0xf]
    %v3939 = vld [vmem:[%s3909 + $0x74] sm:$0xf]
    %v3940 = vld [vmem:[%s3909 + $0x78] sm:$0xf]
    %v3941 = vld [vmem:[%s3909 + $0x7c] sm:$0xf]
    %v3942 = vld [vmem:[%s3909 + $0x80] sm:$0xf]
    %v3943 = vld [vmem:[%s3909 + $0x84] sm:$0xf]
    %v3944 = vld [vmem:[%s3909 + $0x88] sm:$0xf]
    %v3945 = vld [vmem:[%s3909 + $0x8c] sm:$0xf]
    %v3946 = vld [vmem:[%s3909 + $0x90] sm:$0xf]
    %v3947 = vld [vmem:[%s3909 + $0x94] sm:$0xf]
    %v3948 = vld [vmem:[%s3909 + $0x98] sm:$0xf]
    %v3949 = vld [vmem:[%s3909 + $0x9c] sm:$0xf]
    %v3950 = vld [vmem:[%s3909 + $0xa0] sm:$0xf]
    %v3951 = vld [vmem:[%s3909 + $0xa4] sm:$0xf]
    %v3952 = vld [vmem:[%s3909 + $0xa8] sm:$0xf]
    %v3953 = vld [vmem:[%s3909 + $0xac] sm:$0xf]
    %v3954 = vld [vmem:[%s3909 + $0xb0] sm:$0xf]
    %v3955 = vld [vmem:[%s3909 + $0xb4] sm:$0xf]
    %v3956 = vld [vmem:[%s3909 + $0xb8] sm:$0xf]
    %v3957 = vld [vmem:[%s3909 + $0xbc] sm:$0xf]
    %v3958 = vld [vmem:[%s3909 + $0xc0] sm:$0xf]
    %v3959 = vld [vmem:[%s3909 + $0xc4] sm:$0xf]
    %v3960 = vld [vmem:[%s3909 + $0xc8] sm:$0xf]
    %v3961 = vld [vmem:[%s3909 + $0xcc] sm:$0xf]
    %v3962 = vld [vmem:[%s3909 + $0xd0] sm:$0xf]
    %v3963 = vld [vmem:[%s3909 + $0xd4] sm:$0xf]
    %v3964 = vld [vmem:[%s3909 + $0xd8] sm:$0xf]
    %v3965 = vld [vmem:[%s3909 + $0xdc] sm:$0xf]
    %v3966 = vld [vmem:[%s3909 + $0xe0] sm:$0xf]
    %v3967 = vld [vmem:[%s3909 + $0xe4] sm:$0xf]
    %v3968 = vld [vmem:[%s3909 + $0xe8] sm:$0xf]
    %v3969 = vld [vmem:[%s3909 + $0xec] sm:$0xf]
    %v3970 = vld [vmem:[%s3909 + $0xf0] sm:$0xf]
    %v3971 = vld [vmem:[%s3909 + $0xf4] sm:$0xf]
    %v3972 = vld [vmem:[%s3909 + $0xf8] sm:$0xf]
    %v3973 = vld [vmem:[%s3909 + $0xfc] sm:$0xf]
    %v4038 = vunpack.c.l.b16 %v3910
    %v4039 = vunpack.c.l.b16 %v3911
    %v4040 = vunpack.c.l.b16 %v3912
    %v4041 = vunpack.c.l.b16 %v3913
    %v4042 = vunpack.c.l.b16 %v3914
    %v4043 = vunpack.c.l.b16 %v3915
    %v4044 = vunpack.c.l.b16 %v3916
    %v4045 = vunpack.c.l.b16 %v3917
    %v4046 = vunpack.c.l.b16 %v3918
    %v4047 = vunpack.c.l.b16 %v3919
    %v4048 = vunpack.c.l.b16 %v3920
    %v4049 = vunpack.c.l.b16 %v3921
    %v4050 = vunpack.c.l.b16 %v3922
    %v4051 = vunpack.c.l.b16 %v3923
    %v4052 = vunpack.c.l.b16 %v3924
    %v4053 = vunpack.c.l.b16 %v3925
    %v4054 = vunpack.c.l.b16 %v3926
    %v4055 = vunpack.c.l.b16 %v3927
    %v4056 = vunpack.c.l.b16 %v3928
    %v4057 = vunpack.c.l.b16 %v3929
    %v4058 = vunpack.c.l.b16 %v3930
    %v4059 = vunpack.c.l.b16 %v3931
    %v4060 = vunpack.c.l.b16 %v3932
    %v4061 = vunpack.c.l.b16 %v3933
    %v4062 = vunpack.c.l.b16 %v3934
    %v4063 = vunpack.c.l.b16 %v3935
    %v4064 = vunpack.c.l.b16 %v3936
    %v4065 = vunpack.c.l.b16 %v3937
    %v4066 = vunpack.c.l.b16 %v3938
    %v4067 = vunpack.c.l.b16 %v3939
    %v4068 = vunpack.c.l.b16 %v3940
    %v4069 = vunpack.c.l.b16 %v3941
    %v4070 = vunpack.c.l.b16 %v3942
    %v4071 = vunpack.c.l.b16 %v3943
    %v4072 = vunpack.c.l.b16 %v3944
    %v4073 = vunpack.c.l.b16 %v3945
    %v4074 = vunpack.c.l.b16 %v3946
    %v4075 = vunpack.c.l.b16 %v3947
    %v4076 = vunpack.c.l.b16 %v3948
    %v4077 = vunpack.c.l.b16 %v3949
    %v4078 = vunpack.c.l.b16 %v3950
    %v4079 = vunpack.c.l.b16 %v3951
    %v4080 = vunpack.c.l.b16 %v3952
    %v4081 = vunpack.c.l.b16 %v3953
    %v4082 = vunpack.c.l.b16 %v3954
    %v4083 = vunpack.c.l.b16 %v3955
    %v4084 = vunpack.c.l.b16 %v3956
    %v4085 = vunpack.c.l.b16 %v3957
    %v4086 = vunpack.c.l.b16 %v3958
    %v4087 = vunpack.c.l.b16 %v3959
    %v4088 = vunpack.c.l.b16 %v3960
    %v4089 = vunpack.c.l.b16 %v3961
    %v4090 = vunpack.c.l.b16 %v3962
    %v4091 = vunpack.c.l.b16 %v3963
    %v4092 = vunpack.c.l.b16 %v3964
    %v4093 = vunpack.c.l.b16 %v3965
    %v4094 = vunpack.c.l.b16 %v3966
    %v4095 = vunpack.c.l.b16 %v3967
    %v4096 = vunpack.c.l.b16 %v3968
    %v4097 = vunpack.c.l.b16 %v3969
    %v4098 = vunpack.c.l.b16 %v3970
    %v4099 = vunpack.c.l.b16 %v3971
    %v4100 = vunpack.c.l.b16 %v3972
    %v4101 = vunpack.c.l.b16 %v3973
    %v4102 = vpack.c.b16 %v4039, %v4038
    %v4103 = vpack.c.b16 %v4041, %v4040
    %v4104 = vpack.c.b16 %v4043, %v4042
    %v4105 = vpack.c.b16 %v4045, %v4044
    %v4106 = vpack.c.b16 %v4047, %v4046
    %v4107 = vpack.c.b16 %v4049, %v4048
    %v4108 = vpack.c.b16 %v4051, %v4050
    %v4109 = vpack.c.b16 %v4053, %v4052
    %v4110 = vpack.c.b16 %v4055, %v4054
    %v4111 = vpack.c.b16 %v4057, %v4056
    %v4112 = vpack.c.b16 %v4059, %v4058
    %v4113 = vpack.c.b16 %v4061, %v4060
    %v4114 = vpack.c.b16 %v4063, %v4062
    %v4115 = vpack.c.b16 %v4065, %v4064
    %v4116 = vpack.c.b16 %v4067, %v4066
    %v4117 = vpack.c.b16 %v4069, %v4068
    %v4118 = vpack.c.b16 %v4071, %v4070
    %v4119 = vpack.c.b16 %v4073, %v4072
    %v4120 = vpack.c.b16 %v4075, %v4074
    %v4121 = vpack.c.b16 %v4077, %v4076
    %v4122 = vpack.c.b16 %v4079, %v4078
    %v4123 = vpack.c.b16 %v4081, %v4080
    %v4124 = vpack.c.b16 %v4083, %v4082
    %v4125 = vpack.c.b16 %v4085, %v4084
    %v4126 = vpack.c.b16 %v4087, %v4086
    %v4127 = vpack.c.b16 %v4089, %v4088
    %v4128 = vpack.c.b16 %v4091, %v4090
    %v4129 = vpack.c.b16 %v4093, %v4092
    %v4130 = vpack.c.b16 %v4095, %v4094
    %v4131 = vpack.c.b16 %v4097, %v4096
    %v4132 = vpack.c.b16 %v4099, %v4098
    %v4133 = vpack.c.b16 %v4101, %v4100
    %4166 = vmatprep.subr.bf16.mxu0 0
    %4167 = vmatpush1.bf16.msra.mxu0 %v4109
    %4168 = vmatprep.subr.bf16.mxu0 0
    %4169 = vmatpush1.bf16.msra.mxu0 %v4108
    %4170 = vmatprep.subr.bf16.mxu0 0
    %4171 = vmatpush1.bf16.msra.mxu0 %v4107
    %4172 = vmatprep.subr.bf16.mxu0 0
    %4173 = vmatpush1.bf16.msra.mxu0 %v4106
    %4174 = vmatprep.subr.bf16.mxu0 0
    %4175 = vmatpush1.bf16.msra.mxu0 %v4105
    %4176 = vmatprep.subr.bf16.mxu0 0
    %4177 = vmatpush1.bf16.msra.mxu0 %v4104
    %4178 = vmatprep.subr.bf16.mxu0 0
    %4179 = vmatpush1.bf16.msra.mxu0 %v4103
    %4180 = vmatprep.subr.bf16.mxu0 0
    %4181 = vmatpush1.bf16.msra.mxu0 %v4102
    %4182 = vmatprep.subr.bf16.mxu0 0
    %4183 = vmatpush2.bf16.msra.mxu0 %v4117
    %4184 = vmatprep.subr.bf16.mxu0 0
    %4185 = vmatpush2.bf16.msra.mxu0 %v4116
    %4186 = vmatprep.subr.bf16.mxu0 0
    %4187 = vmatpush2.bf16.msra.mxu0 %v4115
    %4188 = vmatprep.subr.bf16.mxu0 0
    %4189 = vmatpush2.bf16.msra.mxu0 %v4114
    %4190 = vmatprep.subr.bf16.mxu0 0
    %4191 = vmatpush2.bf16.msra.mxu0 %v4113
    %4192 = vmatprep.subr.bf16.mxu0 0
    %4193 = vmatpush2.bf16.msra.mxu0 %v4112
    %4194 = vmatprep.subr.bf16.mxu0 0
    %4195 = vmatpush2.bf16.msra.mxu0 %v4111
    %4196 = vmatprep.subr.bf16.mxu0 0
    %4197 = vmatpush2.bf16.msra.mxu0 %v4110
    %4198 = vmatprep.mubr.bf16.mxu0 %v3902
    %4199 = vmatmul.mubr.bf16.gmra.mxu0 %v3901
    %v4200 = vpop.f32.mrf.mxu0
    %v4201 = vadd.f32 0.0, %v4200
    %v4202 = vpop.f32.mrf.mxu0
    %v4203 = vpop.f32.mrf.mxu0
    %v4204 = vadd.f32 0.0, %v4203
    %v4205 = vpop.f32.mrf.mxu0
    %4206 = vmatprep.mubr.bf16.mxu0 %v3906
    %4207 = vmatmul.mubr.bf16.gmra.mxu0 %v3905
    %v4208 = vpop.f32.mrf.mxu0
    %v4209 = vadd.f32 0.0, %v4208
    %v4210 = vpop.f32.mrf.mxu0
    %v4211 = vpop.f32.mrf.mxu0
    %v4212 = vpop.f32.mrf.mxu0
    %4213 = vdwg.mxu0
    %4214 = vmatprep.subr.bf16.mxu0 0
    %4215 = vmatpush1.bf16.msra.mxu0 %v4125
    %4216 = vmatprep.subr.bf16.mxu0 0
    %4217 = vmatpush1.bf16.msra.mxu0 %v4124
    %4218 = vmatprep.subr.bf16.mxu0 0
    %4219 = vmatpush1.bf16.msra.mxu0 %v4123
    %4220 = vmatprep.subr.bf16.mxu0 0
    %4221 = vmatpush1.bf16.msra.mxu0 %v4122
    %4222 = vmatprep.subr.bf16.mxu0 0
    %4223 = vmatpush1.bf16.msra.mxu0 %v4121
    %4224 = vmatprep.subr.bf16.mxu0 0
    %4225 = vmatpush1.bf16.msra.mxu0 %v4120
    %4226 = vmatprep.subr.bf16.mxu0 0
    %4227 = vmatpush1.bf16.msra.mxu0 %v4119
    %4228 = vmatprep.subr.bf16.mxu0 0
    %4229 = vmatpush1.bf16.msra.mxu0 %v4118
    %4230 = vmatprep.subr.bf16.mxu0 0
    %4231 = vmatpush2.bf16.msra.mxu0 %v4133
    %4232 = vmatprep.subr.bf16.mxu0 0
    %4233 = vmatpush2.bf16.msra.mxu0 %v4132
    %4234 = vmatprep.subr.bf16.mxu0 0
    %4235 = vmatpush2.bf16.msra.mxu0 %v4131
    %4236 = vmatprep.subr.bf16.mxu0 0
    %4237 = vmatpush2.bf16.msra.mxu0 %v4130
    %4238 = vmatprep.subr.bf16.mxu0 0
    %4239 = vmatpush2.bf16.msra.mxu0 %v4129
    %4240 = vmatprep.subr.bf16.mxu0 0
    %4241 = vmatpush2.bf16.msra.mxu0 %v4128
    %4242 = vmatprep.subr.bf16.mxu0 0
    %4243 = vmatpush2.bf16.msra.mxu0 %v4127
    %4244 = vmatprep.subr.bf16.mxu0 0
    %4245 = vmatpush2.bf16.msra.mxu0 %v4126
    %4246 = vmatprep.mubr.bf16.mxu0 %v3904
    %4247 = vmatmul.mubr.bf16.gmra.mxu0 %v3903
    %v4248 = vpop.f32.mrf.mxu0
    %v4249 = vadd.f32 %v4201, %v4248
    %v4250 = vpop.f32.mrf.mxu0
    %v4251 = vpop.f32.mrf.mxu0
    %v4252 = vadd.f32 %v4204, %v4251
    %v4253 = vpop.f32.mrf.mxu0
    %4254 = vmatprep.mubr.bf16.mxu0 %v3908
    %4255 = vmatmul.mubr.bf16.gmra.mxu0 %v3907
    %v4256 = vpop.f32.mrf.mxu0
    %v4257 = vadd.f32 %v4209, %v4256
    %v4258 = vpop.f32.mrf.mxu0
    %v4259 = vpop.f32.mrf.mxu0
    %v4260 = vpop.f32.mrf.mxu0
    %4261 = vdwg.mxu0
    %v4326 = vunpack.c.l.b16 %v3717
    %v4327 = vunpack.c.l.b16 %v3718
    %v4328 = vunpack.c.l.b16 %v3719
    %v4329 = vunpack.c.l.b16 %v3720
    %v4330 = vunpack.c.l.b16 %v3721
    %v4331 = vunpack.c.l.b16 %v3722
    %v4332 = vunpack.c.l.b16 %v3723
    %v4333 = vunpack.c.l.b16 %v3724
    %v4334 = vunpack.c.l.b16 %v3725
    %v4335 = vunpack.c.l.b16 %v3726
    %v4336 = vunpack.c.l.b16 %v3727
    %v4337 = vunpack.c.l.b16 %v3728
    %v4338 = vunpack.c.l.b16 %v3729
    %v4339 = vunpack.c.l.b16 %v3730
    %v4340 = vunpack.c.l.b16 %v3731
    %v4341 = vunpack.c.l.b16 %v3732
    %v4342 = vunpack.c.l.b16 %v3733
    %v4343 = vunpack.c.l.b16 %v3734
    %v4344 = vunpack.c.l.b16 %v3735
    %v4345 = vunpack.c.l.b16 %v3736
    %v4346 = vunpack.c.l.b16 %v3737
    %v4347 = vunpack.c.l.b16 %v3738
    %v4348 = vunpack.c.l.b16 %v3739
    %v4349 = vunpack.c.l.b16 %v3740
    %v4350 = vunpack.c.l.b16 %v3741
    %v4351 = vunpack.c.l.b16 %v3742
    %v4352 = vunpack.c.l.b16 %v3743
    %v4353 = vunpack.c.l.b16 %v3744
    %v4354 = vunpack.c.l.b16 %v3745
    %v4355 = vunpack.c.l.b16 %v3746
    %v4356 = vunpack.c.l.b16 %v3747
    %v4357 = vunpack.c.l.b16 %v3748
    %v4358 = vunpack.c.l.b16 %v3749
    %v4359 = vunpack.c.l.b16 %v3750
    %v4360 = vunpack.c.l.b16 %v3751
    %v4361 = vunpack.c.l.b16 %v3752
    %v4362 = vunpack.c.l.b16 %v3753
    %v4363 = vunpack.c.l.b16 %v3754
    %v4364 = vunpack.c.l.b16 %v3755
    %v4365 = vunpack.c.l.b16 %v3756
    %v4366 = vunpack.c.l.b16 %v3757
    %v4367 = vunpack.c.l.b16 %v3758
    %v4368 = vunpack.c.l.b16 %v3759
    %v4369 = vunpack.c.l.b16 %v3760
    %v4370 = vunpack.c.l.b16 %v3761
    %v4371 = vunpack.c.l.b16 %v3762
    %v4372 = vunpack.c.l.b16 %v3763
    %v4373 = vunpack.c.l.b16 %v3764
    %v4374 = vunpack.c.l.b16 %v3765
    %v4375 = vunpack.c.l.b16 %v3766
    %v4376 = vunpack.c.l.b16 %v3767
    %v4377 = vunpack.c.l.b16 %v3768
    %v4378 = vunpack.c.l.b16 %v3769
    %v4379 = vunpack.c.l.b16 %v3770
    %v4380 = vunpack.c.l.b16 %v3771
    %v4381 = vunpack.c.l.b16 %v3772
    %v4382 = vunpack.c.l.b16 %v3773
    %v4383 = vunpack.c.l.b16 %v3774
    %v4384 = vunpack.c.l.b16 %v3775
    %v4385 = vunpack.c.l.b16 %v3776
    %v4386 = vunpack.c.l.b16 %v3777
    %v4387 = vunpack.c.l.b16 %v3778
    %v4388 = vunpack.c.l.b16 %v3779
    %v4389 = vunpack.c.l.b16 %v3780
    %v4390 = vpack.c.b16 %v4327, %v4326
    %v4391 = vpack.c.b16 %v4329, %v4328
    %v4392 = vpack.c.b16 %v4331, %v4330
    %v4393 = vpack.c.b16 %v4333, %v4332
    %v4394 = vpack.c.b16 %v4335, %v4334
    %v4395 = vpack.c.b16 %v4337, %v4336
    %v4396 = vpack.c.b16 %v4339, %v4338
    %v4397 = vpack.c.b16 %v4341, %v4340
    %v4398 = vpack.c.b16 %v4343, %v4342
    %v4399 = vpack.c.b16 %v4345, %v4344
    %v4400 = vpack.c.b16 %v4347, %v4346
    %v4401 = vpack.c.b16 %v4349, %v4348
    %v4402 = vpack.c.b16 %v4351, %v4350
    %v4403 = vpack.c.b16 %v4353, %v4352
    %v4404 = vpack.c.b16 %v4355, %v4354
    %v4405 = vpack.c.b16 %v4357, %v4356
    %v4406 = vpack.c.b16 %v4359, %v4358
    %v4407 = vpack.c.b16 %v4361, %v4360
    %v4408 = vpack.c.b16 %v4363, %v4362
    %v4409 = vpack.c.b16 %v4365, %v4364
    %v4410 = vpack.c.b16 %v4367, %v4366
    %v4411 = vpack.c.b16 %v4369, %v4368
    %v4412 = vpack.c.b16 %v4371, %v4370
    %v4413 = vpack.c.b16 %v4373, %v4372
    %v4414 = vpack.c.b16 %v4375, %v4374
    %v4415 = vpack.c.b16 %v4377, %v4376
    %v4416 = vpack.c.b16 %v4379, %v4378
    %v4417 = vpack.c.b16 %v4381, %v4380
    %v4418 = vpack.c.b16 %v4383, %v4382
    %v4419 = vpack.c.b16 %v4385, %v4384
    %v4420 = vpack.c.b16 %v4387, %v4386
    %v4421 = vpack.c.b16 %v4389, %v4388
    %4454 = vmatprep.subr.bf16.mxu0 0
    %4455 = vmatpush1.bf16.msra.mxu0 %v4397
    %4456 = vmatprep.subr.bf16.mxu0 0
    %4457 = vmatpush1.bf16.msra.mxu0 %v4396
    %4458 = vmatprep.subr.bf16.mxu0 0
    %4459 = vmatpush1.bf16.msra.mxu0 %v4395
    %4460 = vmatprep.subr.bf16.mxu0 0
    %4461 = vmatpush1.bf16.msra.mxu0 %v4394
    %4462 = vmatprep.subr.bf16.mxu0 0
    %4463 = vmatpush1.bf16.msra.mxu0 %v4393
    %4464 = vmatprep.subr.bf16.mxu0 0
    %4465 = vmatpush1.bf16.msra.mxu0 %v4392
    %4466 = vmatprep.subr.bf16.mxu0 0
    %4467 = vmatpush1.bf16.msra.mxu0 %v4391
    %4468 = vmatprep.subr.bf16.mxu0 0
    %4469 = vmatpush1.bf16.msra.mxu0 %v4390
    %4470 = vmatprep.subr.bf16.mxu0 0
    %4471 = vmatpush2.bf16.msra.mxu0 %v4405
    %4472 = vmatprep.subr.bf16.mxu0 0
    %4473 = vmatpush2.bf16.msra.mxu0 %v4404
    %4474 = vmatprep.subr.bf16.mxu0 0
    %4475 = vmatpush2.bf16.msra.mxu0 %v4403
    %4476 = vmatprep.subr.bf16.mxu0 0
    %4477 = vmatpush2.bf16.msra.mxu0 %v4402
    %4478 = vmatprep.subr.bf16.mxu0 0
    %4479 = vmatpush2.bf16.msra.mxu0 %v4401
    %4480 = vmatprep.subr.bf16.mxu0 0
    %4481 = vmatpush2.bf16.msra.mxu0 %v4400
    %4482 = vmatprep.subr.bf16.mxu0 0
    %4483 = vmatpush2.bf16.msra.mxu0 %v4399
    %4484 = vmatprep.subr.bf16.mxu0 0
    %4485 = vmatpush2.bf16.msra.mxu0 %v4398
    %4486 = vmatprep.mubr.bf16.mxu0 %v3710
    %4487 = vmatmul.mubr.bf16.gmra.mxu0 %v3709
    %v4488 = vpop.f32.mrf.mxu0
    %v4489 = vadd.f32 %v4249, %v4488
    %v4490 = vpop.f32.mrf.mxu0
    %v4491 = vpop.f32.mrf.mxu0
    %v4492 = vadd.f32 %v4252, %v4491
    %v4493 = vpop.f32.mrf.mxu0
    %4494 = vmatprep.mubr.bf16.mxu0 %v3714
    %4495 = vmatmul.mubr.bf16.gmra.mxu0 %v3713
    %v4496 = vpop.f32.mrf.mxu0
    %v4497 = vadd.f32 %v4257, %v4496
    %v4498 = vpop.f32.mrf.mxu0
    %v4499 = vpop.f32.mrf.mxu0
    %v4500 = vpop.f32.mrf.mxu0
    %4501 = vdwg.mxu0
    %4502 = vmatprep.subr.bf16.mxu0 0
    %4503 = vmatpush1.bf16.msra.mxu0 %v4413
    %4504 = vmatprep.subr.bf16.mxu0 0
    %4505 = vmatpush1.bf16.msra.mxu0 %v4412
    %4506 = vmatprep.subr.bf16.mxu0 0
    %4507 = vmatpush1.bf16.msra.mxu0 %v4411
    %4508 = vmatprep.subr.bf16.mxu0 0
    %4509 = vmatpush1.bf16.msra.mxu0 %v4410
    %4510 = vmatprep.subr.bf16.mxu0 0
    %4511 = vmatpush1.bf16.msra.mxu0 %v4409
    %4512 = vmatprep.subr.bf16.mxu0 0
    %4513 = vmatpush1.bf16.msra.mxu0 %v4408
    %4514 = vmatprep.subr.bf16.mxu0 0
    %4515 = vmatpush1.bf16.msra.mxu0 %v4407
    %4516 = vmatprep.subr.bf16.mxu0 0
    %4517 = vmatpush1.bf16.msra.mxu0 %v4406
    %4518 = vmatprep.subr.bf16.mxu0 0
    %4519 = vmatpush2.bf16.msra.mxu0 %v4421
    %4520 = vmatprep.subr.bf16.mxu0 0
    %4521 = vmatpush2.bf16.msra.mxu0 %v4420
    %4522 = vmatprep.subr.bf16.mxu0 0
    %4523 = vmatpush2.bf16.msra.mxu0 %v4419
    %4524 = vmatprep.subr.bf16.mxu0 0
    %4525 = vmatpush2.bf16.msra.mxu0 %v4418
    %4526 = vmatprep.subr.bf16.mxu0 0
    %4527 = vmatpush2.bf16.msra.mxu0 %v4417
    %4528 = vmatprep.subr.bf16.mxu0 0
    %4529 = vmatpush2.bf16.msra.mxu0 %v4416
    %4530 = vmatprep.subr.bf16.mxu0 0
    %4531 = vmatpush2.bf16.msra.mxu0 %v4415
    %4532 = vmatprep.subr.bf16.mxu0 0
    %4533 = vmatpush2.bf16.msra.mxu0 %v4414
    %4534 = vmatprep.mubr.bf16.mxu0 %v3712
    %4535 = vmatmul.mubr.bf16.gmra.mxu0 %v3711
    %v4536 = vpop.f32.mrf.mxu0
    %v4537 = vadd.f32 %v4489, %v4536
    %v4538 = vpop.f32.mrf.mxu0
    %v4539 = vpop.f32.mrf.mxu0
    %v4540 = vadd.f32 %v4492, %v4539
    %v4541 = vpop.f32.mrf.mxu0
    %4542 = vmatprep.mubr.bf16.mxu0 %v3716
    %4543 = vmatmul.mubr.bf16.gmra.mxu0 %v3715
    %v4544 = vpop.f32.mrf.mxu0
    %v4545 = vadd.f32 %v4497, %v4544
    %v4546 = vpop.f32.mrf.mxu0
    %v4547 = vpop.f32.mrf.mxu0
    %v4548 = vpop.f32.mrf.mxu0
    %4549 = vdwg.mxu0
    %s4550 = scalar_lea.vmem %s8, 24
    %v4551 = vld [vmem:[%s4550] sm:$0xf]
    %v4552 = vld [vmem:[%s4550 + $0x4] sm:$0xf]
    %v4553 = vld [vmem:[%s4550 + $0x8] sm:$0xf]
    %v4557 = vunpack.c.l.b16 %v4551
    %v4558 = vunpack.c.l.b16 %v4552
    %v4559 = vunpack.c.l.b16 %v4553
    %v4560 = vpack.c.b16 %v4558, %v4557
    %v4561 = vpack.c.b16 %v4559, %v4559
    %v4563 = vsel %vm3588, %v4560, 0
    %v4566 = vsel %vm3588, %v4561, 0
    %4568 = vmatprep.subr.bf16.mxu0 0
    %4569 = vmatpush1.bf16.msra.mxu0 0
    %4570 = vmatprep.subr.bf16.mxu0 0
    %4571 = vmatpush1.bf16.msra.mxu0 0
    %4572 = vmatprep.subr.bf16.mxu0 0
    %4573 = vmatpush1.bf16.msra.mxu0 0
    %4574 = vmatprep.subr.bf16.mxu0 0
    %4575 = vmatpush1.bf16.msra.mxu0 0
    %4576 = vmatprep.subr.bf16.mxu0 0
    %4577 = vmatpush1.bf16.msra.mxu0 0
    %4578 = vmatprep.subr.bf16.mxu0 0
    %4579 = vmatpush1.bf16.msra.mxu0 0
    %4580 = vmatprep.subr.bf16.mxu0 %v3599
    %4581 = vmatpush1.bf16.msra.mxu0 %v3596
    %4582 = vmatprep.subr.bf16.mxu0 %v3570
    %4583 = vmatpush1.bf16.msra.mxu0 %v3569
    %4584 = vmatprep.subr.bf16.mxu0 0
    %4585 = vmatpush2.bf16.msra.mxu0 0
    %4586 = vmatprep.subr.bf16.mxu0 0
    %4587 = vmatpush2.bf16.msra.mxu0 0
    %4588 = vmatprep.subr.bf16.mxu0 0
    %4589 = vmatpush2.bf16.msra.mxu0 0
    %4590 = vmatprep.subr.bf16.mxu0 0
    %4591 = vmatpush2.bf16.msra.mxu0 0
    %4592 = vmatprep.subr.bf16.mxu0 0
    %4593 = vmatpush2.bf16.msra.mxu0 0
    %4594 = vmatprep.subr.bf16.mxu0 0
    %4595 = vmatpush2.bf16.msra.mxu0 0
    %4596 = vmatprep.subr.bf16.mxu0 0
    %4597 = vmatpush2.bf16.msra.mxu0 0
    %4598 = vmatprep.subr.bf16.mxu0 0
    %4599 = vmatpush2.bf16.msra.mxu0 0
    %4600 = vmatprep.mubr.bf16.mxu0 0
    %4601 = vmatmul.mubr.bf16.gmra.mxu0 %v4563
    %v4602 = vpop.f32.mrf.mxu0
    %v4603 = vadd.f32 0.0, %v4602
    %v4604 = vpop.f32.mrf.mxu0
    %v4605 = vadd.f32 0.0, %v4604
    %v4606 = vpop.f32.mrf.mxu0
    %v4607 = vadd.f32 0.0, %v4606
    %v4608 = vpop.f32.mrf.mxu0
    %v4609 = vadd.f32 0.0, %v4608
    %4610 = vmatprep.mubr.bf16.mxu0 0
    %4611 = vmatmul.mubr.bf16.gmra.mxu0 %v4566
    %v4612 = vpop.f32.mrf.mxu0
    %v4613 = vadd.f32 0.0, %v4612
    %v4614 = vpop.f32.mrf.mxu0
    %v4615 = vadd.f32 0.0, %v4614
    %v4616 = vpop.f32.mrf.mxu0
    %v4617 = vpop.f32.mrf.mxu0
    %4618 = vdwg.mxu0
    %4619 = vmatprep.subr.bf16.mxu0 0
    %4620 = vmatpush1.bf16.msra.mxu0 0
    %4621 = vmatprep.subr.bf16.mxu0 0
    %4622 = vmatpush1.bf16.msra.mxu0 0
    %4623 = vmatprep.subr.bf16.mxu0 0
    %4624 = vmatpush1.bf16.msra.mxu0 0
    %4625 = vmatprep.subr.bf16.mxu0 0
    %4626 = vmatpush1.bf16.msra.mxu0 0
    %4627 = vmatprep.subr.bf16.mxu0 0
    %4628 = vmatpush1.bf16.msra.mxu0 0
    %4629 = vmatprep.subr.bf16.mxu0 0
    %4630 = vmatpush1.bf16.msra.mxu0 0
    %4631 = vmatprep.subr.bf16.mxu0 %v3605
    %4632 = vmatpush1.bf16.msra.mxu0 %v3602
    %4633 = vmatprep.subr.bf16.mxu0 %v3572
    %4634 = vmatpush1.bf16.msra.mxu0 %v3571
    %4635 = vmatprep.subr.bf16.mxu0 0
    %4636 = vmatpush2.bf16.msra.mxu0 0
    %4637 = vmatprep.subr.bf16.mxu0 0
    %4638 = vmatpush2.bf16.msra.mxu0 0
    %4639 = vmatprep.subr.bf16.mxu0 0
    %4640 = vmatpush2.bf16.msra.mxu0 0
    %4641 = vmatprep.subr.bf16.mxu0 0
    %4642 = vmatpush2.bf16.msra.mxu0 0
    %4643 = vmatprep.subr.bf16.mxu0 0
    %4644 = vmatpush2.bf16.msra.mxu0 0
    %4645 = vmatprep.subr.bf16.mxu0 0
    %4646 = vmatpush2.bf16.msra.mxu0 0
    %4647 = vmatprep.subr.bf16.mxu0 0
    %4648 = vmatpush2.bf16.msra.mxu0 0
    %4649 = vmatprep.subr.bf16.mxu0 0
    %4650 = vmatpush2.bf16.msra.mxu0 0
    %4651 = vmatprep.mubr.bf16.mxu0 0
    %4652 = vmatmul.mubr.bf16.gmra.mxu0 %v4563
    %v4653 = vpop.f32.mrf.mxu0
    %v4654 = vadd.f32 0.0, %v4653
    %v4655 = vpop.f32.mrf.mxu0
    %v4656 = vadd.f32 0.0, %v4655
    %v4657 = vpop.f32.mrf.mxu0
    %v4658 = vadd.f32 0.0, %v4657
    %v4659 = vpop.f32.mrf.mxu0
    %v4660 = vadd.f32 0.0, %v4659
    %4661 = vmatprep.mubr.bf16.mxu0 0
    %4662 = vmatmul.mubr.bf16.gmra.mxu0 %v4566
    %v4663 = vpop.f32.mrf.mxu0
    %v4664 = vadd.f32 0.0, %v4663
    %v4665 = vpop.f32.mrf.mxu0
    %v4666 = vadd.f32 0.0, %v4665
    %v4667 = vpop.f32.mrf.mxu0
    %v4668 = vpop.f32.mrf.mxu0
    %4669 = vdwg.mxu0
    %v4670 = vpack.c.bf16 %v4607, %v4603
    %v4671 = vpack.c.bf16 %v4609, %v4605
    %v4672 = vpack.c.bf16 %v4658, %v4654
    %v4673 = vpack.c.bf16 %v4660, %v4656
    %v4674 = vpack.c.bf16 %v4613, %v4613
    %v4675 = vpack.c.bf16 %v4615, %v4615
    %v4676 = vpack.c.bf16 %v4664, %v4664
    %v4677 = vpack.c.bf16 %v4666, %v4666
    %s4678 = scalar_lea.vmem [#allocation7], 512
    %v4679 = vld [vmem:[%s4678] sm:$0xf]
    %v4680 = vld [vmem:[%s4678 + $0x4] sm:$0xf]
    %v4681 = vld [vmem:[%s4678 + $0x8] sm:$0xf]
    %v4682 = vld [vmem:[%s4678 + $0xc] sm:$0xf]
    %v4683 = vld [vmem:[%s4678 + $0x10] sm:$0xf]
    %v4684 = vld [vmem:[%s4678 + $0x14] sm:$0xf]
    %v4685 = vld [vmem:[%s4678 + $0x18] sm:$0xf]
    %v4686 = vld [vmem:[%s4678 + $0x1c] sm:$0xf]
    %v4687 = vld [vmem:[%s4678 + $0x20] sm:$0xf]
    %v4688 = vld [vmem:[%s4678 + $0x24] sm:$0xf]
    %v4689 = vld [vmem:[%s4678 + $0x28] sm:$0xf]
    %v4690 = vld [vmem:[%s4678 + $0x2c] sm:$0xf]
    %v4691 = vld [vmem:[%s4678 + $0x30] sm:$0xf]
    %v4692 = vld [vmem:[%s4678 + $0x34] sm:$0xf]
    %v4693 = vld [vmem:[%s4678 + $0x38] sm:$0xf]
    %v4694 = vld [vmem:[%s4678 + $0x3c] sm:$0xf]
    %v4695 = vld [vmem:[%s4678 + $0x40] sm:$0xf]
    %v4696 = vld [vmem:[%s4678 + $0x44] sm:$0xf]
    %v4697 = vld [vmem:[%s4678 + $0x48] sm:$0xf]
    %v4698 = vld [vmem:[%s4678 + $0x4c] sm:$0xf]
    %v4699 = vld [vmem:[%s4678 + $0x50] sm:$0xf]
    %v4700 = vld [vmem:[%s4678 + $0x54] sm:$0xf]
    %v4701 = vld [vmem:[%s4678 + $0x58] sm:$0xf]
    %v4702 = vld [vmem:[%s4678 + $0x5c] sm:$0xf]
    %v4703 = vld [vmem:[%s4678 + $0x60] sm:$0xf]
    %v4704 = vld [vmem:[%s4678 + $0x64] sm:$0xf]
    %v4705 = vld [vmem:[%s4678 + $0x68] sm:$0xf]
    %v4706 = vld [vmem:[%s4678 + $0x6c] sm:$0xf]
    %v4707 = vld [vmem:[%s4678 + $0x70] sm:$0xf]
    %v4708 = vld [vmem:[%s4678 + $0x74] sm:$0xf]
    %v4709 = vld [vmem:[%s4678 + $0x78] sm:$0xf]
    %v4710 = vld [vmem:[%s4678 + $0x7c] sm:$0xf]
    %v4711 = vld [vmem:[%s4678 + $0x80] sm:$0xf]
    %v4712 = vld [vmem:[%s4678 + $0x84] sm:$0xf]
    %v4713 = vld [vmem:[%s4678 + $0x88] sm:$0xf]
    %v4714 = vld [vmem:[%s4678 + $0x8c] sm:$0xf]
    %v4715 = vld [vmem:[%s4678 + $0x90] sm:$0xf]
    %v4716 = vld [vmem:[%s4678 + $0x94] sm:$0xf]
    %v4717 = vld [vmem:[%s4678 + $0x98] sm:$0xf]
    %v4718 = vld [vmem:[%s4678 + $0x9c] sm:$0xf]
    %v4719 = vld [vmem:[%s4678 + $0xa0] sm:$0xf]
    %v4720 = vld [vmem:[%s4678 + $0xa4] sm:$0xf]
    %v4721 = vld [vmem:[%s4678 + $0xa8] sm:$0xf]
    %v4722 = vld [vmem:[%s4678 + $0xac] sm:$0xf]
    %v4723 = vld [vmem:[%s4678 + $0xb0] sm:$0xf]
    %v4724 = vld [vmem:[%s4678 + $0xb4] sm:$0xf]
    %v4725 = vld [vmem:[%s4678 + $0xb8] sm:$0xf]
    %v4726 = vld [vmem:[%s4678 + $0xbc] sm:$0xf]
    %v4727 = vld [vmem:[%s4678 + $0xc0] sm:$0xf]
    %v4728 = vld [vmem:[%s4678 + $0xc4] sm:$0xf]
    %v4729 = vld [vmem:[%s4678 + $0xc8] sm:$0xf]
    %v4730 = vld [vmem:[%s4678 + $0xcc] sm:$0xf]
    %v4731 = vld [vmem:[%s4678 + $0xd0] sm:$0xf]
    %v4732 = vld [vmem:[%s4678 + $0xd4] sm:$0xf]
    %v4733 = vld [vmem:[%s4678 + $0xd8] sm:$0xf]
    %v4734 = vld [vmem:[%s4678 + $0xdc] sm:$0xf]
    %v4735 = vld [vmem:[%s4678 + $0xe0] sm:$0xf]
    %v4736 = vld [vmem:[%s4678 + $0xe4] sm:$0xf]
    %v4737 = vld [vmem:[%s4678 + $0xe8] sm:$0xf]
    %v4738 = vld [vmem:[%s4678 + $0xec] sm:$0xf]
    %v4739 = vld [vmem:[%s4678 + $0xf0] sm:$0xf]
    %v4740 = vld [vmem:[%s4678 + $0xf4] sm:$0xf]
    %v4741 = vld [vmem:[%s4678 + $0xf8] sm:$0xf]
    %v4742 = vld [vmem:[%s4678 + $0xfc] sm:$0xf]
    %v4807 = vunpack.c.l.b16 %v4679
    %v4808 = vunpack.c.l.b16 %v4680
    %v4809 = vunpack.c.l.b16 %v4681
    %v4810 = vunpack.c.l.b16 %v4682
    %v4811 = vunpack.c.l.b16 %v4683
    %v4812 = vunpack.c.l.b16 %v4684
    %v4813 = vunpack.c.l.b16 %v4685
    %v4814 = vunpack.c.l.b16 %v4686
    %v4815 = vunpack.c.l.b16 %v4687
    %v4816 = vunpack.c.l.b16 %v4688
    %v4817 = vunpack.c.l.b16 %v4689
    %v4818 = vunpack.c.l.b16 %v4690
    %v4819 = vunpack.c.l.b16 %v4691
    %v4820 = vunpack.c.l.b16 %v4692
    %v4821 = vunpack.c.l.b16 %v4693
    %v4822 = vunpack.c.l.b16 %v4694
    %v4823 = vunpack.c.l.b16 %v4695
    %v4824 = vunpack.c.l.b16 %v4696
    %v4825 = vunpack.c.l.b16 %v4697
    %v4826 = vunpack.c.l.b16 %v4698
    %v4827 = vunpack.c.l.b16 %v4699
    %v4828 = vunpack.c.l.b16 %v4700
    %v4829 = vunpack.c.l.b16 %v4701
    %v4830 = vunpack.c.l.b16 %v4702
    %v4831 = vunpack.c.l.b16 %v4703
    %v4832 = vunpack.c.l.b16 %v4704
    %v4833 = vunpack.c.l.b16 %v4705
    %v4834 = vunpack.c.l.b16 %v4706
    %v4835 = vunpack.c.l.b16 %v4707
    %v4836 = vunpack.c.l.b16 %v4708
    %v4837 = vunpack.c.l.b16 %v4709
    %v4838 = vunpack.c.l.b16 %v4710
    %v4839 = vunpack.c.l.b16 %v4711
    %v4840 = vunpack.c.l.b16 %v4712
    %v4841 = vunpack.c.l.b16 %v4713
    %v4842 = vunpack.c.l.b16 %v4714
    %v4843 = vunpack.c.l.b16 %v4715
    %v4844 = vunpack.c.l.b16 %v4716
    %v4845 = vunpack.c.l.b16 %v4717
    %v4846 = vunpack.c.l.b16 %v4718
    %v4847 = vunpack.c.l.b16 %v4719
    %v4848 = vunpack.c.l.b16 %v4720
    %v4849 = vunpack.c.l.b16 %v4721
    %v4850 = vunpack.c.l.b16 %v4722
    %v4851 = vunpack.c.l.b16 %v4723
    %v4852 = vunpack.c.l.b16 %v4724
    %v4853 = vunpack.c.l.b16 %v4725
    %v4854 = vunpack.c.l.b16 %v4726
    %v4855 = vunpack.c.l.b16 %v4727
    %v4856 = vunpack.c.l.b16 %v4728
    %v4857 = vunpack.c.l.b16 %v4729
    %v4858 = vunpack.c.l.b16 %v4730
    %v4859 = vunpack.c.l.b16 %v4731
    %v4860 = vunpack.c.l.b16 %v4732
    %v4861 = vunpack.c.l.b16 %v4733
    %v4862 = vunpack.c.l.b16 %v4734
    %v4863 = vunpack.c.l.b16 %v4735
    %v4864 = vunpack.c.l.b16 %v4736
    %v4865 = vunpack.c.l.b16 %v4737
    %v4866 = vunpack.c.l.b16 %v4738
    %v4867 = vunpack.c.l.b16 %v4739
    %v4868 = vunpack.c.l.b16 %v4740
    %v4869 = vunpack.c.l.b16 %v4741
    %v4870 = vunpack.c.l.b16 %v4742
    %v4871 = vpack.c.b16 %v4808, %v4807
    %v4872 = vpack.c.b16 %v4810, %v4809
    %v4873 = vpack.c.b16 %v4812, %v4811
    %v4874 = vpack.c.b16 %v4814, %v4813
    %v4875 = vpack.c.b16 %v4816, %v4815
    %v4876 = vpack.c.b16 %v4818, %v4817
    %v4877 = vpack.c.b16 %v4820, %v4819
    %v4878 = vpack.c.b16 %v4822, %v4821
    %v4879 = vpack.c.b16 %v4824, %v4823
    %v4880 = vpack.c.b16 %v4826, %v4825
    %v4881 = vpack.c.b16 %v4828, %v4827
    %v4882 = vpack.c.b16 %v4830, %v4829
    %v4883 = vpack.c.b16 %v4832, %v4831
    %v4884 = vpack.c.b16 %v4834, %v4833
    %v4885 = vpack.c.b16 %v4836, %v4835
    %v4886 = vpack.c.b16 %v4838, %v4837
    %v4887 = vpack.c.b16 %v4840, %v4839
    %v4888 = vpack.c.b16 %v4842, %v4841
    %v4889 = vpack.c.b16 %v4844, %v4843
    %v4890 = vpack.c.b16 %v4846, %v4845
    %v4891 = vpack.c.b16 %v4848, %v4847
    %v4892 = vpack.c.b16 %v4850, %v4849
    %v4893 = vpack.c.b16 %v4852, %v4851
    %v4894 = vpack.c.b16 %v4854, %v4853
    %v4895 = vpack.c.b16 %v4856, %v4855
    %v4896 = vpack.c.b16 %v4858, %v4857
    %v4897 = vpack.c.b16 %v4860, %v4859
    %v4898 = vpack.c.b16 %v4862, %v4861
    %v4899 = vpack.c.b16 %v4864, %v4863
    %v4900 = vpack.c.b16 %v4866, %v4865
    %v4901 = vpack.c.b16 %v4868, %v4867
    %v4902 = vpack.c.b16 %v4870, %v4869
    %4935 = vmatprep.subr.bf16.mxu0 0
    %4936 = vmatpush1.bf16.msra.mxu0 %v4878
    %4937 = vmatprep.subr.bf16.mxu0 0
    %4938 = vmatpush1.bf16.msra.mxu0 %v4877
    %4939 = vmatprep.subr.bf16.mxu0 0
    %4940 = vmatpush1.bf16.msra.mxu0 %v4876
    %4941 = vmatprep.subr.bf16.mxu0 0
    %4942 = vmatpush1.bf16.msra.mxu0 %v4875
    %4943 = vmatprep.subr.bf16.mxu0 0
    %4944 = vmatpush1.bf16.msra.mxu0 %v4874
    %4945 = vmatprep.subr.bf16.mxu0 0
    %4946 = vmatpush1.bf16.msra.mxu0 %v4873
    %4947 = vmatprep.subr.bf16.mxu0 0
    %4948 = vmatpush1.bf16.msra.mxu0 %v4872
    %4949 = vmatprep.subr.bf16.mxu0 0
    %4950 = vmatpush1.bf16.msra.mxu0 %v4871
    %4951 = vmatprep.subr.bf16.mxu0 0
    %4952 = vmatpush2.bf16.msra.mxu0 %v4886
    %4953 = vmatprep.subr.bf16.mxu0 0
    %4954 = vmatpush2.bf16.msra.mxu0 %v4885
    %4955 = vmatprep.subr.bf16.mxu0 0
    %4956 = vmatpush2.bf16.msra.mxu0 %v4884
    %4957 = vmatprep.subr.bf16.mxu0 0
    %4958 = vmatpush2.bf16.msra.mxu0 %v4883
    %4959 = vmatprep.subr.bf16.mxu0 0
    %4960 = vmatpush2.bf16.msra.mxu0 %v4882
    %4961 = vmatprep.subr.bf16.mxu0 0
    %4962 = vmatpush2.bf16.msra.mxu0 %v4881
    %4963 = vmatprep.subr.bf16.mxu0 0
    %4964 = vmatpush2.bf16.msra.mxu0 %v4880
    %4965 = vmatprep.subr.bf16.mxu0 0
    %4966 = vmatpush2.bf16.msra.mxu0 %v4879
    %4967 = vmatprep.mubr.bf16.mxu0 %v4671
    %4968 = vmatmul.mubr.bf16.gmra.mxu0 %v4670
    %v4969 = vpop.f32.mrf.mxu0
    %v4970 = vadd.f32 0.0, %v4969
    %v4971 = vpop.f32.mrf.mxu0
    %v4972 = vpop.f32.mrf.mxu0
    %v4973 = vadd.f32 0.0, %v4972
    %v4974 = vpop.f32.mrf.mxu0
    %4975 = vmatprep.mubr.bf16.mxu0 %v4675
    %4976 = vmatmul.mubr.bf16.gmra.mxu0 %v4674
    %v4977 = vpop.f32.mrf.mxu0
    %v4978 = vadd.f32 0.0, %v4977
    %v4979 = vpop.f32.mrf.mxu0
    %v4980 = vpop.f32.mrf.mxu0
    %v4981 = vpop.f32.mrf.mxu0
    %4982 = vdwg.mxu0
    %4983 = vmatprep.subr.bf16.mxu0 0
    %4984 = vmatpush1.bf16.msra.mxu0 %v4894
    %4985 = vmatprep.subr.bf16.mxu0 0
    %4986 = vmatpush1.bf16.msra.mxu0 %v4893
    %4987 = vmatprep.subr.bf16.mxu0 0
    %4988 = vmatpush1.bf16.msra.mxu0 %v4892
    %4989 = vmatprep.subr.bf16.mxu0 0
    %4990 = vmatpush1.bf16.msra.mxu0 %v4891
    %4991 = vmatprep.subr.bf16.mxu0 0
    %4992 = vmatpush1.bf16.msra.mxu0 %v4890
    %4993 = vmatprep.subr.bf16.mxu0 0
    %4994 = vmatpush1.bf16.msra.mxu0 %v4889
    %4995 = vmatprep.subr.bf16.mxu0 0
    %4996 = vmatpush1.bf16.msra.mxu0 %v4888
    %4997 = vmatprep.subr.bf16.mxu0 0
    %4998 = vmatpush1.bf16.msra.mxu0 %v4887
    %4999 = vmatprep.subr.bf16.mxu0 0
    %5000 = vmatpush2.bf16.msra.mxu0 %v4902
    %5001 = vmatprep.subr.bf16.mxu0 0
    %5002 = vmatpush2.bf16.msra.mxu0 %v4901
    %5003 = vmatprep.subr.bf16.mxu0 0
    %5004 = vmatpush2.bf16.msra.mxu0 %v4900
    %5005 = vmatprep.subr.bf16.mxu0 0
    %5006 = vmatpush2.bf16.msra.mxu0 %v4899
    %5007 = vmatprep.subr.bf16.mxu0 0
    %5008 = vmatpush2.bf16.msra.mxu0 %v4898
    %5009 = vmatprep.subr.bf16.mxu0 0
    %5010 = vmatpush2.bf16.msra.mxu0 %v4897
    %5011 = vmatprep.subr.bf16.mxu0 0
    %5012 = vmatpush2.bf16.msra.mxu0 %v4896
    %5013 = vmatprep.subr.bf16.mxu0 0
    %5014 = vmatpush2.bf16.msra.mxu0 %v4895
    %5015 = vmatprep.mubr.bf16.mxu0 %v4673
    %5016 = vmatmul.mubr.bf16.gmra.mxu0 %v4672
    %v5017 = vpop.f32.mrf.mxu0
    %v5018 = vadd.f32 %v4970, %v5017
    %v5019 = vpop.f32.mrf.mxu0
    %v5020 = vpop.f32.mrf.mxu0
    %v5021 = vadd.f32 %v4973, %v5020
    %v5022 = vpop.f32.mrf.mxu0
    %5023 = vmatprep.mubr.bf16.mxu0 %v4677
    %5024 = vmatmul.mubr.bf16.gmra.mxu0 %v4676
    %v5025 = vpop.f32.mrf.mxu0
    %v5026 = vadd.f32 %v4978, %v5025
    %v5027 = vpop.f32.mrf.mxu0
    %v5028 = vpop.f32.mrf.mxu0
    %v5029 = vpop.f32.mrf.mxu0
    %5030 = vdwg.mxu0
    %v5031 = vadd.f32 %v4537, %v5018
    %v5032 = vadd.f32 %v4540, %v5021
    %v5033 = vadd.f32 %v4545, %v5026
    %v5034 = vld [vmem:[%s1 + $0x7] sm:$0x1]
    %v5036 = vlaneseq
    %v5037 = vshrl.u32 %v5036, 7
    %v5038 = vsub.s32 0, %v5037
    %v5039 = vrot.slane %v5034, %v5038
    %v5041 = vadd.f32 %v5031, %v5039
    %v5042 = vadd.f32 %v5032, %v5039
    %v5043 = vadd.f32 %v5033, %v5039
    %5044 = vst [vmem:[%s13] sm:$0xff] %v5041
    %5045 = vst [vmem:[%s13 + $0x8] sm:$0xff] %v5042
    %5046 = vst [vmem:[%s13 + $0x10] sm:$0xff] %v5043
    // Predicated region
    $region58: #{discriminator_smaller_p_forward.1} parent=1 // pred_check
      _
    $region59: #{discriminator_smaller_p_forward.1} parent=1 // pred_check_branch
      %5048 = sbr.rel (0) target = $region61
    $region60: #{discriminator_smaller_p_forward.1} parent=1 // pred_region
      _
    $region61: #{discriminator_smaller_p_forward.1} parent=1 // pred_fallthru
      _
    // Predicated region
    $region62: #{discriminator_smaller_p_forward.1} parent=1 // pred_check
      _
    $region63: #{discriminator_smaller_p_forward.1} parent=1 // pred_check_branch
      %5050 = sbr.rel (0) target = $region65
    $region64: #{discriminator_smaller_p_forward.1} parent=1 // pred_region
      _
    $region65: #{discriminator_smaller_p_forward.1} parent=1 // pred_fallthru
      _
    // Predicated region
    $region66: #{discriminator_smaller_p_forward.1} parent=1 // pred_check
      _
    $region67: #{discriminator_smaller_p_forward.1} parent=1 // pred_check_branch
      %5052 = sbr.rel (0) target = $region69
    $region68: #{discriminator_smaller_p_forward.1} parent=1 // pred_region
      _
    $region69: #{discriminator_smaller_p_forward.1} parent=1 // pred_fallthru
      _
    // Predicated region
    $region70: #{discriminator_smaller_p_forward.1} parent=1 // pred_check
      _
    $region71: #{discriminator_smaller_p_forward.1} parent=1 // pred_check_branch
      %5054 = sbr.rel (0) target = $region73
    $region72: #{discriminator_smaller_p_forward.1} parent=1 // pred_region
      _
    $region73: #{discriminator_smaller_p_forward.1} parent=1 // pred_fallthru
      _
    // Predicated region
    $region74: #{discriminator_smaller_p_forward.1} parent=1 // pred_check
      _
    $region75: #{discriminator_smaller_p_forward.1} parent=1 // pred_check_branch
      %5056 = sbr.rel (0) target = $region77
    $region76: #{discriminator_smaller_p_forward.1} parent=1 // pred_region
      _
    $region77: #{discriminator_smaller_p_forward.1} parent=1 // pred_fallthru
      _
    // Predicated region
    $region78: #{discriminator_smaller_p_forward.1} parent=1 // pred_check
      _
    $region79: #{discriminator_smaller_p_forward.1} parent=1 // pred_check_branch
      %5058 = sbr.rel (0) target = $region81
    $region80: #{discriminator_smaller_p_forward.1} parent=1 // pred_region
      _
    $region81: #{discriminator_smaller_p_forward.1} parent=1 // pred_fallthru
      _
    // Predicated region
    $region82: #{discriminator_smaller_p_forward.1} parent=1 // pred_check
      _
    $region83: #{discriminator_smaller_p_forward.1} parent=1 // pred_check_branch
      %5060 = sbr.rel (0) target = $region85
    $region84: #{discriminator_smaller_p_forward.1} parent=1 // pred_region
      _
    $region85: #{discriminator_smaller_p_forward.1} parent=1 // pred_fallthru
      _
    // Predicated region
    $region86: #{discriminator_smaller_p_forward.1} parent=1 // pred_check
      _
    $region87: #{discriminator_smaller_p_forward.1} parent=1 // pred_check_branch
      %5062 = sbr.rel (0) target = $region89
    $region88: #{discriminator_smaller_p_forward.1} parent=1 // pred_region
      _
    $region89: #{discriminator_smaller_p_forward.1} parent=1 // pred_fallthru
      _
    %5063 = vsyncpa [#allocation3], 1
    %5064 = vsyncpa [#allocation5], 1
    %5065 = vsyncpa [#allocation8], 1

</llo_original>
